<compile_context>
chip_gen: v5e
topology: v5e:2x2
jax: 0.10.0
libtpu: 0.0.40
codegen_flags: <defaults>
</compile_context>

<pallas_src>
import jax
import jax.numpy as jnp
import numpy as np
from jax.experimental import pallas as pl
from jax.experimental.pallas import tpu as pltpu


_LANES = 128          # conv channels are zero-padded to one full vreg of lanes


def _round_up(n, m):
    return ((n + m - 1) // m) * m


def _fold_bn(p, eps):
    """Fold conv bias + eval-mode BatchNorm into per-channel scale/shift."""
    inv_std = p["gamma"] / jnp.sqrt(p["var"] + eps)
    return inv_std, inv_std * (p["b"] - p["mean"]) + p["beta"]


def double_conv_pallas(x_nchw, params, *, eps=1e-5):
    """DoubleConv forward (eval-mode BN).  x_nchw: (B, Cin, H, W).
    params: two dicts of PyTorch-layout tensors: w (out,in,3,3), b, gamma,
    beta, mean, var."""
    B, c_in, H, W = x_nchw.shape
    c1 = int(params[0]["w"].shape[0])
    c2 = int(params[1]["w"].shape[0])
    assert int(params[1]["w"].shape[1]) == c1
    C = _LANES
    assert c_in <= C and c1 <= C and c2 <= C

    # Flat "padded row" geometry for the layer-1 activation: row r = p*Wp + q,
    # p in [0, H+2), q in [0, Wp).  The 1-px conv halo of layer 2 lives at
    # p in {0, H+1}, q in {0, W+1}; columns q >= W+2 are never read by a valid
    # output.  Wp is sublane(8)-aligned so every dy view is an aligned slice.
    Wp = _round_up(W + 2, 8)
    NFLAT = (H + 2) * Wp
    NR = _round_up(NFLAT + 2, 16)      # +2 so dx-shifted views stay in bounds; 16-aligned for bf16
    HWp = H * Wp
    K1 = _round_up(9 * c_in, 128)      # layer-1 im2col contraction (36 -> 128 here)
    K2 = 9 * C                         # layer-2 contraction: all 9 taps folded

    # ---- layer-1 LHS: im2col patches placed directly in padded-flat geometry ----
    xh = jnp.transpose(x_nchw, (0, 2, 3, 1))                       # NCHW -> NHWC
    xp = jnp.pad(xh, ((0, 0), (1, 1), (1, 1), (0, 0)))             # conv1 spatial halo
    patches = jnp.concatenate(
        [xp[:, dy:dy + H, dx:dx + W, :] for dy in range(3) for dx in range(3)],
        axis=-1)                                                    # (B, H, W, 9*Cin)
    patches = jnp.pad(
        patches,
        ((0, 0), (1, 1), (1, Wp - W - 1), (0, K1 - 9 * c_in)))      # (B, H+2, Wp, K1)
    lhs1 = patches.reshape(B, NFLAT, K1)
    lhs1 = jnp.pad(lhs1, ((0, 0), (0, NR - NFLAT), (0, 0)))
    lhs1 = lhs1.astype(jnp.bfloat16)                                # (B, NR, K1)

    # Interior mask (1 on real output pixels, 0 on halo / padding rows) — keeps
    # the layer-1 halo exactly zero so it can feed layer 2 directly.
    rr = np.arange(NR)
    pp, qq = rr // Wp, rr % Wp
    mask_np = ((pp >= 1) & (pp <= H) & (qq >= 1) & (qq <= W))
    mask = jnp.asarray(mask_np.astype(np.float32).reshape(NR, 1))

    # ---- weights / folded BN params, packed for K-folded matmuls (bf16) ----
    w1 = jnp.transpose(params[0]["w"], (2, 3, 1, 0)).reshape(9 * c_in, c1)
    w1 = jnp.pad(w1, ((0, K1 - 9 * c_in), (0, C - c1))).astype(jnp.bfloat16)   # (K1, C)
    s1, b1 = _fold_bn(params[0], eps)
    s1 = jnp.pad(s1, (0, C - c1)).reshape(1, C)
    b1 = jnp.pad(b1, (0, C - c1)).reshape(1, C)

    w2 = jnp.transpose(params[1]["w"], (2, 3, 1, 0))                           # (3,3,c1,c2)
    w2 = jnp.pad(w2, ((0, 0), (0, 0), (0, C - c1), (0, C - c2)))
    w2 = w2.reshape(K2, C).astype(jnp.bfloat16)                                # (9*C, C)
    s2, b2 = _fold_bn(params[1], eps)
    s2 = jnp.pad(s2, (0, C - c2)).reshape(1, C)
    b2 = jnp.pad(b2, (0, C - c2)).reshape(1, C)

    def kernel(lhs1_ref, mask_ref, w1_ref, s1_ref, b1_ref, w2_ref, s2_ref,
               b2_ref, o_ref, x2_ref):
        # ---- layer 1: conv+bias+BN+ELU as one MXU matmul (taps folded in K) ----
        acc1 = jnp.dot(lhs1_ref[0], w1_ref[...],
                       preferred_element_type=jnp.float32)           # (NR, C) f32
        z1 = acc1 * s1_ref[...] + b1_ref[...]
        y1 = jnp.where(z1 > 0, z1, jnp.exp(z1) - 1.0)                # ELU (exp -> EUP)
        y1 = y1 * mask_ref[...]                                      # zero halo / padding rows

        # ---- layer 2: build the K-folded LHS (9 taps along the lane axis) ----
        # 3 dx-pre-shifted copies; all dy views of them are sublane-aligned.
        shifted = [y1[dx:dx + NFLAT, :] for dx in range(3)]
        for dy in range(3):
            base = dy * Wp
            for dx in range(3):
                t = dy * 3 + dx
                x2_ref[:, t * C:(t + 1) * C] = (
                    shifted[dx][base:base + HWp, :].astype(jnp.bfloat16))

        acc2 = jnp.dot(x2_ref[...], w2_ref[...],
                       preferred_element_type=jnp.float32)           # (HWp, C) f32
        z2 = acc2 * s2_ref[...] + b2_ref[...]
        y2 = jnp.where(z2 > 0, z2, jnp.exp(z2) - 1.0)                # ELU
        o_ref[0] = y2.astype(o_ref.dtype)                            # lane-dense store

    cost = pl.CostEstimate(
        flops=2 * B * (NR * K1 * C + HWp * K2 * C),
        transcendentals=B * (NR * C + HWp * C),
        bytes_accessed=(lhs1.size * 2 + w1.size * 2 + w2.size * 2
                        + mask.size * 4 + 4 * C * 4 + B * HWp * C * 4),
    )

    out_flat = pl.pallas_call(
        kernel,
        out_shape=jax.ShapeDtypeStruct((B, HWp, C), x_nchw.dtype),
        grid_spec=pltpu.PrefetchScalarGridSpec(
            num_scalar_prefetch=0,
            grid=(B,),
            in_specs=[
                pl.BlockSpec((1, NR, K1), lambda b: (b, 0, 0)),   # im2col LHS (per image)
                pl.BlockSpec((NR, 1), lambda b: (0, 0)),          # interior mask
                pl.BlockSpec((K1, C), lambda b: (0, 0)),          # packed W1
                pl.BlockSpec((1, C), lambda b: (0, 0)),           # scale1
                pl.BlockSpec((1, C), lambda b: (0, 0)),           # shift1
                pl.BlockSpec((K2, C), lambda b: (0, 0)),          # packed W2 (9 taps stacked)
                pl.BlockSpec((1, C), lambda b: (0, 0)),           # scale2
                pl.BlockSpec((1, C), lambda b: (0, 0)),           # shift2
            ],
            out_specs=pl.BlockSpec((1, HWp, C), lambda b: (b, 0, 0)),
            scratch_shapes=[pltpu.VMEM((HWp, K2), jnp.bfloat16)],  # layer-2 K-folded LHS
        ),
        compiler_params=pltpu.CompilerParams(
            dimension_semantics=("parallel",),
            vmem_limit_bytes=32 * 1024 * 1024,
        ),
        cost_estimate=cost,
    )(lhs1, mask, w1, s1, b1, w2, s2, b2)

    # Un-pad (row pitch Wp -> W, channels C -> c2) and return NCHW like the module.
    out = out_flat.reshape(B, H, Wp, C)[:, :, :W, :c2]
    return jnp.transpose(out, (0, 3, 1, 2))


def _ref_double_conv(x, params, eps=1e-5):
    """Pure-JAX f32 reference of DoubleConv (eval-mode BatchNorm), NCHW."""
    y = x
    for p in params:
        y = jax.lax.conv_general_dilated(
            y, p["w"], window_strides=(1, 1), padding="SAME",
            dimension_numbers=("NCHW", "OIHW", "NCHW"),
            precision=jax.lax.Precision.HIGHEST)
        y = y + p["b"][None, :, None, None]
        inv = p["gamma"] / jnp.sqrt(p["var"] + eps)
        y = (y - p["mean"][None, :, None, None]) * inv[None, :, None, None] \
            + p["beta"][None, :, None, None]
        y = jnp.where(y > 0, y, jnp.exp(y) - 1.0)                   # ELU, alpha=1
    return y


if __name__ == "__main__":
    batch, in_ch, out_ch, H, W = 2, 4, 8, 16, 16

    key = jax.random.PRNGKey(0)
    keys = jax.random.split(key, 13)
    x = jax.random.normal(keys[0], (batch, in_ch, H, W), dtype=jnp.float32)

    def make_layer(kw, kb, kg, kbt, km, kv, cin, cout):
        return dict(
            w=jax.random.normal(kw, (cout, cin, 3, 3), jnp.float32) * 0.1,
            b=jax.random.normal(kb, (cout,), jnp.float32) * 0.1,
            gamma=1.0 + 0.1 * jax.random.normal(kg, (cout,), jnp.float32),
            beta=0.1 * jax.random.normal(kbt, (cout,), jnp.float32),
            mean=0.1 * jax.random.normal(km, (cout,), jnp.float32),
            var=jax.random.uniform(kv, (cout,), jnp.float32, 0.5, 1.5),
        )

    params = [
        make_layer(*keys[1:7], in_ch, out_ch),
        make_layer(*keys[7:13], out_ch, out_ch),
    ]

    fwd = jax.jit(double_conv_pallas)
    y = jax.block_until_ready(fwd(x, params))

    y_ref = _ref_double_conv(x, params)
    assert y.shape == (batch, out_ch, H, W)
    # bf16 MXU operands (f32 accumulation / epilogue) -> looser tolerance than pure f32.
    max_err = float(jnp.max(jnp.abs(y - y_ref)))
    assert jnp.allclose(y, y_ref, atol=5e-2, rtol=5e-2), \
        f"mismatch vs reference (max abs err {max_err:.3e})"

    print("KERNEL_OK")
</pallas_src>

<mosaic_0001>
module attributes {stable_mosaic.version = 11 : i64} {
  func.func @kernel(%arg0: i32, %arg1: memref<1x448x128xbf16, #tpu.memory_space<vmem>>, %arg2: memref<448x1xf32, #tpu.memory_space<vmem>>, %arg3: memref<128x128xbf16, #tpu.memory_space<vmem>>, %arg4: memref<1x128xf32, #tpu.memory_space<vmem>>, %arg5: memref<1x128xf32, #tpu.memory_space<vmem>>, %arg6: memref<1152x128xbf16, #tpu.memory_space<vmem>>, %arg7: memref<1x128xf32, #tpu.memory_space<vmem>>, %arg8: memref<1x128xf32, #tpu.memory_space<vmem>>, %arg9: memref<1x384x128xf32, #tpu.memory_space<vmem>>, %arg10: memref<384x1152xbf16, #tpu.memory_space<vmem>>) attributes {dimension_semantics = [#tpu.dimension_semantics<parallel>], iteration_bounds = array<i64: 2>, scalar_prefetch = 0 : i64, scratch_operands = 1 : i64, tpu.core_type = #tpu.core_type<tc>, window_params = [{transform_indices = @transform_0, window_bounds = array<i64: 1, 448, 128>}, {pipeline_mode = #tpu.pipeline_mode<synchronous>, transform_indices = @transform_1, window_bounds = array<i64: 448, 1>}, {pipeline_mode = #tpu.pipeline_mode<synchronous>, transform_indices = @transform_2, window_bounds = array<i64: 128, 128>}, {pipeline_mode = #tpu.pipeline_mode<synchronous>, transform_indices = @transform_3, window_bounds = array<i64: 1, 128>}, {pipeline_mode = #tpu.pipeline_mode<synchronous>, transform_indices = @transform_4, window_bounds = array<i64: 1, 128>}, {pipeline_mode = #tpu.pipeline_mode<synchronous>, transform_indices = @transform_5, window_bounds = array<i64: 1152, 128>}, {pipeline_mode = #tpu.pipeline_mode<synchronous>, transform_indices = @transform_6, window_bounds = array<i64: 1, 128>}, {pipeline_mode = #tpu.pipeline_mode<synchronous>, transform_indices = @transform_7, window_bounds = array<i64: 1, 128>}, {transform_indices = @transform_8, window_bounds = array<i64: 1, 384, 128>}]} {
    %c0 = arith.constant 0 : index
    %c0_0 = arith.constant 0 : index
    %c0_1 = arith.constant 0 : index
    %0 = vector.load %arg1[%c0, %c0_0, %c0_1] : memref<1x448x128xbf16, #tpu.memory_space<vmem>>, vector<1x448x128xbf16>
    %1 = vector.shape_cast %0 : vector<1x448x128xbf16> to vector<448x128xbf16>
    %c0_2 = arith.constant 0 : index
    %c0_3 = arith.constant 0 : index
    %2 = vector.load %arg3[%c0_2, %c0_3] : memref<128x128xbf16, #tpu.memory_space<vmem>>, vector<128x128xbf16>
    %cst = arith.constant dense<0.000000e+00> : vector<448x128xf32>
    %3 = tpu.matmul %1, %2, %cst {dimension_numbers = #tpu.dot_dimension_numbers<[1], [0], [0], [1], [0, 0, 1, 1], [], []>} : vector<448x128xbf16>, vector<128x128xbf16>, vector<448x128xf32> -> vector<448x128xf32>
    %c0_4 = arith.constant 0 : index
    %c0_5 = arith.constant 0 : index
    %4 = vector.load %arg4[%c0_4, %c0_5] : memref<1x128xf32, #tpu.memory_space<vmem>>, vector<1x128xf32>
    %5 = vector.broadcast %4 : vector<1x128xf32> to vector<448x128xf32>
    %6 = arith.mulf %3, %5 : vector<448x128xf32>
    %c0_6 = arith.constant 0 : index
    %c0_7 = arith.constant 0 : index
    %7 = vector.load %arg5[%c0_6, %c0_7] : memref<1x128xf32, #tpu.memory_space<vmem>>, vector<1x128xf32>
    %8 = vector.broadcast %7 : vector<1x128xf32> to vector<448x128xf32>
    %9 = arith.addf %6, %8 : vector<448x128xf32>
    %cst_8 = arith.constant 0.000000e+00 : f32
    %10 = vector.broadcast %cst_8 : f32 to vector<448x128xf32>
    %11 = arith.cmpf ogt, %9, %10 : vector<448x128xf32>
    %12 = math.exp %9 : vector<448x128xf32>
    %cst_9 = arith.constant 1.000000e+00 : f32
    %13 = vector.broadcast %cst_9 : f32 to vector<448x128xf32>
    %14 = arith.subf %12, %13 : vector<448x128xf32>
    %15 = arith.select %11, %9, %14 : vector<448x128xi1>, vector<448x128xf32>
    %c0_10 = arith.constant 0 : index
    %c0_11 = arith.constant 0 : index
    %16 = vector.load %arg2[%c0_10, %c0_11] : memref<448x1xf32, #tpu.memory_space<vmem>>, vector<448x1xf32>
    %17 = vector.broadcast %16 : vector<448x1xf32> to vector<448x128xf32>
    %18 = arith.mulf %15, %17 : vector<448x128xf32>
    %19 = vector.extract_strided_slice %18 {offsets = [0, 0], sizes = [432, 128], strides = [1, 1]} : vector<448x128xf32> to vector<432x128xf32>
    %20 = vector.extract_strided_slice %18 {offsets = [1, 0], sizes = [432, 128], strides = [1, 1]} : vector<448x128xf32> to vector<432x128xf32>
    %21 = vector.extract_strided_slice %18 {offsets = [2, 0], sizes = [432, 128], strides = [1, 1]} : vector<448x128xf32> to vector<432x128xf32>
    %22 = vector.extract_strided_slice %19 {offsets = [0, 0], sizes = [384, 128], strides = [1, 1]} : vector<432x128xf32> to vector<384x128xf32>
    %23 = arith.truncf %22 : vector<384x128xf32> to vector<384x128xbf16>
    %c0_12 = arith.constant 0 : index
    %c0_13 = arith.constant 0 : index
    %24 = vector.load %arg10[%c0_12, %c0_13] : memref<384x1152xbf16, #tpu.memory_space<vmem>>, vector<384x128xbf16>
    tpu.vector_store %arg10[%c0_12, %c0_13], %23 {strides = array<i32>} : memref<384x1152xbf16, #tpu.memory_space<vmem>>, vector<384x128xbf16>,
    %25 = vector.extract_strided_slice %20 {offsets = [0, 0], sizes = [384, 128], strides = [1, 1]} : vector<432x128xf32> to vector<384x128xf32>
    %26 = arith.truncf %25 : vector<384x128xf32> to vector<384x128xbf16>
    %c0_14 = arith.constant 0 : index
    %c128 = arith.constant 128 : index
    %27 = vector.load %arg10[%c0_14, %c128] : memref<384x1152xbf16, #tpu.memory_space<vmem>>, vector<384x128xbf16>
    tpu.vector_store %arg10[%c0_14, %c128], %26 {strides = array<i32>} : memref<384x1152xbf16, #tpu.memory_space<vmem>>, vector<384x128xbf16>,
    %28 = vector.extract_strided_slice %21 {offsets = [0, 0], sizes = [384, 128], strides = [1, 1]} : vector<432x128xf32> to vector<384x128xf32>
    %29 = arith.truncf %28 : vector<384x128xf32> to vector<384x128xbf16>
    %c0_15 = arith.constant 0 : index
    %c256 = arith.constant 256 : index
    %30 = vector.load %arg10[%c0_15, %c256] : memref<384x1152xbf16, #tpu.memory_space<vmem>>, vector<384x128xbf16>
    tpu.vector_store %arg10[%c0_15, %c256], %29 {strides = array<i32>} : memref<384x1152xbf16, #tpu.memory_space<vmem>>, vector<384x128xbf16>,
    %31 = vector.extract_strided_slice %19 {offsets = [24, 0], sizes = [384, 128], strides = [1, 1]} : vector<432x128xf32> to vector<384x128xf32>
    %32 = arith.truncf %31 : vector<384x128xf32> to vector<384x128xbf16>
    %c0_16 = arith.constant 0 : index
    %c384 = arith.constant 384 : index
    %33 = vector.load %arg10[%c0_16, %c384] : memref<384x1152xbf16, #tpu.memory_space<vmem>>, vector<384x128xbf16>
    tpu.vector_store %arg10[%c0_16, %c384], %32 {strides = array<i32>} : memref<384x1152xbf16, #tpu.memory_space<vmem>>, vector<384x128xbf16>,
    %34 = vector.extract_strided_slice %20 {offsets = [24, 0], sizes = [384, 128], strides = [1, 1]} : vector<432x128xf32> to vector<384x128xf32>
    %35 = arith.truncf %34 : vector<384x128xf32> to vector<384x128xbf16>
    %c0_17 = arith.constant 0 : index
    %c512 = arith.constant 512 : index
    %36 = vector.load %arg10[%c0_17, %c512] : memref<384x1152xbf16, #tpu.memory_space<vmem>>, vector<384x128xbf16>
    tpu.vector_store %arg10[%c0_17, %c512], %35 {strides = array<i32>} : memref<384x1152xbf16, #tpu.memory_space<vmem>>, vector<384x128xbf16>,
    %37 = vector.extract_strided_slice %21 {offsets = [24, 0], sizes = [384, 128], strides = [1, 1]} : vector<432x128xf32> to vector<384x128xf32>
    %38 = arith.truncf %37 : vector<384x128xf32> to vector<384x128xbf16>
    %c0_18 = arith.constant 0 : index
    %c640 = arith.constant 640 : index
    %39 = vector.load %arg10[%c0_18, %c640] : memref<384x1152xbf16, #tpu.memory_space<vmem>>, vector<384x128xbf16>
    tpu.vector_store %arg10[%c0_18, %c640], %38 {strides = array<i32>} : memref<384x1152xbf16, #tpu.memory_space<vmem>>, vector<384x128xbf16>,
    %40 = vector.extract_strided_slice %19 {offsets = [48, 0], sizes = [384, 128], strides = [1, 1]} : vector<432x128xf32> to vector<384x128xf32>
    %41 = arith.truncf %40 : vector<384x128xf32> to vector<384x128xbf16>
    %c0_19 = arith.constant 0 : index
    %c768 = arith.constant 768 : index
    %42 = vector.load %arg10[%c0_19, %c768] : memref<384x1152xbf16, #tpu.memory_space<vmem>>, vector<384x128xbf16>
    tpu.vector_store %arg10[%c0_19, %c768], %41 {strides = array<i32>} : memref<384x1152xbf16, #tpu.memory_space<vmem>>, vector<384x128xbf16>,
    %43 = vector.extract_strided_slice %20 {offsets = [48, 0], sizes = [384, 128], strides = [1, 1]} : vector<432x128xf32> to vector<384x128xf32>
    %44 = arith.truncf %43 : vector<384x128xf32> to vector<384x128xbf16>
    %c0_20 = arith.constant 0 : index
    %c896 = arith.constant 896 : index
    %45 = vector.load %arg10[%c0_20, %c896] : memref<384x1152xbf16, #tpu.memory_space<vmem>>, vector<384x128xbf16>
    tpu.vector_store %arg10[%c0_20, %c896], %44 {strides = array<i32>} : memref<384x1152xbf16, #tpu.memory_space<vmem>>, vector<384x128xbf16>,
    %46 = vector.extract_strided_slice %21 {offsets = [48, 0], sizes = [384, 128], strides = [1, 1]} : vector<432x128xf32> to vector<384x128xf32>
    %47 = arith.truncf %46 : vector<384x128xf32> to vector<384x128xbf16>
    %c0_21 = arith.constant 0 : index
    %c1024 = arith.constant 1024 : index
    %48 = vector.load %arg10[%c0_21, %c1024] : memref<384x1152xbf16, #tpu.memory_space<vmem>>, vector<384x128xbf16>
    tpu.vector_store %arg10[%c0_21, %c1024], %47 {strides = array<i32>} : memref<384x1152xbf16, #tpu.memory_space<vmem>>, vector<384x128xbf16>,
    %c0_22 = arith.constant 0 : index
    %c0_23 = arith.constant 0 : index
    %49 = vector.load %arg10[%c0_22, %c0_23] : memref<384x1152xbf16, #tpu.memory_space<vmem>>, vector<384x1152xbf16>
    %c0_24 = arith.constant 0 : index
    %c0_25 = arith.constant 0 : index
    %50 = vector.load %arg6[%c0_24, %c0_25] : memref<1152x128xbf16, #tpu.memory_space<vmem>>, vector<1152x128xbf16>
    %cst_26 = arith.constant dense<0.000000e+00> : vector<384x128xf32>
    %51 = tpu.matmul %49, %50, %cst_26 {dimension_numbers = #tpu.dot_dimension_numbers<[1], [0], [0], [1], [0, 0, 1, 1], [], []>} : vector<384x1152xbf16>, vector<1152x128xbf16>, vector<384x128xf32> -> vector<384x128xf32>
    %c0_27 = arith.constant 0 : index
    %c0_28 = arith.constant 0 : index
    %52 = vector.load %arg7[%c0_27, %c0_28] : memref<1x128xf32, #tpu.memory_space<vmem>>, vector<1x128xf32>
    %53 = vector.broadcast %52 : vector<1x128xf32> to vector<384x128xf32>
    %54 = arith.mulf %51, %53 : vector<384x128xf32>
    %c0_29 = arith.constant 0 : index
    %c0_30 = arith.constant 0 : index
    %55 = vector.load %arg8[%c0_29, %c0_30] : memref<1x128xf32, #tpu.memory_space<vmem>>, vector<1x128xf32>
    %56 = vector.broadcast %55 : vector<1x128xf32> to vector<384x128xf32>
    %57 = arith.addf %54, %56 : vector<384x128xf32>
    %cst_31 = arith.constant 0.000000e+00 : f32
    %58 = vector.broadcast %cst_31 : f32 to vector<384x128xf32>
    %59 = arith.cmpf ogt, %57, %58 : vector<384x128xf32>
    %60 = math.exp %57 : vector<384x128xf32>
    %cst_32 = arith.constant 1.000000e+00 : f32
    %61 = vector.broadcast %cst_32 : f32 to vector<384x128xf32>
    %62 = arith.subf %60, %61 : vector<384x128xf32>
    %63 = arith.select %59, %57, %62 : vector<384x128xi1>, vector<384x128xf32>
    %c0_33 = arith.constant 0 : index
    %c0_34 = arith.constant 0 : index
    %c0_35 = arith.constant 0 : index
    %64 = vector.load %arg9[%c0_33, %c0_34, %c0_35] : memref<1x384x128xf32, #tpu.memory_space<vmem>>, vector<1x384x128xf32>
    %65 = vector.shape_cast %64 : vector<1x384x128xf32> to vector<384x128xf32>
    %66 = vector.shape_cast %63 : vector<384x128xf32> to vector<1x384x128xf32>
    tpu.vector_store %arg9[%c0_33, %c0_34, %c0_35], %66 {strides = array<i32>} : memref<1x384x128xf32, #tpu.memory_space<vmem>>, vector<1x384x128xf32>,
    return
  }
  func.func @transform_0(%arg0: i32) -> (i32, i32, i32) {
    %c0_i32 = arith.constant 0 : i32
    %c0_i32_0 = arith.constant 0 : i32
    %c0_i32_1 = arith.constant 0 : i32
    return %arg0, %c0_i32, %c0_i32_0 : i32, i32, i32
  }
  func.func @transform_1(%arg0: i32) -> (i32, i32) {
    %c0_i32 = arith.constant 0 : i32
    %c0_i32_0 = arith.constant 0 : i32
    %c0_i32_1 = arith.constant 0 : i32
    return %c0_i32, %c0_i32_0 : i32, i32
  }
  func.func @transform_2(%arg0: i32) -> (i32, i32) {
    %c0_i32 = arith.constant 0 : i32
    %c0_i32_0 = arith.constant 0 : i32
    %c0_i32_1 = arith.constant 0 : i32
    return %c0_i32, %c0_i32_0 : i32, i32
  }
  func.func @transform_3(%arg0: i32) -> (i32, i32) {
    %c0_i32 = arith.constant 0 : i32
    %c0_i32_0 = arith.constant 0 : i32
    %c0_i32_1 = arith.constant 0 : i32
    return %c0_i32, %c0_i32_0 : i32, i32
  }
  func.func @transform_4(%arg0: i32) -> (i32, i32) {
    %c0_i32 = arith.constant 0 : i32
    %c0_i32_0 = arith.constant 0 : i32
    %c0_i32_1 = arith.constant 0 : i32
    return %c0_i32, %c0_i32_0 : i32, i32
  }
  func.func @transform_5(%arg0: i32) -> (i32, i32) {
    %c0_i32 = arith.constant 0 : i32
    %c0_i32_0 = arith.constant 0 : i32
    %c0_i32_1 = arith.constant 0 : i32
    return %c0_i32, %c0_i32_0 : i32, i32
  }
  func.func @transform_6(%arg0: i32) -> (i32, i32) {
    %c0_i32 = arith.constant 0 : i32
    %c0_i32_0 = arith.constant 0 : i32
    %c0_i32_1 = arith.constant 0 : i32
    return %c0_i32, %c0_i32_0 : i32, i32
  }
  func.func @transform_7(%arg0: i32) -> (i32, i32) {
    %c0_i32 = arith.constant 0 : i32
    %c0_i32_0 = arith.constant 0 : i32
    %c0_i32_1 = arith.constant 0 : i32
    return %c0_i32, %c0_i32_0 : i32, i32
  }
  func.func @transform_8(%arg0: i32) -> (i32, i32, i32) {
    %c0_i32 = arith.constant 0 : i32
    %c0_i32_0 = arith.constant 0 : i32
    %c0_i32_1 = arith.constant 0 : i32
    return %arg0, %c0_i32, %c0_i32_0 : i32, i32, i32
  }
}

</mosaic_0001>

<llo_original>
// kernel: double_conv_pallas.1
$region0: #{double_conv_pallas.1}
  #allocation0 [shape = 'u32[]', space=smem, size = 0x4, offset = 0x4, fixed_abs, tag = 'smem constant byte address 0x4 - core index']
  #allocation1 [shape = 'u32[72,128]{1,0:T(1,128)}', space=vmem, size = 0x9000, scoped, tag = 'internal scratch']
  #allocation2 [shape = 'bf16[384,1152]{1,0:T(8,128)(2,1)}', space=vmem, size = 0xd8000, scoped, tag = 'scratch operand']
  %s0 = inlined_call_operand.vmem [shape: bf16[2,448,128], index: 0, kind: input, shape index: {}]
  %s1 = inlined_call_operand.vmem [shape: f32[448,1], index: 1, kind: input, shape index: {}]
  %s2 = inlined_call_operand.vmem [shape: bf16[128,128], index: 2, kind: input, shape index: {}]
  %s3 = inlined_call_operand.vmem [shape: f32[1,128], index: 3, kind: input, shape index: {}]
  %s4 = inlined_call_operand.vmem [shape: f32[1,128], index: 4, kind: input, shape index: {}]
  %s5 = inlined_call_operand.vmem [shape: bf16[1152,128], index: 5, kind: input, shape index: {}]
  %s6 = inlined_call_operand.vmem [shape: f32[1,128], index: 6, kind: input, shape index: {}]
  %s7 = inlined_call_operand.vmem [shape: f32[1,128], index: 7, kind: input, shape index: {}]
  %s8 = inlined_call_operand.vmem [shape: f32[2,384,128], index: 8, kind: output, shape index: {}]
  %s9 = sld [smem:[#allocation0]]
  $region65: #{double_conv_pallas.1} parent=0
    _
  %s11 = ssub.s32 1, %s9
  %s12 = scalar_select 0, %s11, %s9
  loop: start=0, step=1, limit=4
  $region2: #{double_conv_pallas.1} parent=0 // loop_pre_header
    _
  $region3: #{double_conv_pallas.1} parent=0 // loop_header
    %s14 = sphi 0, %s18
    %p15 = scmp.ge.s32.totalorder %s14, 4
    %s24 = sphi 0, %s26
    %s27 = sphi 0, %s24
    %s28 = sphi 0, %s27
    %s44 = sphi 0, %s28
    %s48 = sphi 0, %s48
    %s50 = sphi 0, %s48
    %s51 = sphi 0, %s50
    %s65 = sphi 0, %s51
    %s69 = sphi 0, %s69
    %s71 = sphi 0, %s69
    %s72 = sphi 0, %s71
    %s86 = sphi 0, %s72
    %s90 = sphi 0, %s90
    %s92 = sphi 0, %s90
    %s93 = sphi 0, %s92
    %s107 = sphi 0, %s93
    %s111 = sphi 0, %s111
    %s113 = sphi 0, %s111
    %s114 = sphi 0, %s113
    %s128 = sphi 0, %s114
    %s132 = sphi 0, %s132
    %s134 = sphi 0, %s132
    %s135 = sphi 0, %s134
    %s149 = sphi 0, %s135
    %s153 = sphi 0, %s153
    %s155 = sphi 0, %s153
    %s156 = sphi 0, %s155
    %s170 = sphi 0, %s156
    %s174 = sphi 0, %s174
    %s176 = sphi 0, %s174
    %s177 = sphi 0, %s176
    %s191 = sphi 0, %s177
    %s197 = sphi 0, %s199
    %s200 = sphi 0, %s197
    %s201 = sphi 0, %s200
    %s217 = sphi 0, %s201
  $region4: #{double_conv_pallas.1} parent=0 // loop_header_branch
    %17 = sbr.rel (%p15) target = $region8
  $region5: #{double_conv_pallas.1} parent=0 // loop_body
    %s19 = ssub.s32 %s14, 1
    %s20 = ssub.s32 %s14, 2
    %s21 = sadd.s32 %s14, 1
    %s22 = ssub.s32 %s14, %s21
    %p23 = scmp.eq.s32.totalorder %s22, 0
    %s25 = sadd.s32 %s24, 1
    %s26 = scalar_select %p23, %s24, %s25
    %p29 = pneg %p23
    %p30 = scmp.eq.s32.totalorder %s14, 1
    %p31 = por %p29, %p30
    %p32 = scmp.ne.s32.totalorder %s24, %s27
    %p33 = scmp.eq.s32.totalorder %s14, 0
    %p34 = por %p32, %p33
    %p35 = scmp.ne.s32.totalorder %s24, %s27
    %p36 = scmp.eq.s32.totalorder %s19, 1
    %p37 = por %p35, %p36
    %p38 = scmp.ne.s32.totalorder %s27, %s28
    %p39 = scmp.eq.s32.totalorder %s19, 0
    %p40 = por %p38, %p39
    %p41 = scmp.ne.s32.totalorder %s27, %s28
    %p42 = scmp.eq.s32.totalorder %s20, 1
    %p43 = por %p41, %p42
    %p45 = scmp.ne.s32.totalorder %s28, %s44
    %p46 = scmp.eq.s32.totalorder %s20, 0
    %p47 = por %p45, %p46
    %s49 = sadd.s32 %s48, 1
    %p52 = scmp.eq.s32.totalorder %s14, 1
    %p53 = scmp.ne.s32.totalorder %s48, %s50
    %p54 = scmp.eq.s32.totalorder %s14, 0
    %p55 = por %p53, %p54
    %p56 = scmp.ne.s32.totalorder %s48, %s50
    %p57 = scmp.eq.s32.totalorder %s19, 1
    %p58 = por %p56, %p57
    %p59 = scmp.ne.s32.totalorder %s50, %s51
    %p60 = scmp.eq.s32.totalorder %s19, 0
    %p61 = por %p59, %p60
    %p62 = scmp.ne.s32.totalorder %s50, %s51
    %p63 = scmp.eq.s32.totalorder %s20, 1
    %p64 = por %p62, %p63
    %p66 = scmp.ne.s32.totalorder %s51, %s65
    %p67 = scmp.eq.s32.totalorder %s20, 0
    %p68 = por %p66, %p67
    %s70 = sadd.s32 %s69, 1
    %p73 = scmp.eq.s32.totalorder %s14, 1
    %p74 = scmp.ne.s32.totalorder %s69, %s71
    %p75 = scmp.eq.s32.totalorder %s14, 0
    %p76 = por %p74, %p75
    %p77 = scmp.ne.s32.totalorder %s69, %s71
    %p78 = scmp.eq.s32.totalorder %s19, 1
    %p79 = por %p77, %p78
    %p80 = scmp.ne.s32.totalorder %s71, %s72
    %p81 = scmp.eq.s32.totalorder %s19, 0
    %p82 = por %p80, %p81
    %p83 = scmp.ne.s32.totalorder %s71, %s72
    %p84 = scmp.eq.s32.totalorder %s20, 1
    %p85 = por %p83, %p84
    %p87 = scmp.ne.s32.totalorder %s72, %s86
    %p88 = scmp.eq.s32.totalorder %s20, 0
    %p89 = por %p87, %p88
    %s91 = sadd.s32 %s90, 1
    %p94 = scmp.eq.s32.totalorder %s14, 1
    %p95 = scmp.ne.s32.totalorder %s90, %s92
    %p96 = scmp.eq.s32.totalorder %s14, 0
    %p97 = por %p95, %p96
    %p98 = scmp.ne.s32.totalorder %s90, %s92
    %p99 = scmp.eq.s32.totalorder %s19, 1
    %p100 = por %p98, %p99
    %p101 = scmp.ne.s32.totalorder %s92, %s93
    %p102 = scmp.eq.s32.totalorder %s19, 0
    %p103 = por %p101, %p102
    %p104 = scmp.ne.s32.totalorder %s92, %s93
    %p105 = scmp.eq.s32.totalorder %s20, 1
    %p106 = por %p104, %p105
    %p108 = scmp.ne.s32.totalorder %s93, %s107
    %p109 = scmp.eq.s32.totalorder %s20, 0
    %p110 = por %p108, %p109
    %s112 = sadd.s32 %s111, 1
    %p115 = scmp.eq.s32.totalorder %s14, 1
    %p116 = scmp.ne.s32.totalorder %s111, %s113
    %p117 = scmp.eq.s32.totalorder %s14, 0
    %p118 = por %p116, %p117
    %p119 = scmp.ne.s32.totalorder %s111, %s113
    %p120 = scmp.eq.s32.totalorder %s19, 1
    %p121 = por %p119, %p120
    %p122 = scmp.ne.s32.totalorder %s113, %s114
    %p123 = scmp.eq.s32.totalorder %s19, 0
    %p124 = por %p122, %p123
    %p125 = scmp.ne.s32.totalorder %s113, %s114
    %p126 = scmp.eq.s32.totalorder %s20, 1
    %p127 = por %p125, %p126
    %p129 = scmp.ne.s32.totalorder %s114, %s128
    %p130 = scmp.eq.s32.totalorder %s20, 0
    %p131 = por %p129, %p130
    %s133 = sadd.s32 %s132, 1
    %p136 = scmp.eq.s32.totalorder %s14, 1
    %p137 = scmp.ne.s32.totalorder %s132, %s134
    %p138 = scmp.eq.s32.totalorder %s14, 0
    %p139 = por %p137, %p138
    %p140 = scmp.ne.s32.totalorder %s132, %s134
    %p141 = scmp.eq.s32.totalorder %s19, 1
    %p142 = por %p140, %p141
    %p143 = scmp.ne.s32.totalorder %s134, %s135
    %p144 = scmp.eq.s32.totalorder %s19, 0
    %p145 = por %p143, %p144
    %p146 = scmp.ne.s32.totalorder %s134, %s135
    %p147 = scmp.eq.s32.totalorder %s20, 1
    %p148 = por %p146, %p147
    %p150 = scmp.ne.s32.totalorder %s135, %s149
    %p151 = scmp.eq.s32.totalorder %s20, 0
    %p152 = por %p150, %p151
    %s154 = sadd.s32 %s153, 1
    %p157 = scmp.eq.s32.totalorder %s14, 1
    %p158 = scmp.ne.s32.totalorder %s153, %s155
    %p159 = scmp.eq.s32.totalorder %s14, 0
    %p160 = por %p158, %p159
    %p161 = scmp.ne.s32.totalorder %s153, %s155
    %p162 = scmp.eq.s32.totalorder %s19, 1
    %p163 = por %p161, %p162
    %p164 = scmp.ne.s32.totalorder %s155, %s156
    %p165 = scmp.eq.s32.totalorder %s19, 0
    %p166 = por %p164, %p165
    %p167 = scmp.ne.s32.totalorder %s155, %s156
    %p168 = scmp.eq.s32.totalorder %s20, 1
    %p169 = por %p167, %p168
    %p171 = scmp.ne.s32.totalorder %s156, %s170
    %p172 = scmp.eq.s32.totalorder %s20, 0
    %p173 = por %p171, %p172
    %s175 = sadd.s32 %s174, 1
    %p178 = scmp.eq.s32.totalorder %s14, 1
    %p179 = scmp.ne.s32.totalorder %s174, %s176
    %p180 = scmp.eq.s32.totalorder %s14, 0
    %p181 = por %p179, %p180
    %p182 = scmp.ne.s32.totalorder %s174, %s176
    %p183 = scmp.eq.s32.totalorder %s19, 1
    %p184 = por %p182, %p183
    %p185 = scmp.ne.s32.totalorder %s176, %s177
    %p186 = scmp.eq.s32.totalorder %s19, 0
    %p187 = por %p185, %p186
    %p188 = scmp.ne.s32.totalorder %s176, %s177
    %p189 = scmp.eq.s32.totalorder %s20, 1
    %p190 = por %p188, %p189
    %p192 = scmp.ne.s32.totalorder %s177, %s191
    %p193 = scmp.eq.s32.totalorder %s20, 0
    %p194 = por %p192, %p193
    %s195 = ssub.s32 %s14, %s21
    %p196 = scmp.eq.s32.totalorder %s195, 0
    %s198 = sadd.s32 %s197, 1
    %s199 = scalar_select %p196, %s197, %s198
    %p202 = pneg %p196
    %p203 = scmp.eq.s32.totalorder %s14, 1
    %p204 = por %p202, %p203
    %p205 = scmp.ne.s32.totalorder %s197, %s200
    %p206 = scmp.eq.s32.totalorder %s14, 0
    %p207 = por %p205, %p206
    %p208 = scmp.ne.s32.totalorder %s197, %s200
    %p209 = scmp.eq.s32.totalorder %s19, 1
    %p210 = por %p208, %p209
    %p211 = scmp.ne.s32.totalorder %s200, %s201
    %p212 = scmp.eq.s32.totalorder %s19, 0
    %p213 = por %p211, %p212
    %p214 = scmp.ne.s32.totalorder %s200, %s201
    %p215 = scmp.eq.s32.totalorder %s20, 1
    %p216 = por %p214, %p215
    %p218 = scmp.ne.s32.totalorder %s201, %s217
    %p219 = scmp.eq.s32.totalorder %s20, 0
    %p220 = por %p218, %p219
    %p221 = scmp.le.s32.totalorder 1, %s14
    %p222 = scmp.lt.s32.totalorder %s14, 3
    %p223 = pnand %p221, %p222
    %p224 = pneg %p223
    // Predicated region
    $region9: #{double_conv_pallas.1} parent=5 // pred_check
      _
    $region10: #{double_conv_pallas.1} parent=5 // pred_check_branch
      %226 = sbr.rel (%p223) target = $region12
    $region11: #{double_conv_pallas.1} parent=5 // pred_region
      %s227 = ssub.s32 %s14, 1
      // Predicated region
      $region13: #{double_conv_pallas.1} parent=11 // pred_check
        %p228 = pneg %p61
      $region14: #{double_conv_pallas.1} parent=11 // pred_check_branch
        %230 = sbr.rel (%p228) target = $region16
      $region15: #{double_conv_pallas.1} parent=11 // pred_region
        _
      $region16: #{double_conv_pallas.1} parent=11 // pred_fallthru
        _
      // Predicated region
      $region17: #{double_conv_pallas.1} parent=11 // pred_check
        %p231 = pneg %p82
      $region18: #{double_conv_pallas.1} parent=11 // pred_check_branch
        %233 = sbr.rel (%p231) target = $region20
      $region19: #{double_conv_pallas.1} parent=11 // pred_region
        _
      $region20: #{double_conv_pallas.1} parent=11 // pred_fallthru
        _
      // Predicated region
      $region21: #{double_conv_pallas.1} parent=11 // pred_check
        %p234 = pneg %p103
      $region22: #{double_conv_pallas.1} parent=11 // pred_check_branch
        %236 = sbr.rel (%p234) target = $region24
      $region23: #{double_conv_pallas.1} parent=11 // pred_region
        _
      $region24: #{double_conv_pallas.1} parent=11 // pred_fallthru
        _
      // Predicated region
      $region25: #{double_conv_pallas.1} parent=11 // pred_check
        %p237 = pneg %p124
      $region26: #{double_conv_pallas.1} parent=11 // pred_check_branch
        %239 = sbr.rel (%p237) target = $region28
      $region27: #{double_conv_pallas.1} parent=11 // pred_region
        _
      $region28: #{double_conv_pallas.1} parent=11 // pred_fallthru
        _
      // Predicated region
      $region29: #{double_conv_pallas.1} parent=11 // pred_check
        %p240 = pneg %p145
      $region30: #{double_conv_pallas.1} parent=11 // pred_check_branch
        %242 = sbr.rel (%p240) target = $region32
      $region31: #{double_conv_pallas.1} parent=11 // pred_region
        _
      $region32: #{double_conv_pallas.1} parent=11 // pred_fallthru
        _
      // Predicated region
      $region33: #{double_conv_pallas.1} parent=11 // pred_check
        %p243 = pneg %p166
      $region34: #{double_conv_pallas.1} parent=11 // pred_check_branch
        %245 = sbr.rel (%p243) target = $region36
      $region35: #{double_conv_pallas.1} parent=11 // pred_region
        _
      $region36: #{double_conv_pallas.1} parent=11 // pred_fallthru
        _
      // Predicated region
      $region37: #{double_conv_pallas.1} parent=11 // pred_check
        %p246 = pneg %p187
      $region38: #{double_conv_pallas.1} parent=11 // pred_check_branch
        %248 = sbr.rel (%p246) target = $region40
      $region39: #{double_conv_pallas.1} parent=11 // pred_region
        _
      $region40: #{double_conv_pallas.1} parent=11 // pred_fallthru
        _
    $region12: #{double_conv_pallas.1} parent=5 // pred_fallthru
      _
    %p249 = scmp.lt.s32.totalorder %s14, 2
    // Predicated region
    $region41: #{double_conv_pallas.1} parent=5 // pred_check
      %p250 = pneg %p249
    $region42: #{double_conv_pallas.1} parent=5 // pred_check_branch
      %252 = sbr.rel (%p250) target = $region44
    $region43: #{double_conv_pallas.1} parent=5 // pred_region
      // Predicated region
      $region45: #{double_conv_pallas.1} parent=43 // pred_check
        %p253 = pneg %p34
      $region46: #{double_conv_pallas.1} parent=43 // pred_check_branch
        %255 = sbr.rel (%p253) target = $region48
      $region47: #{double_conv_pallas.1} parent=43 // pred_region
        %p256 = scmp.lt.s32.totalorder %s14, 1
        %s257 = scalar_select %p256, %s14, 1
        %s258 = smul.addr %s257, 56
        %s259 = smul.addr %s258, 4
        %s260 = scalar_lea.vmem %s0, %s259
      $region48: #{double_conv_pallas.1} parent=43 // pred_fallthru
        _
    $region44: #{double_conv_pallas.1} parent=5 // pred_fallthru
      _
    %p261 = scmp.le.s32.totalorder 1, %s14
    %p262 = scmp.lt.s32.totalorder %s14, 3
    %p263 = pnand %p261, %p262
    %p264 = pneg %p263
    // Predicated region
    $region49: #{double_conv_pallas.1} parent=5 // pred_check
      _
    $region50: #{double_conv_pallas.1} parent=5 // pred_check_branch
      %266 = sbr.rel (%p263) target = $region52
    $region51: #{double_conv_pallas.1} parent=5 // pred_region
      %s267 = ssub.s32 %s14, 1
      %p268 = scmp.lt.s32.totalorder %s19, 1
      %s269 = scalar_select %p268, %s19, 1
      %s270 = smul.addr %s269, 56
      %s271 = smul.addr %s270, 4
      %s272 = scalar_lea.vmem %s0, %s271
      %p273 = pneg %p40
      %p274 = pneg %p37
      %p275 = pneg %p61
      %p276 = pneg %p58
      %p277 = pneg %p82
      %p278 = pneg %p79
      %p279 = pneg %p103
      %p280 = pneg %p100
      %p281 = pneg %p124
      %p282 = pneg %p121
      %p283 = pneg %p145
      %p284 = pneg %p142
      %p285 = pneg %p166
      %p286 = pneg %p163
      %p287 = pneg %p187
      %p288 = pneg %p184
      %p289 = pneg %p213
      %p290 = pneg %p210
      %p291 = scmp.lt.s32.totalorder %s19, 1
      %s292 = scalar_select %p291, %s19, 1
      %s293 = smul.addr %s292, 48
      %s294 = smul.addr %s293, 8
      %s295 = scalar_lea.vmem %s8, %s294
      %p296 = scmp.lt.s32.totalorder %s19, 1
      %s297 = scalar_select %p296, %s19, 1
      %s298 = smul.addr %s297, 56
      %s299 = smul.addr %s298, 4
      %s300 = scalar_lea.vmem %s0, %s299
      %p301 = scmp.lt.s32.totalorder %s19, 1
      %s302 = scalar_select %p301, %s19, 1
      %s303 = smul.addr %s302, 48
      %s304 = smul.addr %s303, 8
      %s305 = scalar_lea.vmem %s8, %s304
      %v306 = vld [vmem:[%s300] sm:$0xf]
      %v307 = vld [vmem:[%s300 + $0x4] sm:$0xf]
      %v308 = vld [vmem:[%s300 + $0x8] sm:$0xf]
      %v309 = vld [vmem:[%s300 + $0xc] sm:$0xf]
      %v310 = vld [vmem:[%s300 + $0x10] sm:$0xf]
      %v311 = vld [vmem:[%s300 + $0x14] sm:$0xf]
      %v312 = vld [vmem:[%s300 + $0x18] sm:$0xf]
      %v313 = vld [vmem:[%s300 + $0x1c] sm:$0xf]
      %v314 = vld [vmem:[%s300 + $0x20] sm:$0xf]
      %v315 = vld [vmem:[%s300 + $0x24] sm:$0xf]
      %v316 = vld [vmem:[%s300 + $0x28] sm:$0xf]
      %v317 = vld [vmem:[%s300 + $0x2c] sm:$0xf]
      %v318 = vld [vmem:[%s300 + $0x30] sm:$0xf]
      %v319 = vld [vmem:[%s300 + $0x34] sm:$0xf]
      %v320 = vld [vmem:[%s300 + $0x38] sm:$0xf]
      %v321 = vld [vmem:[%s300 + $0x3c] sm:$0xf]
      %v322 = vld [vmem:[%s300 + $0x40] sm:$0xf]
      %v323 = vld [vmem:[%s300 + $0x44] sm:$0xf]
      %v324 = vld [vmem:[%s300 + $0x48] sm:$0xf]
      %v325 = vld [vmem:[%s300 + $0x4c] sm:$0xf]
      %v326 = vld [vmem:[%s300 + $0x50] sm:$0xf]
      %v327 = vld [vmem:[%s300 + $0x54] sm:$0xf]
      %v328 = vld [vmem:[%s300 + $0x58] sm:$0xf]
      %v329 = vld [vmem:[%s300 + $0x5c] sm:$0xf]
      %v330 = vld [vmem:[%s300 + $0x60] sm:$0xf]
      %v331 = vld [vmem:[%s300 + $0x64] sm:$0xf]
      %v332 = vld [vmem:[%s300 + $0x68] sm:$0xf]
      %v333 = vld [vmem:[%s300 + $0x6c] sm:$0xf]
      %v334 = vld [vmem:[%s300 + $0x70] sm:$0xf]
      %v335 = vld [vmem:[%s300 + $0x74] sm:$0xf]
      %v336 = vld [vmem:[%s300 + $0x78] sm:$0xf]
      %v337 = vld [vmem:[%s300 + $0x7c] sm:$0xf]
      %v338 = vld [vmem:[%s300 + $0x80] sm:$0xf]
      %v339 = vld [vmem:[%s300 + $0x84] sm:$0xf]
      %v340 = vld [vmem:[%s300 + $0x88] sm:$0xf]
      %v341 = vld [vmem:[%s300 + $0x8c] sm:$0xf]
      %v342 = vld [vmem:[%s300 + $0x90] sm:$0xf]
      %v343 = vld [vmem:[%s300 + $0x94] sm:$0xf]
      %v344 = vld [vmem:[%s300 + $0x98] sm:$0xf]
      %v345 = vld [vmem:[%s300 + $0x9c] sm:$0xf]
      %v346 = vld [vmem:[%s300 + $0xa0] sm:$0xf]
      %v347 = vld [vmem:[%s300 + $0xa4] sm:$0xf]
      %v348 = vld [vmem:[%s300 + $0xa8] sm:$0xf]
      %v349 = vld [vmem:[%s300 + $0xac] sm:$0xf]
      %v350 = vld [vmem:[%s300 + $0xb0] sm:$0xf]
      %v351 = vld [vmem:[%s300 + $0xb4] sm:$0xf]
      %v352 = vld [vmem:[%s300 + $0xb8] sm:$0xf]
      %v353 = vld [vmem:[%s300 + $0xbc] sm:$0xf]
      %v354 = vld [vmem:[%s300 + $0xc0] sm:$0xf]
      %v355 = vld [vmem:[%s300 + $0xc4] sm:$0xf]
      %v356 = vld [vmem:[%s300 + $0xc8] sm:$0xf]
      %v357 = vld [vmem:[%s300 + $0xcc] sm:$0xf]
      %v358 = vld [vmem:[%s300 + $0xd0] sm:$0xf]
      %v359 = vld [vmem:[%s300 + $0xd4] sm:$0xf]
      %v360 = vld [vmem:[%s300 + $0xd8] sm:$0xf]
      %v361 = vld [vmem:[%s300 + $0xdc] sm:$0xf]
      %v362 = vld [vmem:[%s2] sm:$0xf]
      %v363 = vld [vmem:[%s2 + $0x4] sm:$0xf]
      %v364 = vld [vmem:[%s2 + $0x8] sm:$0xf]
      %v365 = vld [vmem:[%s2 + $0xc] sm:$0xf]
      %v366 = vld [vmem:[%s2 + $0x10] sm:$0xf]
      %v367 = vld [vmem:[%s2 + $0x14] sm:$0xf]
      %v368 = vld [vmem:[%s2 + $0x18] sm:$0xf]
      %v369 = vld [vmem:[%s2 + $0x1c] sm:$0xf]
      %v370 = vld [vmem:[%s2 + $0x20] sm:$0xf]
      %v371 = vld [vmem:[%s2 + $0x24] sm:$0xf]
      %v372 = vld [vmem:[%s2 + $0x28] sm:$0xf]
      %v373 = vld [vmem:[%s2 + $0x2c] sm:$0xf]
      %v374 = vld [vmem:[%s2 + $0x30] sm:$0xf]
      %v375 = vld [vmem:[%s2 + $0x34] sm:$0xf]
      %v376 = vld [vmem:[%s2 + $0x38] sm:$0xf]
      %v377 = vld [vmem:[%s2 + $0x3c] sm:$0xf]
      %v434 = vunpack.c.l.b16 %v306
      %v435 = vunpack.c.l.b16 %v307
      %v436 = vunpack.c.l.b16 %v308
      %v437 = vunpack.c.l.b16 %v309
      %v438 = vunpack.c.l.b16 %v310
      %v439 = vunpack.c.l.b16 %v311
      %v440 = vunpack.c.l.b16 %v312
      %v441 = vunpack.c.l.b16 %v313
      %v442 = vunpack.c.l.b16 %v314
      %v443 = vunpack.c.l.b16 %v315
      %v444 = vunpack.c.l.b16 %v316
      %v445 = vunpack.c.l.b16 %v317
      %v446 = vunpack.c.l.b16 %v318
      %v447 = vunpack.c.l.b16 %v319
      %v448 = vunpack.c.l.b16 %v320
      %v449 = vunpack.c.l.b16 %v321
      %v450 = vunpack.c.l.b16 %v322
      %v451 = vunpack.c.l.b16 %v323
      %v452 = vunpack.c.l.b16 %v324
      %v453 = vunpack.c.l.b16 %v325
      %v454 = vunpack.c.l.b16 %v326
      %v455 = vunpack.c.l.b16 %v327
      %v456 = vunpack.c.l.b16 %v328
      %v457 = vunpack.c.l.b16 %v329
      %v458 = vunpack.c.l.b16 %v330
      %v459 = vunpack.c.l.b16 %v331
      %v460 = vunpack.c.l.b16 %v332
      %v461 = vunpack.c.l.b16 %v333
      %v462 = vunpack.c.l.b16 %v334
      %v463 = vunpack.c.l.b16 %v335
      %v464 = vunpack.c.l.b16 %v336
      %v465 = vunpack.c.l.b16 %v337
      %v466 = vunpack.c.l.b16 %v338
      %v467 = vunpack.c.l.b16 %v339
      %v468 = vunpack.c.l.b16 %v340
      %v469 = vunpack.c.l.b16 %v341
      %v470 = vunpack.c.l.b16 %v342
      %v471 = vunpack.c.l.b16 %v343
      %v472 = vunpack.c.l.b16 %v344
      %v473 = vunpack.c.l.b16 %v345
      %v474 = vunpack.c.l.b16 %v346
      %v475 = vunpack.c.l.b16 %v347
      %v476 = vunpack.c.l.b16 %v348
      %v477 = vunpack.c.l.b16 %v349
      %v478 = vunpack.c.l.b16 %v350
      %v479 = vunpack.c.l.b16 %v351
      %v480 = vunpack.c.l.b16 %v352
      %v481 = vunpack.c.l.b16 %v353
      %v482 = vunpack.c.l.b16 %v354
      %v483 = vunpack.c.l.b16 %v355
      %v484 = vunpack.c.l.b16 %v356
      %v485 = vunpack.c.l.b16 %v357
      %v486 = vunpack.c.l.b16 %v358
      %v487 = vunpack.c.l.b16 %v359
      %v488 = vunpack.c.l.b16 %v360
      %v489 = vunpack.c.l.b16 %v361
      %v490 = vpack.c.b16 %v435, %v434
      %v491 = vpack.c.b16 %v437, %v436
      %v492 = vpack.c.b16 %v439, %v438
      %v493 = vpack.c.b16 %v441, %v440
      %v494 = vpack.c.b16 %v443, %v442
      %v495 = vpack.c.b16 %v445, %v444
      %v496 = vpack.c.b16 %v447, %v446
      %v497 = vpack.c.b16 %v449, %v448
      %v498 = vpack.c.b16 %v451, %v450
      %v499 = vpack.c.b16 %v453, %v452
      %v500 = vpack.c.b16 %v455, %v454
      %v501 = vpack.c.b16 %v457, %v456
      %v502 = vpack.c.b16 %v459, %v458
      %v503 = vpack.c.b16 %v461, %v460
      %v504 = vpack.c.b16 %v463, %v462
      %v505 = vpack.c.b16 %v465, %v464
      %v506 = vpack.c.b16 %v467, %v466
      %v507 = vpack.c.b16 %v469, %v468
      %v508 = vpack.c.b16 %v471, %v470
      %v509 = vpack.c.b16 %v473, %v472
      %v510 = vpack.c.b16 %v475, %v474
      %v511 = vpack.c.b16 %v477, %v476
      %v512 = vpack.c.b16 %v479, %v478
      %v513 = vpack.c.b16 %v481, %v480
      %v514 = vpack.c.b16 %v483, %v482
      %v515 = vpack.c.b16 %v485, %v484
      %v516 = vpack.c.b16 %v487, %v486
      %v517 = vpack.c.b16 %v489, %v488
      %v562 = vunpack.c.l.b16 %v362
      %v563 = vunpack.c.l.b16 %v363
      %v564 = vunpack.c.l.b16 %v364
      %v565 = vunpack.c.l.b16 %v365
      %v566 = vunpack.c.l.b16 %v366
      %v567 = vunpack.c.l.b16 %v367
      %v568 = vunpack.c.l.b16 %v368
      %v569 = vunpack.c.l.b16 %v369
      %v570 = vunpack.c.l.b16 %v370
      %v571 = vunpack.c.l.b16 %v371
      %v572 = vunpack.c.l.b16 %v372
      %v573 = vunpack.c.l.b16 %v373
      %v574 = vunpack.c.l.b16 %v374
      %v575 = vunpack.c.l.b16 %v375
      %v576 = vunpack.c.l.b16 %v376
      %v577 = vunpack.c.l.b16 %v377
      %v578 = vpack.c.b16 %v563, %v562
      %v579 = vpack.c.b16 %v565, %v564
      %v580 = vpack.c.b16 %v567, %v566
      %v581 = vpack.c.b16 %v569, %v568
      %v582 = vpack.c.b16 %v571, %v570
      %v583 = vpack.c.b16 %v573, %v572
      %v584 = vpack.c.b16 %v575, %v574
      %v585 = vpack.c.b16 %v577, %v576
      %594 = vmatpush.bf16.msra.mxu0 %v585
      %595 = vmatpush.bf16.msra.mxu0 %v584
      %596 = vmatpush.bf16.msra.mxu0 %v583
      %597 = vmatpush.bf16.msra.mxu0 %v582
      %598 = vmatpush.bf16.msra.mxu0 %v581
      %599 = vmatpush.bf16.msra.mxu0 %v580
      %600 = vmatpush.bf16.msra.mxu0 %v579
      %601 = vmatpush.bf16.msra.mxu0 %v578
      %602 = vmatmul.bf16.gmra.mxu0 %v490
      %v603 = vpop.f32.mrf.mxu0
      %v604 = vadd.f32 0.0, %v603
      %v605 = vpop.f32.mrf.mxu0
      %v606 = vadd.f32 0.0, %v605
      %607 = vmatmul.bf16.gmra.mxu0 %v491
      %v608 = vpop.f32.mrf.mxu0
      %v609 = vadd.f32 0.0, %v608
      %v610 = vpop.f32.mrf.mxu0
      %v611 = vadd.f32 0.0, %v610
      %612 = vmatmul.bf16.gmra.mxu0 %v492
      %v613 = vpop.f32.mrf.mxu0
      %v614 = vadd.f32 0.0, %v613
      %v615 = vpop.f32.mrf.mxu0
      %v616 = vadd.f32 0.0, %v615
      %617 = vmatmul.bf16.gmra.mxu0 %v493
      %v618 = vpop.f32.mrf.mxu0
      %v619 = vadd.f32 0.0, %v618
      %v620 = vpop.f32.mrf.mxu0
      %v621 = vadd.f32 0.0, %v620
      %622 = vmatmul.bf16.gmra.mxu0 %v494
      %v623 = vpop.f32.mrf.mxu0
      %v624 = vadd.f32 0.0, %v623
      %v625 = vpop.f32.mrf.mxu0
      %v626 = vadd.f32 0.0, %v625
      %627 = vmatmul.bf16.gmra.mxu0 %v495
      %v628 = vpop.f32.mrf.mxu0
      %v629 = vadd.f32 0.0, %v628
      %v630 = vpop.f32.mrf.mxu0
      %v631 = vadd.f32 0.0, %v630
      %632 = vmatmul.bf16.gmra.mxu0 %v496
      %v633 = vpop.f32.mrf.mxu0
      %v634 = vadd.f32 0.0, %v633
      %v635 = vpop.f32.mrf.mxu0
      %v636 = vadd.f32 0.0, %v635
      %637 = vmatmul.bf16.gmra.mxu0 %v497
      %v638 = vpop.f32.mrf.mxu0
      %v639 = vadd.f32 0.0, %v638
      %v640 = vpop.f32.mrf.mxu0
      %v641 = vadd.f32 0.0, %v640
      %642 = vmatmul.bf16.gmra.mxu0 %v498
      %v643 = vpop.f32.mrf.mxu0
      %v644 = vadd.f32 0.0, %v643
      %v645 = vpop.f32.mrf.mxu0
      %v646 = vadd.f32 0.0, %v645
      %647 = vmatmul.bf16.gmra.mxu0 %v499
      %v648 = vpop.f32.mrf.mxu0
      %v649 = vadd.f32 0.0, %v648
      %v650 = vpop.f32.mrf.mxu0
      %v651 = vadd.f32 0.0, %v650
      %652 = vmatmul.bf16.gmra.mxu0 %v500
      %v653 = vpop.f32.mrf.mxu0
      %v654 = vadd.f32 0.0, %v653
      %v655 = vpop.f32.mrf.mxu0
      %v656 = vadd.f32 0.0, %v655
      %657 = vmatmul.bf16.gmra.mxu0 %v501
      %v658 = vpop.f32.mrf.mxu0
      %v659 = vadd.f32 0.0, %v658
      %v660 = vpop.f32.mrf.mxu0
      %v661 = vadd.f32 0.0, %v660
      %662 = vmatmul.bf16.gmra.mxu0 %v502
      %v663 = vpop.f32.mrf.mxu0
      %v664 = vadd.f32 0.0, %v663
      %v665 = vpop.f32.mrf.mxu0
      %v666 = vadd.f32 0.0, %v665
      %667 = vmatmul.bf16.gmra.mxu0 %v503
      %v668 = vpop.f32.mrf.mxu0
      %v669 = vadd.f32 0.0, %v668
      %v670 = vpop.f32.mrf.mxu0
      %v671 = vadd.f32 0.0, %v670
      %672 = vmatmul.bf16.gmra.mxu0 %v504
      %v673 = vpop.f32.mrf.mxu0
      %v674 = vadd.f32 0.0, %v673
      %v675 = vpop.f32.mrf.mxu0
      %v676 = vadd.f32 0.0, %v675
      %677 = vmatmul.bf16.gmra.mxu0 %v505
      %v678 = vpop.f32.mrf.mxu0
      %v679 = vadd.f32 0.0, %v678
      %v680 = vpop.f32.mrf.mxu0
      %v681 = vadd.f32 0.0, %v680
      %682 = vmatmul.bf16.gmra.mxu0 %v506
      %v683 = vpop.f32.mrf.mxu0
      %v684 = vadd.f32 0.0, %v683
      %v685 = vpop.f32.mrf.mxu0
      %v686 = vadd.f32 0.0, %v685
      %687 = vmatmul.bf16.gmra.mxu0 %v507
      %v688 = vpop.f32.mrf.mxu0
      %v689 = vadd.f32 0.0, %v688
      %v690 = vpop.f32.mrf.mxu0
      %v691 = vadd.f32 0.0, %v690
      %692 = vmatmul.bf16.gmra.mxu0 %v508
      %v693 = vpop.f32.mrf.mxu0
      %v694 = vadd.f32 0.0, %v693
      %v695 = vpop.f32.mrf.mxu0
      %v696 = vadd.f32 0.0, %v695
      %697 = vmatmul.bf16.gmra.mxu0 %v509
      %v698 = vpop.f32.mrf.mxu0
      %v699 = vadd.f32 0.0, %v698
      %v700 = vpop.f32.mrf.mxu0
      %v701 = vadd.f32 0.0, %v700
      %702 = vmatmul.bf16.gmra.mxu0 %v510
      %v703 = vpop.f32.mrf.mxu0
      %v704 = vadd.f32 0.0, %v703
      %v705 = vpop.f32.mrf.mxu0
      %v706 = vadd.f32 0.0, %v705
      %707 = vmatmul.bf16.gmra.mxu0 %v511
      %v708 = vpop.f32.mrf.mxu0
      %v709 = vadd.f32 0.0, %v708
      %v710 = vpop.f32.mrf.mxu0
      %v711 = vadd.f32 0.0, %v710
      %712 = vmatmul.bf16.gmra.mxu0 %v512
      %v713 = vpop.f32.mrf.mxu0
      %v714 = vadd.f32 0.0, %v713
      %v715 = vpop.f32.mrf.mxu0
      %v716 = vadd.f32 0.0, %v715
      %717 = vmatmul.bf16.gmra.mxu0 %v513
      %v718 = vpop.f32.mrf.mxu0
      %v719 = vadd.f32 0.0, %v718
      %v720 = vpop.f32.mrf.mxu0
      %v721 = vadd.f32 0.0, %v720
      %722 = vmatmul.bf16.gmra.mxu0 %v514
      %v723 = vpop.f32.mrf.mxu0
      %v724 = vadd.f32 0.0, %v723
      %v725 = vpop.f32.mrf.mxu0
      %v726 = vadd.f32 0.0, %v725
      %727 = vmatmul.bf16.gmra.mxu0 %v515
      %v728 = vpop.f32.mrf.mxu0
      %v729 = vadd.f32 0.0, %v728
      %v730 = vpop.f32.mrf.mxu0
      %v731 = vadd.f32 0.0, %v730
      %732 = vmatmul.bf16.gmra.mxu0 %v516
      %v733 = vpop.f32.mrf.mxu0
      %v734 = vadd.f32 0.0, %v733
      %v735 = vpop.f32.mrf.mxu0
      %v736 = vadd.f32 0.0, %v735
      %737 = vmatmul.bf16.gmra.mxu0 %v517
      %v738 = vpop.f32.mrf.mxu0
      %v739 = vadd.f32 0.0, %v738
      %v740 = vpop.f32.mrf.mxu0
      %741 = vdwg.mxu0
      %v742 = vld [vmem:[%s3] sm:$0x1]
      %v744 = vperm.slane %v742, 0
      %v746 = vmul.f32 %v604, %v744
      %v747 = vmul.f32 %v606, %v744
      %v748 = vmul.f32 %v609, %v744
      %v749 = vmul.f32 %v611, %v744
      %v750 = vmul.f32 %v614, %v744
      %v751 = vmul.f32 %v616, %v744
      %v752 = vmul.f32 %v619, %v744
      %v753 = vmul.f32 %v621, %v744
      %v754 = vmul.f32 %v624, %v744
      %v755 = vmul.f32 %v626, %v744
      %v756 = vmul.f32 %v629, %v744
      %v757 = vmul.f32 %v631, %v744
      %v758 = vmul.f32 %v634, %v744
      %v759 = vmul.f32 %v636, %v744
      %v760 = vmul.f32 %v639, %v744
      %v761 = vmul.f32 %v641, %v744
      %v762 = vmul.f32 %v644, %v744
      %v763 = vmul.f32 %v646, %v744
      %v764 = vmul.f32 %v649, %v744
      %v765 = vmul.f32 %v651, %v744
      %v766 = vmul.f32 %v654, %v744
      %v767 = vmul.f32 %v656, %v744
      %v768 = vmul.f32 %v659, %v744
      %v769 = vmul.f32 %v661, %v744
      %v770 = vmul.f32 %v664, %v744
      %v771 = vmul.f32 %v666, %v744
      %v772 = vmul.f32 %v669, %v744
      %v773 = vmul.f32 %v671, %v744
      %v774 = vmul.f32 %v674, %v744
      %v775 = vmul.f32 %v676, %v744
      %v776 = vmul.f32 %v679, %v744
      %v777 = vmul.f32 %v681, %v744
      %v778 = vmul.f32 %v684, %v744
      %v779 = vmul.f32 %v686, %v744
      %v780 = vmul.f32 %v689, %v744
      %v781 = vmul.f32 %v691, %v744
      %v782 = vmul.f32 %v694, %v744
      %v783 = vmul.f32 %v696, %v744
      %v784 = vmul.f32 %v699, %v744
      %v785 = vmul.f32 %v701, %v744
      %v786 = vmul.f32 %v704, %v744
      %v787 = vmul.f32 %v706, %v744
      %v788 = vmul.f32 %v709, %v744
      %v789 = vmul.f32 %v711, %v744
      %v790 = vmul.f32 %v714, %v744
      %v791 = vmul.f32 %v716, %v744
      %v792 = vmul.f32 %v719, %v744
      %v793 = vmul.f32 %v721, %v744
      %v794 = vmul.f32 %v724, %v744
      %v795 = vmul.f32 %v726, %v744
      %v796 = vmul.f32 %v729, %v744
      %v797 = vmul.f32 %v731, %v744
      %v798 = vmul.f32 %v734, %v744
      %v799 = vmul.f32 %v736, %v744
      %v800 = vmul.f32 %v739, %v744
      %v801 = vld [vmem:[%s4] sm:$0x1]
      %v803 = vperm.slane %v801, 0
      %v805 = vadd.f32 %v746, %v803
      %v806 = vadd.f32 %v747, %v803
      %v807 = vadd.f32 %v748, %v803
      %v808 = vadd.f32 %v749, %v803
      %v809 = vadd.f32 %v750, %v803
      %v810 = vadd.f32 %v751, %v803
      %v811 = vadd.f32 %v752, %v803
      %v812 = vadd.f32 %v753, %v803
      %v813 = vadd.f32 %v754, %v803
      %v814 = vadd.f32 %v755, %v803
      %v815 = vadd.f32 %v756, %v803
      %v816 = vadd.f32 %v757, %v803
      %v817 = vadd.f32 %v758, %v803
      %v818 = vadd.f32 %v759, %v803
      %v819 = vadd.f32 %v760, %v803
      %v820 = vadd.f32 %v761, %v803
      %v821 = vadd.f32 %v762, %v803
      %v822 = vadd.f32 %v763, %v803
      %v823 = vadd.f32 %v764, %v803
      %v824 = vadd.f32 %v765, %v803
      %v825 = vadd.f32 %v766, %v803
      %v826 = vadd.f32 %v767, %v803
      %v827 = vadd.f32 %v768, %v803
      %v828 = vadd.f32 %v769, %v803
      %v829 = vadd.f32 %v770, %v803
      %v830 = vadd.f32 %v771, %v803
      %v831 = vadd.f32 %v772, %v803
      %v832 = vadd.f32 %v773, %v803
      %v833 = vadd.f32 %v774, %v803
      %v834 = vadd.f32 %v775, %v803
      %v835 = vadd.f32 %v776, %v803
      %v836 = vadd.f32 %v777, %v803
      %v837 = vadd.f32 %v778, %v803
      %v838 = vadd.f32 %v779, %v803
      %v839 = vadd.f32 %v780, %v803
      %v840 = vadd.f32 %v781, %v803
      %v841 = vadd.f32 %v782, %v803
      %v842 = vadd.f32 %v783, %v803
      %v843 = vadd.f32 %v784, %v803
      %v844 = vadd.f32 %v785, %v803
      %v845 = vadd.f32 %v786, %v803
      %v846 = vadd.f32 %v787, %v803
      %v847 = vadd.f32 %v788, %v803
      %v848 = vadd.f32 %v789, %v803
      %v849 = vadd.f32 %v790, %v803
      %v850 = vadd.f32 %v791, %v803
      %v851 = vadd.f32 %v792, %v803
      %v852 = vadd.f32 %v793, %v803
      %v853 = vadd.f32 %v794, %v803
      %v854 = vadd.f32 %v795, %v803
      %v855 = vadd.f32 %v796, %v803
      %v856 = vadd.f32 %v797, %v803
      %v857 = vadd.f32 %v798, %v803
      %v858 = vadd.f32 %v799, %v803
      %v859 = vadd.f32 %v800, %v803
      %vm860 = vcmp.gt.f32.partialorder %v805, 0.0
      %vm861 = vcmp.gt.f32.partialorder %v806, 0.0
      %vm862 = vcmp.gt.f32.partialorder %v807, 0.0
      %vm863 = vcmp.gt.f32.partialorder %v808, 0.0
      %vm864 = vcmp.gt.f32.partialorder %v809, 0.0
      %vm865 = vcmp.gt.f32.partialorder %v810, 0.0
      %vm866 = vcmp.gt.f32.partialorder %v811, 0.0
      %vm867 = vcmp.gt.f32.partialorder %v812, 0.0
      %vm868 = vcmp.gt.f32.partialorder %v813, 0.0
      %vm869 = vcmp.gt.f32.partialorder %v814, 0.0
      %vm870 = vcmp.gt.f32.partialorder %v815, 0.0
      %vm871 = vcmp.gt.f32.partialorder %v816, 0.0
      %vm872 = vcmp.gt.f32.partialorder %v817, 0.0
      %vm873 = vcmp.gt.f32.partialorder %v818, 0.0
      %vm874 = vcmp.gt.f32.partialorder %v819, 0.0
      %vm875 = vcmp.gt.f32.partialorder %v820, 0.0
      %vm876 = vcmp.gt.f32.partialorder %v821, 0.0
      %vm877 = vcmp.gt.f32.partialorder %v822, 0.0
      %vm878 = vcmp.gt.f32.partialorder %v823, 0.0
      %vm879 = vcmp.gt.f32.partialorder %v824, 0.0
      %vm880 = vcmp.gt.f32.partialorder %v825, 0.0
      %vm881 = vcmp.gt.f32.partialorder %v826, 0.0
      %vm882 = vcmp.gt.f32.partialorder %v827, 0.0
      %vm883 = vcmp.gt.f32.partialorder %v828, 0.0
      %vm884 = vcmp.gt.f32.partialorder %v829, 0.0
      %vm885 = vcmp.gt.f32.partialorder %v830, 0.0
      %vm886 = vcmp.gt.f32.partialorder %v831, 0.0
      %vm887 = vcmp.gt.f32.partialorder %v832, 0.0
      %vm888 = vcmp.gt.f32.partialorder %v833, 0.0
      %vm889 = vcmp.gt.f32.partialorder %v834, 0.0
      %vm890 = vcmp.gt.f32.partialorder %v835, 0.0
      %vm891 = vcmp.gt.f32.partialorder %v836, 0.0
      %vm892 = vcmp.gt.f32.partialorder %v837, 0.0
      %vm893 = vcmp.gt.f32.partialorder %v838, 0.0
      %vm894 = vcmp.gt.f32.partialorder %v839, 0.0
      %vm895 = vcmp.gt.f32.partialorder %v840, 0.0
      %vm896 = vcmp.gt.f32.partialorder %v841, 0.0
      %vm897 = vcmp.gt.f32.partialorder %v842, 0.0
      %vm898 = vcmp.gt.f32.partialorder %v843, 0.0
      %vm899 = vcmp.gt.f32.partialorder %v844, 0.0
      %vm900 = vcmp.gt.f32.partialorder %v845, 0.0
      %vm901 = vcmp.gt.f32.partialorder %v846, 0.0
      %vm902 = vcmp.gt.f32.partialorder %v847, 0.0
      %vm903 = vcmp.gt.f32.partialorder %v848, 0.0
      %vm904 = vcmp.gt.f32.partialorder %v849, 0.0
      %vm905 = vcmp.gt.f32.partialorder %v850, 0.0
      %vm906 = vcmp.gt.f32.partialorder %v851, 0.0
      %vm907 = vcmp.gt.f32.partialorder %v852, 0.0
      %vm908 = vcmp.gt.f32.partialorder %v853, 0.0
      %vm909 = vcmp.gt.f32.partialorder %v854, 0.0
      %vm910 = vcmp.gt.f32.partialorder %v855, 0.0
      %vm911 = vcmp.gt.f32.partialorder %v856, 0.0
      %vm912 = vcmp.gt.f32.partialorder %v857, 0.0
      %vm913 = vcmp.gt.f32.partialorder %v858, 0.0
      %vm914 = vcmp.gt.f32.partialorder %v859, 0.0
      %v915 = vmul.f32 %v805, 1.442695
      %v916 = vpow.pop %v915
      %v917 = vmul.f32 %v806, 1.442695
      %v918 = vpow.pop %v917
      %v919 = vmul.f32 %v807, 1.442695
      %v920 = vpow.pop %v919
      %v921 = vmul.f32 %v808, 1.442695
      %v922 = vpow.pop %v921
      %v923 = vmul.f32 %v809, 1.442695
      %v924 = vpow.pop %v923
      %v925 = vmul.f32 %v810, 1.442695
      %v926 = vpow.pop %v925
      %v927 = vmul.f32 %v811, 1.442695
      %v928 = vpow.pop %v927
      %v929 = vmul.f32 %v812, 1.442695
      %v930 = vpow.pop %v929
      %v931 = vmul.f32 %v813, 1.442695
      %v932 = vpow.pop %v931
      %v933 = vmul.f32 %v814, 1.442695
      %v934 = vpow.pop %v933
      %v935 = vmul.f32 %v815, 1.442695
      %v936 = vpow.pop %v935
      %v937 = vmul.f32 %v816, 1.442695
      %v938 = vpow.pop %v937
      %v939 = vmul.f32 %v817, 1.442695
      %v940 = vpow.pop %v939
      %v941 = vmul.f32 %v818, 1.442695
      %v942 = vpow.pop %v941
      %v943 = vmul.f32 %v819, 1.442695
      %v944 = vpow.pop %v943
      %v945 = vmul.f32 %v820, 1.442695
      %v946 = vpow.pop %v945
      %v947 = vmul.f32 %v821, 1.442695
      %v948 = vpow.pop %v947
      %v949 = vmul.f32 %v822, 1.442695
      %v950 = vpow.pop %v949
      %v951 = vmul.f32 %v823, 1.442695
      %v952 = vpow.pop %v951
      %v953 = vmul.f32 %v824, 1.442695
      %v954 = vpow.pop %v953
      %v955 = vmul.f32 %v825, 1.442695
      %v956 = vpow.pop %v955
      %v957 = vmul.f32 %v826, 1.442695
      %v958 = vpow.pop %v957
      %v959 = vmul.f32 %v827, 1.442695
      %v960 = vpow.pop %v959
      %v961 = vmul.f32 %v828, 1.442695
      %v962 = vpow.pop %v961
      %v963 = vmul.f32 %v829, 1.442695
      %v964 = vpow.pop %v963
      %v965 = vmul.f32 %v830, 1.442695
      %v966 = vpow.pop %v965
      %v967 = vmul.f32 %v831, 1.442695
      %v968 = vpow.pop %v967
      %v969 = vmul.f32 %v832, 1.442695
      %v970 = vpow.pop %v969
      %v971 = vmul.f32 %v833, 1.442695
      %v972 = vpow.pop %v971
      %v973 = vmul.f32 %v834, 1.442695
      %v974 = vpow.pop %v973
      %v975 = vmul.f32 %v835, 1.442695
      %v976 = vpow.pop %v975
      %v977 = vmul.f32 %v836, 1.442695
      %v978 = vpow.pop %v977
      %v979 = vmul.f32 %v837, 1.442695
      %v980 = vpow.pop %v979
      %v981 = vmul.f32 %v838, 1.442695
      %v982 = vpow.pop %v981
      %v983 = vmul.f32 %v839, 1.442695
      %v984 = vpow.pop %v983
      %v985 = vmul.f32 %v840, 1.442695
      %v986 = vpow.pop %v985
      %v987 = vmul.f32 %v841, 1.442695
      %v988 = vpow.pop %v987
      %v989 = vmul.f32 %v842, 1.442695
      %v990 = vpow.pop %v989
      %v991 = vmul.f32 %v843, 1.442695
      %v992 = vpow.pop %v991
      %v993 = vmul.f32 %v844, 1.442695
      %v994 = vpow.pop %v993
      %v995 = vmul.f32 %v845, 1.442695
      %v996 = vpow.pop %v995
      %v997 = vmul.f32 %v846, 1.442695
      %v998 = vpow.pop %v997
      %v999 = vmul.f32 %v847, 1.442695
      %v1000 = vpow.pop %v999
      %v1001 = vmul.f32 %v848, 1.442695
      %v1002 = vpow.pop %v1001
      %v1003 = vmul.f32 %v849, 1.442695
      %v1004 = vpow.pop %v1003
      %v1005 = vmul.f32 %v850, 1.442695
      %v1006 = vpow.pop %v1005
      %v1007 = vmul.f32 %v851, 1.442695
      %v1008 = vpow.pop %v1007
      %v1009 = vmul.f32 %v852, 1.442695
      %v1010 = vpow.pop %v1009
      %v1011 = vmul.f32 %v853, 1.442695
      %v1012 = vpow.pop %v1011
      %v1013 = vmul.f32 %v854, 1.442695
      %v1014 = vpow.pop %v1013
      %v1015 = vmul.f32 %v855, 1.442695
      %v1016 = vpow.pop %v1015
      %v1017 = vmul.f32 %v856, 1.442695
      %v1018 = vpow.pop %v1017
      %v1019 = vmul.f32 %v857, 1.442695
      %v1020 = vpow.pop %v1019
      %v1021 = vmul.f32 %v858, 1.442695
      %v1022 = vpow.pop %v1021
      %v1023 = vmul.f32 %v859, 1.442695
      %v1024 = vpow.pop %v1023
      %v1025 = vsub.f32 %v916, 1.0
      %v1026 = vsub.f32 %v918, 1.0
      %v1027 = vsub.f32 %v920, 1.0
      %v1028 = vsub.f32 %v922, 1.0
      %v1029 = vsub.f32 %v924, 1.0
      %v1030 = vsub.f32 %v926, 1.0
      %v1031 = vsub.f32 %v928, 1.0
      %v1032 = vsub.f32 %v930, 1.0
      %v1033 = vsub.f32 %v932, 1.0
      %v1034 = vsub.f32 %v934, 1.0
      %v1035 = vsub.f32 %v936, 1.0
      %v1036 = vsub.f32 %v938, 1.0
      %v1037 = vsub.f32 %v940, 1.0
      %v1038 = vsub.f32 %v942, 1.0
      %v1039 = vsub.f32 %v944, 1.0
      %v1040 = vsub.f32 %v946, 1.0
      %v1041 = vsub.f32 %v948, 1.0
      %v1042 = vsub.f32 %v950, 1.0
      %v1043 = vsub.f32 %v952, 1.0
      %v1044 = vsub.f32 %v954, 1.0
      %v1045 = vsub.f32 %v956, 1.0
      %v1046 = vsub.f32 %v958, 1.0
      %v1047 = vsub.f32 %v960, 1.0
      %v1048 = vsub.f32 %v962, 1.0
      %v1049 = vsub.f32 %v964, 1.0
      %v1050 = vsub.f32 %v966, 1.0
      %v1051 = vsub.f32 %v968, 1.0
      %v1052 = vsub.f32 %v970, 1.0
      %v1053 = vsub.f32 %v972, 1.0
      %v1054 = vsub.f32 %v974, 1.0
      %v1055 = vsub.f32 %v976, 1.0
      %v1056 = vsub.f32 %v978, 1.0
      %v1057 = vsub.f32 %v980, 1.0
      %v1058 = vsub.f32 %v982, 1.0
      %v1059 = vsub.f32 %v984, 1.0
      %v1060 = vsub.f32 %v986, 1.0
      %v1061 = vsub.f32 %v988, 1.0
      %v1062 = vsub.f32 %v990, 1.0
      %v1063 = vsub.f32 %v992, 1.0
      %v1064 = vsub.f32 %v994, 1.0
      %v1065 = vsub.f32 %v996, 1.0
      %v1066 = vsub.f32 %v998, 1.0
      %v1067 = vsub.f32 %v1000, 1.0
      %v1068 = vsub.f32 %v1002, 1.0
      %v1069 = vsub.f32 %v1004, 1.0
      %v1070 = vsub.f32 %v1006, 1.0
      %v1071 = vsub.f32 %v1008, 1.0
      %v1072 = vsub.f32 %v1010, 1.0
      %v1073 = vsub.f32 %v1012, 1.0
      %v1074 = vsub.f32 %v1014, 1.0
      %v1075 = vsub.f32 %v1016, 1.0
      %v1076 = vsub.f32 %v1018, 1.0
      %v1077 = vsub.f32 %v1020, 1.0
      %v1078 = vsub.f32 %v1022, 1.0
      %v1079 = vsub.f32 %v1024, 1.0
      %v1080 = vsel %vm860, %v805, %v1025
      %v1081 = vsel %vm861, %v806, %v1026
      %v1082 = vsel %vm862, %v807, %v1027
      %v1083 = vsel %vm863, %v808, %v1028
      %v1084 = vsel %vm864, %v809, %v1029
      %v1085 = vsel %vm865, %v810, %v1030
      %v1086 = vsel %vm866, %v811, %v1031
      %v1087 = vsel %vm867, %v812, %v1032
      %v1088 = vsel %vm868, %v813, %v1033
      %v1089 = vsel %vm869, %v814, %v1034
      %v1090 = vsel %vm870, %v815, %v1035
      %v1091 = vsel %vm871, %v816, %v1036
      %v1092 = vsel %vm872, %v817, %v1037
      %v1093 = vsel %vm873, %v818, %v1038
      %v1094 = vsel %vm874, %v819, %v1039
      %v1095 = vsel %vm875, %v820, %v1040
      %v1096 = vsel %vm876, %v821, %v1041
      %v1097 = vsel %vm877, %v822, %v1042
      %v1098 = vsel %vm878, %v823, %v1043
      %v1099 = vsel %vm879, %v824, %v1044
      %v1100 = vsel %vm880, %v825, %v1045
      %v1101 = vsel %vm881, %v826, %v1046
      %v1102 = vsel %vm882, %v827, %v1047
      %v1103 = vsel %vm883, %v828, %v1048
      %v1104 = vsel %vm884, %v829, %v1049
      %v1105 = vsel %vm885, %v830, %v1050
      %v1106 = vsel %vm886, %v831, %v1051
      %v1107 = vsel %vm887, %v832, %v1052
      %v1108 = vsel %vm888, %v833, %v1053
      %v1109 = vsel %vm889, %v834, %v1054
      %v1110 = vsel %vm890, %v835, %v1055
      %v1111 = vsel %vm891, %v836, %v1056
      %v1112 = vsel %vm892, %v837, %v1057
      %v1113 = vsel %vm893, %v838, %v1058
      %v1114 = vsel %vm894, %v839, %v1059
      %v1115 = vsel %vm895, %v840, %v1060
      %v1116 = vsel %vm896, %v841, %v1061
      %v1117 = vsel %vm897, %v842, %v1062
      %v1118 = vsel %vm898, %v843, %v1063
      %v1119 = vsel %vm899, %v844, %v1064
      %v1120 = vsel %vm900, %v845, %v1065
      %v1121 = vsel %vm901, %v846, %v1066
      %v1122 = vsel %vm902, %v847, %v1067
      %v1123 = vsel %vm903, %v848, %v1068
      %v1124 = vsel %vm904, %v849, %v1069
      %v1125 = vsel %vm905, %v850, %v1070
      %v1126 = vsel %vm906, %v851, %v1071
      %v1127 = vsel %vm907, %v852, %v1072
      %v1128 = vsel %vm908, %v853, %v1073
      %v1129 = vsel %vm909, %v854, %v1074
      %v1130 = vsel %vm910, %v855, %v1075
      %v1131 = vsel %vm911, %v856, %v1076
      %v1132 = vsel %vm912, %v857, %v1077
      %v1133 = vsel %vm913, %v858, %v1078
      %v1134 = vsel %vm914, %v859, %v1079
      %v1135 = vld [vmem:[%s1] sm:$0xff]
      %v1136 = vld [vmem:[%s1 + $0x8] sm:$0xff]
      %v1137 = vld [vmem:[%s1 + $0x10] sm:$0xff]
      %v1138 = vld [vmem:[%s1 + $0x18] sm:$0xff]
      %v1139 = vld [vmem:[%s1 + $0x20] sm:$0xff]
      %v1140 = vld [vmem:[%s1 + $0x28] sm:$0xff]
      %v1141 = vld [vmem:[%s1 + $0x30] sm:$0xff]
      %v1142 = vld [vmem:[%s1 + $0x38] sm:$0xff]
      %v1143 = vld [vmem:[%s1 + $0x40] sm:$0xff]
      %v1144 = vld [vmem:[%s1 + $0x48] sm:$0xff]
      %v1145 = vld [vmem:[%s1 + $0x50] sm:$0xff]
      %v1146 = vld [vmem:[%s1 + $0x58] sm:$0xff]
      %v1147 = vld [vmem:[%s1 + $0x60] sm:$0xff]
      %v1148 = vld [vmem:[%s1 + $0x68] sm:$0xff]
      %v1149 = vld [vmem:[%s1 + $0x70] sm:$0xff]
      %v1150 = vld [vmem:[%s1 + $0x78] sm:$0xff]
      %v1151 = vld [vmem:[%s1 + $0x80] sm:$0xff]
      %v1152 = vld [vmem:[%s1 + $0x88] sm:$0xff]
      %v1153 = vld [vmem:[%s1 + $0x90] sm:$0xff]
      %v1154 = vld [vmem:[%s1 + $0x98] sm:$0xff]
      %v1155 = vld [vmem:[%s1 + $0xa0] sm:$0xff]
      %v1156 = vld [vmem:[%s1 + $0xa8] sm:$0xff]
      %v1157 = vld [vmem:[%s1 + $0xb0] sm:$0xff]
      %v1158 = vld [vmem:[%s1 + $0xb8] sm:$0xff]
      %v1159 = vld [vmem:[%s1 + $0xc0] sm:$0xff]
      %v1160 = vld [vmem:[%s1 + $0xc8] sm:$0xff]
      %v1161 = vld [vmem:[%s1 + $0xd0] sm:$0xff]
      %v1162 = vld [vmem:[%s1 + $0xd8] sm:$0xff]
      %v1163 = vld [vmem:[%s1 + $0xe0] sm:$0xff]
      %v1164 = vld [vmem:[%s1 + $0xe8] sm:$0xff]
      %v1165 = vld [vmem:[%s1 + $0xf0] sm:$0xff]
      %v1166 = vld [vmem:[%s1 + $0xf8] sm:$0xff]
      %v1167 = vld [vmem:[%s1 + $0x100] sm:$0xff]
      %v1168 = vld [vmem:[%s1 + $0x108] sm:$0xff]
      %v1169 = vld [vmem:[%s1 + $0x110] sm:$0xff]
      %v1170 = vld [vmem:[%s1 + $0x118] sm:$0xff]
      %v1171 = vld [vmem:[%s1 + $0x120] sm:$0xff]
      %v1172 = vld [vmem:[%s1 + $0x128] sm:$0xff]
      %v1173 = vld [vmem:[%s1 + $0x130] sm:$0xff]
      %v1174 = vld [vmem:[%s1 + $0x138] sm:$0xff]
      %v1175 = vld [vmem:[%s1 + $0x140] sm:$0xff]
      %v1176 = vld [vmem:[%s1 + $0x148] sm:$0xff]
      %v1177 = vld [vmem:[%s1 + $0x150] sm:$0xff]
      %v1178 = vld [vmem:[%s1 + $0x158] sm:$0xff]
      %v1179 = vld [vmem:[%s1 + $0x160] sm:$0xff]
      %v1180 = vld [vmem:[%s1 + $0x168] sm:$0xff]
      %v1181 = vld [vmem:[%s1 + $0x170] sm:$0xff]
      %v1182 = vld [vmem:[%s1 + $0x178] sm:$0xff]
      %v1183 = vld [vmem:[%s1 + $0x180] sm:$0xff]
      %v1184 = vld [vmem:[%s1 + $0x188] sm:$0xff]
      %v1185 = vld [vmem:[%s1 + $0x190] sm:$0xff]
      %v1186 = vld [vmem:[%s1 + $0x198] sm:$0xff]
      %v1187 = vld [vmem:[%s1 + $0x1a0] sm:$0xff]
      %v1188 = vld [vmem:[%s1 + $0x1a8] sm:$0xff]
      %v1189 = vld [vmem:[%s1 + $0x1b0] sm:$0xff]
      %1191 = vset.pattern.permute.xlu0 0
      %1192 = vperm.xlu0 %1191, %v1135
      %v1193 = vpop.permute.xlu0 %1192
      %1196 = vset.pattern.permute.xlu0 0
      %1197 = vperm.xlu0 %1196, %v1136
      %v1198 = vpop.permute.xlu0 %1197
      %1201 = vset.pattern.permute.xlu0 0
      %1202 = vperm.xlu0 %1201, %v1137
      %v1203 = vpop.permute.xlu0 %1202
      %1206 = vset.pattern.permute.xlu0 0
      %1207 = vperm.xlu0 %1206, %v1138
      %v1208 = vpop.permute.xlu0 %1207
      %1211 = vset.pattern.permute.xlu0 0
      %1212 = vperm.xlu0 %1211, %v1139
      %v1213 = vpop.permute.xlu0 %1212
      %1216 = vset.pattern.permute.xlu0 0
      %1217 = vperm.xlu0 %1216, %v1140
      %v1218 = vpop.permute.xlu0 %1217
      %1221 = vset.pattern.permute.xlu0 0
      %1222 = vperm.xlu0 %1221, %v1141
      %v1223 = vpop.permute.xlu0 %1222
      %1226 = vset.pattern.permute.xlu0 0
      %1227 = vperm.xlu0 %1226, %v1142
      %v1228 = vpop.permute.xlu0 %1227
      %1231 = vset.pattern.permute.xlu0 0
      %1232 = vperm.xlu0 %1231, %v1143
      %v1233 = vpop.permute.xlu0 %1232
      %1236 = vset.pattern.permute.xlu0 0
      %1237 = vperm.xlu0 %1236, %v1144
      %v1238 = vpop.permute.xlu0 %1237
      %1241 = vset.pattern.permute.xlu0 0
      %1242 = vperm.xlu0 %1241, %v1145
      %v1243 = vpop.permute.xlu0 %1242
      %1246 = vset.pattern.permute.xlu0 0
      %1247 = vperm.xlu0 %1246, %v1146
      %v1248 = vpop.permute.xlu0 %1247
      %1251 = vset.pattern.permute.xlu0 0
      %1252 = vperm.xlu0 %1251, %v1147
      %v1253 = vpop.permute.xlu0 %1252
      %1256 = vset.pattern.permute.xlu0 0
      %1257 = vperm.xlu0 %1256, %v1148
      %v1258 = vpop.permute.xlu0 %1257
      %1261 = vset.pattern.permute.xlu0 0
      %1262 = vperm.xlu0 %1261, %v1149
      %v1263 = vpop.permute.xlu0 %1262
      %1266 = vset.pattern.permute.xlu0 0
      %1267 = vperm.xlu0 %1266, %v1150
      %v1268 = vpop.permute.xlu0 %1267
      %1271 = vset.pattern.permute.xlu0 0
      %1272 = vperm.xlu0 %1271, %v1151
      %v1273 = vpop.permute.xlu0 %1272
      %1276 = vset.pattern.permute.xlu0 0
      %1277 = vperm.xlu0 %1276, %v1152
      %v1278 = vpop.permute.xlu0 %1277
      %1281 = vset.pattern.permute.xlu0 0
      %1282 = vperm.xlu0 %1281, %v1153
      %v1283 = vpop.permute.xlu0 %1282
      %1286 = vset.pattern.permute.xlu0 0
      %1287 = vperm.xlu0 %1286, %v1154
      %v1288 = vpop.permute.xlu0 %1287
      %1291 = vset.pattern.permute.xlu0 0
      %1292 = vperm.xlu0 %1291, %v1155
      %v1293 = vpop.permute.xlu0 %1292
      %1296 = vset.pattern.permute.xlu0 0
      %1297 = vperm.xlu0 %1296, %v1156
      %v1298 = vpop.permute.xlu0 %1297
      %1301 = vset.pattern.permute.xlu0 0
      %1302 = vperm.xlu0 %1301, %v1157
      %v1303 = vpop.permute.xlu0 %1302
      %1306 = vset.pattern.permute.xlu0 0
      %1307 = vperm.xlu0 %1306, %v1158
      %v1308 = vpop.permute.xlu0 %1307
      %1311 = vset.pattern.permute.xlu0 0
      %1312 = vperm.xlu0 %1311, %v1159
      %v1313 = vpop.permute.xlu0 %1312
      %1316 = vset.pattern.permute.xlu0 0
      %1317 = vperm.xlu0 %1316, %v1160
      %v1318 = vpop.permute.xlu0 %1317
      %1321 = vset.pattern.permute.xlu0 0
      %1322 = vperm.xlu0 %1321, %v1161
      %v1323 = vpop.permute.xlu0 %1322
      %1326 = vset.pattern.permute.xlu0 0
      %1327 = vperm.xlu0 %1326, %v1162
      %v1328 = vpop.permute.xlu0 %1327
      %1331 = vset.pattern.permute.xlu0 0
      %1332 = vperm.xlu0 %1331, %v1163
      %v1333 = vpop.permute.xlu0 %1332
      %1336 = vset.pattern.permute.xlu0 0
      %1337 = vperm.xlu0 %1336, %v1164
      %v1338 = vpop.permute.xlu0 %1337
      %1341 = vset.pattern.permute.xlu0 0
      %1342 = vperm.xlu0 %1341, %v1165
      %v1343 = vpop.permute.xlu0 %1342
      %1346 = vset.pattern.permute.xlu0 0
      %1347 = vperm.xlu0 %1346, %v1166
      %v1348 = vpop.permute.xlu0 %1347
      %1351 = vset.pattern.permute.xlu0 0
      %1352 = vperm.xlu0 %1351, %v1167
      %v1353 = vpop.permute.xlu0 %1352
      %1356 = vset.pattern.permute.xlu0 0
      %1357 = vperm.xlu0 %1356, %v1168
      %v1358 = vpop.permute.xlu0 %1357
      %1361 = vset.pattern.permute.xlu0 0
      %1362 = vperm.xlu0 %1361, %v1169
      %v1363 = vpop.permute.xlu0 %1362
      %1366 = vset.pattern.permute.xlu0 0
      %1367 = vperm.xlu0 %1366, %v1170
      %v1368 = vpop.permute.xlu0 %1367
      %1371 = vset.pattern.permute.xlu0 0
      %1372 = vperm.xlu0 %1371, %v1171
      %v1373 = vpop.permute.xlu0 %1372
      %1376 = vset.pattern.permute.xlu0 0
      %1377 = vperm.xlu0 %1376, %v1172
      %v1378 = vpop.permute.xlu0 %1377
      %1381 = vset.pattern.permute.xlu0 0
      %1382 = vperm.xlu0 %1381, %v1173
      %v1383 = vpop.permute.xlu0 %1382
      %1386 = vset.pattern.permute.xlu0 0
      %1387 = vperm.xlu0 %1386, %v1174
      %v1388 = vpop.permute.xlu0 %1387
      %1391 = vset.pattern.permute.xlu0 0
      %1392 = vperm.xlu0 %1391, %v1175
      %v1393 = vpop.permute.xlu0 %1392
      %1396 = vset.pattern.permute.xlu0 0
      %1397 = vperm.xlu0 %1396, %v1176
      %v1398 = vpop.permute.xlu0 %1397
      %1401 = vset.pattern.permute.xlu0 0
      %1402 = vperm.xlu0 %1401, %v1177
      %v1403 = vpop.permute.xlu0 %1402
      %1406 = vset.pattern.permute.xlu0 0
      %1407 = vperm.xlu0 %1406, %v1178
      %v1408 = vpop.permute.xlu0 %1407
      %1411 = vset.pattern.permute.xlu0 0
      %1412 = vperm.xlu0 %1411, %v1179
      %v1413 = vpop.permute.xlu0 %1412
      %1416 = vset.pattern.permute.xlu0 0
      %1417 = vperm.xlu0 %1416, %v1180
      %v1418 = vpop.permute.xlu0 %1417
      %1421 = vset.pattern.permute.xlu0 0
      %1422 = vperm.xlu0 %1421, %v1181
      %v1423 = vpop.permute.xlu0 %1422
      %1426 = vset.pattern.permute.xlu0 0
      %1427 = vperm.xlu0 %1426, %v1182
      %v1428 = vpop.permute.xlu0 %1427
      %1431 = vset.pattern.permute.xlu0 0
      %1432 = vperm.xlu0 %1431, %v1183
      %v1433 = vpop.permute.xlu0 %1432
      %1436 = vset.pattern.permute.xlu0 0
      %1437 = vperm.xlu0 %1436, %v1184
      %v1438 = vpop.permute.xlu0 %1437
      %1441 = vset.pattern.permute.xlu0 0
      %1442 = vperm.xlu0 %1441, %v1185
      %v1443 = vpop.permute.xlu0 %1442
      %1446 = vset.pattern.permute.xlu0 0
      %1447 = vperm.xlu0 %1446, %v1186
      %v1448 = vpop.permute.xlu0 %1447
      %1451 = vset.pattern.permute.xlu0 0
      %1452 = vperm.xlu0 %1451, %v1187
      %v1453 = vpop.permute.xlu0 %1452
      %1456 = vset.pattern.permute.xlu0 0
      %1457 = vperm.xlu0 %1456, %v1188
      %v1458 = vpop.permute.xlu0 %1457
      %1461 = vset.pattern.permute.xlu0 0
      %1462 = vperm.xlu0 %1461, %v1189
      %v1463 = vpop.permute.xlu0 %1462
      %v1465 = vmul.f32 %v1080, %v1193
      %v1466 = vmul.f32 %v1081, %v1198
      %v1467 = vmul.f32 %v1082, %v1203
      %v1468 = vmul.f32 %v1083, %v1208
      %v1469 = vmul.f32 %v1084, %v1213
      %v1470 = vmul.f32 %v1085, %v1218
      %v1471 = vmul.f32 %v1086, %v1223
      %v1472 = vmul.f32 %v1087, %v1228
      %v1473 = vmul.f32 %v1088, %v1233
      %v1474 = vmul.f32 %v1089, %v1238
      %v1475 = vmul.f32 %v1090, %v1243
      %v1476 = vmul.f32 %v1091, %v1248
      %v1477 = vmul.f32 %v1092, %v1253
      %v1478 = vmul.f32 %v1093, %v1258
      %v1479 = vmul.f32 %v1094, %v1263
      %v1480 = vmul.f32 %v1095, %v1268
      %v1481 = vmul.f32 %v1096, %v1273
      %v1482 = vmul.f32 %v1097, %v1278
      %v1483 = vmul.f32 %v1098, %v1283
      %v1484 = vmul.f32 %v1099, %v1288
      %v1485 = vmul.f32 %v1100, %v1293
      %v1486 = vmul.f32 %v1101, %v1298
      %v1487 = vmul.f32 %v1102, %v1303
      %v1488 = vmul.f32 %v1103, %v1308
      %v1489 = vmul.f32 %v1104, %v1313
      %v1490 = vmul.f32 %v1105, %v1318
      %v1491 = vmul.f32 %v1106, %v1323
      %v1492 = vmul.f32 %v1107, %v1328
      %v1493 = vmul.f32 %v1108, %v1333
      %v1494 = vmul.f32 %v1109, %v1338
      %v1495 = vmul.f32 %v1110, %v1343
      %v1496 = vmul.f32 %v1111, %v1348
      %v1497 = vmul.f32 %v1112, %v1353
      %v1498 = vmul.f32 %v1113, %v1358
      %v1499 = vmul.f32 %v1114, %v1363
      %v1500 = vmul.f32 %v1115, %v1368
      %v1501 = vmul.f32 %v1116, %v1373
      %v1502 = vmul.f32 %v1117, %v1378
      %v1503 = vmul.f32 %v1118, %v1383
      %v1504 = vmul.f32 %v1119, %v1388
      %v1505 = vmul.f32 %v1120, %v1393
      %v1506 = vmul.f32 %v1121, %v1398
      %v1507 = vmul.f32 %v1122, %v1403
      %v1508 = vmul.f32 %v1123, %v1408
      %v1509 = vmul.f32 %v1124, %v1413
      %v1510 = vmul.f32 %v1125, %v1418
      %v1511 = vmul.f32 %v1126, %v1423
      %v1512 = vmul.f32 %v1127, %v1428
      %v1513 = vmul.f32 %v1128, %v1433
      %v1514 = vmul.f32 %v1129, %v1438
      %v1515 = vmul.f32 %v1130, %v1443
      %v1516 = vmul.f32 %v1131, %v1448
      %v1517 = vmul.f32 %v1132, %v1453
      %v1518 = vmul.f32 %v1133, %v1458
      %v1519 = vmul.f32 %v1134, %v1463
      %v1520 = vpack.c.bf16 %v1465, %v1465
      %v1521 = vpack.c.bf16 %v1466, %v1466
      %v1522 = vpack.c.bf16 %v1467, %v1467
      %v1523 = vpack.c.bf16 %v1468, %v1468
      %v1524 = vpack.c.bf16 %v1469, %v1469
      %v1525 = vpack.c.bf16 %v1470, %v1470
      %v1526 = vpack.c.bf16 %v1471, %v1471
      %v1527 = vpack.c.bf16 %v1472, %v1472
      %v1528 = vpack.c.bf16 %v1473, %v1473
      %v1529 = vpack.c.bf16 %v1474, %v1474
      %v1530 = vpack.c.bf16 %v1475, %v1475
      %v1531 = vpack.c.bf16 %v1476, %v1476
      %v1532 = vpack.c.bf16 %v1477, %v1477
      %v1533 = vpack.c.bf16 %v1478, %v1478
      %v1534 = vpack.c.bf16 %v1479, %v1479
      %v1535 = vpack.c.bf16 %v1480, %v1480
      %v1536 = vpack.c.bf16 %v1481, %v1481
      %v1537 = vpack.c.bf16 %v1482, %v1482
      %v1538 = vpack.c.bf16 %v1483, %v1483
      %v1539 = vpack.c.bf16 %v1484, %v1484
      %v1540 = vpack.c.bf16 %v1485, %v1485
      %v1541 = vpack.c.bf16 %v1486, %v1486
      %v1542 = vpack.c.bf16 %v1487, %v1487
      %v1543 = vpack.c.bf16 %v1488, %v1488
      %v1544 = vpack.c.bf16 %v1489, %v1489
      %v1545 = vpack.c.bf16 %v1490, %v1490
      %v1546 = vpack.c.bf16 %v1491, %v1491
      %v1547 = vpack.c.bf16 %v1492, %v1492
      %v1548 = vpack.c.bf16 %v1493, %v1493
      %v1549 = vpack.c.bf16 %v1494, %v1494
      %v1550 = vpack.c.bf16 %v1495, %v1495
      %v1551 = vpack.c.bf16 %v1496, %v1496
      %v1552 = vpack.c.bf16 %v1497, %v1497
      %v1553 = vpack.c.bf16 %v1498, %v1498
      %v1554 = vpack.c.bf16 %v1499, %v1499
      %v1555 = vpack.c.bf16 %v1500, %v1500
      %v1556 = vpack.c.bf16 %v1501, %v1501
      %v1557 = vpack.c.bf16 %v1502, %v1502
      %v1558 = vpack.c.bf16 %v1503, %v1503
      %v1559 = vpack.c.bf16 %v1504, %v1504
      %v1560 = vpack.c.bf16 %v1505, %v1505
      %v1561 = vpack.c.bf16 %v1506, %v1506
      %v1562 = vpack.c.bf16 %v1507, %v1507
      %v1563 = vpack.c.bf16 %v1508, %v1508
      %v1564 = vpack.c.bf16 %v1509, %v1509
      %v1565 = vpack.c.bf16 %v1510, %v1510
      %v1566 = vpack.c.bf16 %v1511, %v1511
      %v1567 = vpack.c.bf16 %v1512, %v1512
      %1568 = vst [vmem:[#allocation2] sm:$0xf] %v1520
      %1569 = vst [vmem:[#allocation2 + $0x24] sm:$0xf] %v1521
      %1570 = vst [vmem:[#allocation2 + $0x48] sm:$0xf] %v1522
      %1571 = vst [vmem:[#allocation2 + $0x6c] sm:$0xf] %v1523
      %1572 = vst [vmem:[#allocation2 + $0x90] sm:$0xf] %v1524
      %1573 = vst [vmem:[#allocation2 + $0xb4] sm:$0xf] %v1525
      %1574 = vst [vmem:[#allocation2 + $0xd8] sm:$0xf] %v1526
      %1575 = vst [vmem:[#allocation2 + $0xfc] sm:$0xf] %v1527
      %1576 = vst [vmem:[#allocation2 + $0x120] sm:$0xf] %v1528
      %1577 = vst [vmem:[#allocation2 + $0x144] sm:$0xf] %v1529
      %1578 = vst [vmem:[#allocation2 + $0x168] sm:$0xf] %v1530
      %1579 = vst [vmem:[#allocation2 + $0x18c] sm:$0xf] %v1531
      %1580 = vst [vmem:[#allocation2 + $0x1b0] sm:$0xf] %v1532
      %1581 = vst [vmem:[#allocation2 + $0x1d4] sm:$0xf] %v1533
      %1582 = vst [vmem:[#allocation2 + $0x1f8] sm:$0xf] %v1534
      %1583 = vst [vmem:[#allocation2 + $0x21c] sm:$0xf] %v1535
      %1584 = vst [vmem:[#allocation2 + $0x240] sm:$0xf] %v1536
      %1585 = vst [vmem:[#allocation2 + $0x264] sm:$0xf] %v1537
      %1586 = vst [vmem:[#allocation2 + $0x288] sm:$0xf] %v1538
      %1587 = vst [vmem:[#allocation2 + $0x2ac] sm:$0xf] %v1539
      %1588 = vst [vmem:[#allocation2 + $0x2d0] sm:$0xf] %v1540
      %1589 = vst [vmem:[#allocation2 + $0x2f4] sm:$0xf] %v1541
      %1590 = vst [vmem:[#allocation2 + $0x318] sm:$0xf] %v1542
      %1591 = vst [vmem:[#allocation2 + $0x33c] sm:$0xf] %v1543
      %1592 = vst [vmem:[#allocation2 + $0x360] sm:$0xf] %v1544
      %1593 = vst [vmem:[#allocation2 + $0x384] sm:$0xf] %v1545
      %1594 = vst [vmem:[#allocation2 + $0x3a8] sm:$0xf] %v1546
      %1595 = vst [vmem:[#allocation2 + $0x3cc] sm:$0xf] %v1547
      %1596 = vst [vmem:[#allocation2 + $0x3f0] sm:$0xf] %v1548
      %1597 = vst [vmem:[#allocation2 + $0x414] sm:$0xf] %v1549
      %1598 = vst [vmem:[#allocation2 + $0x438] sm:$0xf] %v1550
      %1599 = vst [vmem:[#allocation2 + $0x45c] sm:$0xf] %v1551
      %1600 = vst [vmem:[#allocation2 + $0x480] sm:$0xf] %v1552
      %1601 = vst [vmem:[#allocation2 + $0x4a4] sm:$0xf] %v1553
      %1602 = vst [vmem:[#allocation2 + $0x4c8] sm:$0xf] %v1554
      %1603 = vst [vmem:[#allocation2 + $0x4ec] sm:$0xf] %v1555
      %1604 = vst [vmem:[#allocation2 + $0x510] sm:$0xf] %v1556
      %1605 = vst [vmem:[#allocation2 + $0x534] sm:$0xf] %v1557
      %1606 = vst [vmem:[#allocation2 + $0x558] sm:$0xf] %v1558
      %1607 = vst [vmem:[#allocation2 + $0x57c] sm:$0xf] %v1559
      %1608 = vst [vmem:[#allocation2 + $0x5a0] sm:$0xf] %v1560
      %1609 = vst [vmem:[#allocation2 + $0x5c4] sm:$0xf] %v1561
      %1610 = vst [vmem:[#allocation2 + $0x5e8] sm:$0xf] %v1562
      %1611 = vst [vmem:[#allocation2 + $0x60c] sm:$0xf] %v1563
      %1612 = vst [vmem:[#allocation2 + $0x630] sm:$0xf] %v1564
      %1613 = vst [vmem:[#allocation2 + $0x654] sm:$0xf] %v1565
      %1614 = vst [vmem:[#allocation2 + $0x678] sm:$0xf] %v1566
      %1615 = vst [vmem:[#allocation2 + $0x69c] sm:$0xf] %v1567
      %v1616 = vpack.c.bf16 %v1513, %v1513
      %vm1617 = vsmask.f32 3328
      %vm1618 = vsmask.f32 7440
      %vm1619 = vmor %vm1617, %vm1618
      %v1621 = vshrl.u32 %v1520, 16
      %v1623 = vrot.slane %v1621, 4
      %v1624 = vshll.u32 %v1520, 16
      %v1626 = vrot.slane %v1624, 5
      %v1627 = vor.u32 %v1623, %v1626
      %v1628 = vrot.slane %v1627, 4
      %v1630 = vshll.u32 %v1521, 16
      %v1632 = vrot.slane %v1630, 5
      %v1633 = vsel %vm1619, %v1628, %v1632
      %v1634 = vshrl.u32 %v1521, 16
      %v1636 = vrot.slane %v1634, 4
      %v1637 = vor.u32 %v1636, %v1632
      %v1638 = vrot.slane %v1637, 4
      %v1640 = vshll.u32 %v1522, 16
      %v1642 = vrot.slane %v1640, 5
      %v1643 = vsel %vm1619, %v1638, %v1642
      %v1644 = vshrl.u32 %v1522, 16
      %v1646 = vrot.slane %v1644, 4
      %v1647 = vor.u32 %v1646, %v1642
      %v1648 = vrot.slane %v1647, 4
      %v1650 = vshll.u32 %v1523, 16
      %v1652 = vrot.slane %v1650, 5
      %v1653 = vsel %vm1619, %v1648, %v1652
      %v1654 = vshrl.u32 %v1523, 16
      %v1656 = vrot.slane %v1654, 4
      %v1657 = vor.u32 %v1656, %v1652
      %v1658 = vrot.slane %v1657, 4
      %v1660 = vshll.u32 %v1524, 16
      %v1662 = vrot.slane %v1660, 5
      %v1663 = vsel %vm1619, %v1658, %v1662
      %v1664 = vshrl.u32 %v1524, 16
      %v1666 = vrot.slane %v1664, 4
      %v1667 = vor.u32 %v1666, %v1662
      %v1668 = vrot.slane %v1667, 4
      %v1670 = vshll.u32 %v1525, 16
      %v1672 = vrot.slane %v1670, 5
      %v1673 = vsel %vm1619, %v1668, %v1672
      %v1674 = vshrl.u32 %v1525, 16
      %v1676 = vrot.slane %v1674, 4
      %v1677 = vor.u32 %v1676, %v1672
      %v1678 = vrot.slane %v1677, 4
      %v1680 = vshll.u32 %v1526, 16
      %v1682 = vrot.slane %v1680, 5
      %v1683 = vsel %vm1619, %v1678, %v1682
      %v1684 = vshrl.u32 %v1526, 16
      %v1686 = vrot.slane %v1684, 4
      %v1687 = vor.u32 %v1686, %v1682
      %v1688 = vrot.slane %v1687, 4
      %v1690 = vshll.u32 %v1527, 16
      %v1692 = vrot.slane %v1690, 5
      %v1693 = vsel %vm1619, %v1688, %v1692
      %v1694 = vshrl.u32 %v1527, 16
      %v1696 = vrot.slane %v1694, 4
      %v1697 = vor.u32 %v1696, %v1692
      %v1698 = vrot.slane %v1697, 4
      %v1700 = vshll.u32 %v1528, 16
      %v1702 = vrot.slane %v1700, 5
      %v1703 = vsel %vm1619, %v1698, %v1702
      %v1704 = vshrl.u32 %v1528, 16
      %v1706 = vrot.slane %v1704, 4
      %v1707 = vor.u32 %v1706, %v1702
      %v1708 = vrot.slane %v1707, 4
      %v1710 = vshll.u32 %v1529, 16
      %v1712 = vrot.slane %v1710, 5
      %v1713 = vsel %vm1619, %v1708, %v1712
      %v1714 = vshrl.u32 %v1529, 16
      %v1716 = vrot.slane %v1714, 4
      %v1717 = vor.u32 %v1716, %v1712
      %v1718 = vrot.slane %v1717, 4
      %v1720 = vshll.u32 %v1530, 16
      %v1722 = vrot.slane %v1720, 5
      %v1723 = vsel %vm1619, %v1718, %v1722
      %v1724 = vshrl.u32 %v1530, 16
      %v1726 = vrot.slane %v1724, 4
      %v1727 = vor.u32 %v1726, %v1722
      %v1728 = vrot.slane %v1727, 4
      %v1730 = vshll.u32 %v1531, 16
      %v1732 = vrot.slane %v1730, 5
      %v1733 = vsel %vm1619, %v1728, %v1732
      %v1734 = vshrl.u32 %v1531, 16
      %v1736 = vrot.slane %v1734, 4
      %v1737 = vor.u32 %v1736, %v1732
      %v1738 = vrot.slane %v1737, 4
      %v1740 = vshll.u32 %v1532, 16
      %v1742 = vrot.slane %v1740, 5
      %v1743 = vsel %vm1619, %v1738, %v1742
      %v1744 = vshrl.u32 %v1532, 16
      %v1746 = vrot.slane %v1744, 4
      %v1747 = vor.u32 %v1746, %v1742
      %v1748 = vrot.slane %v1747, 4
      %v1750 = vshll.u32 %v1533, 16
      %v1752 = vrot.slane %v1750, 5
      %v1753 = vsel %vm1619, %v1748, %v1752
      %v1754 = vshrl.u32 %v1533, 16
      %v1756 = vrot.slane %v1754, 4
      %v1757 = vor.u32 %v1756, %v1752
      %v1758 = vrot.slane %v1757, 4
      %v1760 = vshll.u32 %v1534, 16
      %v1762 = vrot.slane %v1760, 5
      %v1763 = vsel %vm1619, %v1758, %v1762
      %v1764 = vshrl.u32 %v1534, 16
      %v1766 = vrot.slane %v1764, 4
      %v1767 = vor.u32 %v1766, %v1762
      %v1768 = vrot.slane %v1767, 4
      %v1770 = vshll.u32 %v1535, 16
      %v1772 = vrot.slane %v1770, 5
      %v1773 = vsel %vm1619, %v1768, %v1772
      %v1774 = vshrl.u32 %v1535, 16
      %v1776 = vrot.slane %v1774, 4
      %v1777 = vor.u32 %v1776, %v1772
      %v1778 = vrot.slane %v1777, 4
      %v1780 = vshll.u32 %v1536, 16
      %v1782 = vrot.slane %v1780, 5
      %v1783 = vsel %vm1619, %v1778, %v1782
      %v1784 = vshrl.u32 %v1536, 16
      %v1786 = vrot.slane %v1784, 4
      %v1787 = vor.u32 %v1786, %v1782
      %v1788 = vrot.slane %v1787, 4
      %v1790 = vshll.u32 %v1537, 16
      %v1792 = vrot.slane %v1790, 5
      %v1793 = vsel %vm1619, %v1788, %v1792
      %v1794 = vshrl.u32 %v1537, 16
      %v1796 = vrot.slane %v1794, 4
      %v1797 = vor.u32 %v1796, %v1792
      %v1798 = vrot.slane %v1797, 4
      %v1800 = vshll.u32 %v1538, 16
      %v1802 = vrot.slane %v1800, 5
      %v1803 = vsel %vm1619, %v1798, %v1802
      %v1804 = vshrl.u32 %v1538, 16
      %v1806 = vrot.slane %v1804, 4
      %v1807 = vor.u32 %v1806, %v1802
      %v1808 = vrot.slane %v1807, 4
      %v1810 = vshll.u32 %v1539, 16
      %v1812 = vrot.slane %v1810, 5
      %v1813 = vsel %vm1619, %v1808, %v1812
      %v1814 = vshrl.u32 %v1539, 16
      %v1816 = vrot.slane %v1814, 4
      %v1817 = vor.u32 %v1816, %v1812
      %v1818 = vrot.slane %v1817, 4
      %v1820 = vshll.u32 %v1540, 16
      %v1822 = vrot.slane %v1820, 5
      %v1823 = vsel %vm1619, %v1818, %v1822
      %v1824 = vshrl.u32 %v1540, 16
      %v1826 = vrot.slane %v1824, 4
      %v1827 = vor.u32 %v1826, %v1822
      %v1828 = vrot.slane %v1827, 4
      %v1830 = vshll.u32 %v1541, 16
      %v1832 = vrot.slane %v1830, 5
      %v1833 = vsel %vm1619, %v1828, %v1832
      %v1834 = vshrl.u32 %v1541, 16
      %v1836 = vrot.slane %v1834, 4
      %v1837 = vor.u32 %v1836, %v1832
      %v1838 = vrot.slane %v1837, 4
      %v1840 = vshll.u32 %v1542, 16
      %v1842 = vrot.slane %v1840, 5
      %v1843 = vsel %vm1619, %v1838, %v1842
      %v1844 = vshrl.u32 %v1542, 16
      %v1846 = vrot.slane %v1844, 4
      %v1847 = vor.u32 %v1846, %v1842
      %v1848 = vrot.slane %v1847, 4
      %v1850 = vshll.u32 %v1543, 16
      %v1852 = vrot.slane %v1850, 5
      %v1853 = vsel %vm1619, %v1848, %v1852
      %v1854 = vshrl.u32 %v1543, 16
      %v1856 = vrot.slane %v1854, 4
      %v1857 = vor.u32 %v1856, %v1852
      %v1858 = vrot.slane %v1857, 4
      %v1860 = vshll.u32 %v1544, 16
      %v1862 = vrot.slane %v1860, 5
      %v1863 = vsel %vm1619, %v1858, %v1862
      %v1864 = vshrl.u32 %v1544, 16
      %v1866 = vrot.slane %v1864, 4
      %v1867 = vor.u32 %v1866, %v1862
      %v1868 = vrot.slane %v1867, 4
      %v1870 = vshll.u32 %v1545, 16
      %v1872 = vrot.slane %v1870, 5
      %v1873 = vsel %vm1619, %v1868, %v1872
      %v1874 = vshrl.u32 %v1545, 16
      %v1876 = vrot.slane %v1874, 4
      %v1877 = vor.u32 %v1876, %v1872
      %v1878 = vrot.slane %v1877, 4
      %v1880 = vshll.u32 %v1546, 16
      %v1882 = vrot.slane %v1880, 5
      %v1883 = vsel %vm1619, %v1878, %v1882
      %v1884 = vshrl.u32 %v1546, 16
      %v1886 = vrot.slane %v1884, 4
      %v1887 = vor.u32 %v1886, %v1882
      %v1888 = vrot.slane %v1887, 4
      %v1890 = vshll.u32 %v1547, 16
      %v1892 = vrot.slane %v1890, 5
      %v1893 = vsel %vm1619, %v1888, %v1892
      %v1894 = vshrl.u32 %v1547, 16
      %v1896 = vrot.slane %v1894, 4
      %v1897 = vor.u32 %v1896, %v1892
      %v1898 = vrot.slane %v1897, 4
      %v1900 = vshll.u32 %v1548, 16
      %v1902 = vrot.slane %v1900, 5
      %v1903 = vsel %vm1619, %v1898, %v1902
      %v1904 = vshrl.u32 %v1548, 16
      %v1906 = vrot.slane %v1904, 4
      %v1907 = vor.u32 %v1906, %v1902
      %v1908 = vrot.slane %v1907, 4
      %v1910 = vshll.u32 %v1549, 16
      %v1912 = vrot.slane %v1910, 5
      %v1913 = vsel %vm1619, %v1908, %v1912
      %v1914 = vshrl.u32 %v1549, 16
      %v1916 = vrot.slane %v1914, 4
      %v1917 = vor.u32 %v1916, %v1912
      %v1918 = vrot.slane %v1917, 4
      %v1920 = vshll.u32 %v1550, 16
      %v1922 = vrot.slane %v1920, 5
      %v1923 = vsel %vm1619, %v1918, %v1922
      %v1924 = vshrl.u32 %v1550, 16
      %v1926 = vrot.slane %v1924, 4
      %v1927 = vor.u32 %v1926, %v1922
      %v1928 = vrot.slane %v1927, 4
      %v1930 = vshll.u32 %v1551, 16
      %v1932 = vrot.slane %v1930, 5
      %v1933 = vsel %vm1619, %v1928, %v1932
      %v1934 = vshrl.u32 %v1551, 16
      %v1936 = vrot.slane %v1934, 4
      %v1937 = vor.u32 %v1936, %v1932
      %v1938 = vrot.slane %v1937, 4
      %v1940 = vshll.u32 %v1552, 16
      %v1942 = vrot.slane %v1940, 5
      %v1943 = vsel %vm1619, %v1938, %v1942
      %v1944 = vshrl.u32 %v1552, 16
      %v1946 = vrot.slane %v1944, 4
      %v1947 = vor.u32 %v1946, %v1942
      %v1948 = vrot.slane %v1947, 4
      %v1950 = vshll.u32 %v1553, 16
      %v1952 = vrot.slane %v1950, 5
      %v1953 = vsel %vm1619, %v1948, %v1952
      %v1954 = vshrl.u32 %v1553, 16
      %v1956 = vrot.slane %v1954, 4
      %v1957 = vor.u32 %v1956, %v1952
      %v1958 = vrot.slane %v1957, 4
      %v1960 = vshll.u32 %v1554, 16
      %v1962 = vrot.slane %v1960, 5
      %v1963 = vsel %vm1619, %v1958, %v1962
      %v1964 = vshrl.u32 %v1554, 16
      %v1966 = vrot.slane %v1964, 4
      %v1967 = vor.u32 %v1966, %v1962
      %v1968 = vrot.slane %v1967, 4
      %v1970 = vshll.u32 %v1555, 16
      %v1972 = vrot.slane %v1970, 5
      %v1973 = vsel %vm1619, %v1968, %v1972
      %v1974 = vshrl.u32 %v1555, 16
      %v1976 = vrot.slane %v1974, 4
      %v1977 = vor.u32 %v1976, %v1972
      %v1978 = vrot.slane %v1977, 4
      %v1980 = vshll.u32 %v1556, 16
      %v1982 = vrot.slane %v1980, 5
      %v1983 = vsel %vm1619, %v1978, %v1982
      %v1984 = vshrl.u32 %v1556, 16
      %v1986 = vrot.slane %v1984, 4
      %v1987 = vor.u32 %v1986, %v1982
      %v1988 = vrot.slane %v1987, 4
      %v1990 = vshll.u32 %v1557, 16
      %v1992 = vrot.slane %v1990, 5
      %v1993 = vsel %vm1619, %v1988, %v1992
      %v1994 = vshrl.u32 %v1557, 16
      %v1996 = vrot.slane %v1994, 4
      %v1997 = vor.u32 %v1996, %v1992
      %v1998 = vrot.slane %v1997, 4
      %v2000 = vshll.u32 %v1558, 16
      %v2002 = vrot.slane %v2000, 5
      %v2003 = vsel %vm1619, %v1998, %v2002
      %v2004 = vshrl.u32 %v1558, 16
      %v2006 = vrot.slane %v2004, 4
      %v2007 = vor.u32 %v2006, %v2002
      %v2008 = vrot.slane %v2007, 4
      %v2010 = vshll.u32 %v1559, 16
      %v2012 = vrot.slane %v2010, 5
      %v2013 = vsel %vm1619, %v2008, %v2012
      %v2014 = vshrl.u32 %v1559, 16
      %v2016 = vrot.slane %v2014, 4
      %v2017 = vor.u32 %v2016, %v2012
      %v2018 = vrot.slane %v2017, 4
      %v2020 = vshll.u32 %v1560, 16
      %v2022 = vrot.slane %v2020, 5
      %v2023 = vsel %vm1619, %v2018, %v2022
      %v2024 = vshrl.u32 %v1560, 16
      %v2026 = vrot.slane %v2024, 4
      %v2027 = vor.u32 %v2026, %v2022
      %v2028 = vrot.slane %v2027, 4
      %v2030 = vshll.u32 %v1561, 16
      %v2032 = vrot.slane %v2030, 5
      %v2033 = vsel %vm1619, %v2028, %v2032
      %v2034 = vshrl.u32 %v1561, 16
      %v2036 = vrot.slane %v2034, 4
      %v2037 = vor.u32 %v2036, %v2032
      %v2038 = vrot.slane %v2037, 4
      %v2040 = vshll.u32 %v1562, 16
      %v2042 = vrot.slane %v2040, 5
      %v2043 = vsel %vm1619, %v2038, %v2042
      %v2044 = vshrl.u32 %v1562, 16
      %v2046 = vrot.slane %v2044, 4
      %v2047 = vor.u32 %v2046, %v2042
      %v2048 = vrot.slane %v2047, 4
      %v2050 = vshll.u32 %v1563, 16
      %v2052 = vrot.slane %v2050, 5
      %v2053 = vsel %vm1619, %v2048, %v2052
      %v2054 = vshrl.u32 %v1563, 16
      %v2056 = vrot.slane %v2054, 4
      %v2057 = vor.u32 %v2056, %v2052
      %v2058 = vrot.slane %v2057, 4
      %v2060 = vshll.u32 %v1564, 16
      %v2062 = vrot.slane %v2060, 5
      %v2063 = vsel %vm1619, %v2058, %v2062
      %v2064 = vshrl.u32 %v1564, 16
      %v2066 = vrot.slane %v2064, 4
      %v2067 = vor.u32 %v2066, %v2062
      %v2068 = vrot.slane %v2067, 4
      %v2070 = vshll.u32 %v1565, 16
      %v2072 = vrot.slane %v2070, 5
      %v2073 = vsel %vm1619, %v2068, %v2072
      %v2074 = vshrl.u32 %v1565, 16
      %v2076 = vrot.slane %v2074, 4
      %v2077 = vor.u32 %v2076, %v2072
      %v2078 = vrot.slane %v2077, 4
      %v2080 = vshll.u32 %v1566, 16
      %v2082 = vrot.slane %v2080, 5
      %v2083 = vsel %vm1619, %v2078, %v2082
      %v2084 = vshrl.u32 %v1566, 16
      %v2086 = vrot.slane %v2084, 4
      %v2087 = vor.u32 %v2086, %v2082
      %v2088 = vrot.slane %v2087, 4
      %v2090 = vshll.u32 %v1567, 16
      %v2092 = vrot.slane %v2090, 5
      %v2093 = vsel %vm1619, %v2088, %v2092
      %v2094 = vshrl.u32 %v1567, 16
      %v2096 = vrot.slane %v2094, 4
      %v2097 = vor.u32 %v2096, %v2092
      %v2098 = vrot.slane %v2097, 4
      %v2100 = vshll.u32 %v1616, 16
      %v2102 = vrot.slane %v2100, 5
      %v2103 = vsel %vm1619, %v2098, %v2102
      %2152 = vst [vmem:[#allocation2 + $0x4] sm:$0xf] %v1633
      %2153 = vst [vmem:[#allocation2 + $0x28] sm:$0xf] %v1643
      %2154 = vst [vmem:[#allocation2 + $0x4c] sm:$0xf] %v1653
      %2155 = vst [vmem:[#allocation2 + $0x70] sm:$0xf] %v1663
      %2156 = vst [vmem:[#allocation2 + $0x94] sm:$0xf] %v1673
      %2157 = vst [vmem:[#allocation2 + $0xb8] sm:$0xf] %v1683
      %2158 = vst [vmem:[#allocation2 + $0xdc] sm:$0xf] %v1693
      %2159 = vst [vmem:[#allocation2 + $0x100] sm:$0xf] %v1703
      %2160 = vst [vmem:[#allocation2 + $0x124] sm:$0xf] %v1713
      %2161 = vst [vmem:[#allocation2 + $0x148] sm:$0xf] %v1723
      %2162 = vst [vmem:[#allocation2 + $0x16c] sm:$0xf] %v1733
      %2163 = vst [vmem:[#allocation2 + $0x190] sm:$0xf] %v1743
      %2164 = vst [vmem:[#allocation2 + $0x1b4] sm:$0xf] %v1753
      %2165 = vst [vmem:[#allocation2 + $0x1d8] sm:$0xf] %v1763
      %2166 = vst [vmem:[#allocation2 + $0x1fc] sm:$0xf] %v1773
      %2167 = vst [vmem:[#allocation2 + $0x220] sm:$0xf] %v1783
      %2168 = vst [vmem:[#allocation2 + $0x244] sm:$0xf] %v1793
      %2169 = vst [vmem:[#allocation2 + $0x268] sm:$0xf] %v1803
      %2170 = vst [vmem:[#allocation2 + $0x28c] sm:$0xf] %v1813
      %2171 = vst [vmem:[#allocation2 + $0x2b0] sm:$0xf] %v1823
      %2172 = vst [vmem:[#allocation2 + $0x2d4] sm:$0xf] %v1833
      %2173 = vst [vmem:[#allocation2 + $0x2f8] sm:$0xf] %v1843
      %2174 = vst [vmem:[#allocation2 + $0x31c] sm:$0xf] %v1853
      %2175 = vst [vmem:[#allocation2 + $0x340] sm:$0xf] %v1863
      %2176 = vst [vmem:[#allocation2 + $0x364] sm:$0xf] %v1873
      %2177 = vst [vmem:[#allocation2 + $0x388] sm:$0xf] %v1883
      %2178 = vst [vmem:[#allocation2 + $0x3ac] sm:$0xf] %v1893
      %2179 = vst [vmem:[#allocation2 + $0x3d0] sm:$0xf] %v1903
      %2180 = vst [vmem:[#allocation2 + $0x3f4] sm:$0xf] %v1913
      %2181 = vst [vmem:[#allocation2 + $0x418] sm:$0xf] %v1923
      %2182 = vst [vmem:[#allocation2 + $0x43c] sm:$0xf] %v1933
      %2183 = vst [vmem:[#allocation2 + $0x460] sm:$0xf] %v1943
      %2184 = vst [vmem:[#allocation2 + $0x484] sm:$0xf] %v1953
      %2185 = vst [vmem:[#allocation2 + $0x4a8] sm:$0xf] %v1963
      %2186 = vst [vmem:[#allocation2 + $0x4cc] sm:$0xf] %v1973
      %2187 = vst [vmem:[#allocation2 + $0x4f0] sm:$0xf] %v1983
      %2188 = vst [vmem:[#allocation2 + $0x514] sm:$0xf] %v1993
      %2189 = vst [vmem:[#allocation2 + $0x538] sm:$0xf] %v2003
      %2190 = vst [vmem:[#allocation2 + $0x55c] sm:$0xf] %v2013
      %2191 = vst [vmem:[#allocation2 + $0x580] sm:$0xf] %v2023
      %2192 = vst [vmem:[#allocation2 + $0x5a4] sm:$0xf] %v2033
      %2193 = vst [vmem:[#allocation2 + $0x5c8] sm:$0xf] %v2043
      %2194 = vst [vmem:[#allocation2 + $0x5ec] sm:$0xf] %v2053
      %2195 = vst [vmem:[#allocation2 + $0x610] sm:$0xf] %v2063
      %2196 = vst [vmem:[#allocation2 + $0x634] sm:$0xf] %v2073
      %2197 = vst [vmem:[#allocation2 + $0x658] sm:$0xf] %v2083
      %2198 = vst [vmem:[#allocation2 + $0x67c] sm:$0xf] %v2093
      %2199 = vst [vmem:[#allocation2 + $0x6a0] sm:$0xf] %v2103
      %vm2249 = vcmask 1042432
      %vm2250 = vcmask 1046532
      %vm2251 = vmor %vm2249, %vm2250
      %v2252 = vrot.slane %v1520, 5
      %v2253 = vrot.slane %v2252, 4
      %v2254 = vrot.slane %v1521, 5
      %v2255 = vsel %vm2251, %v2253, %v2254
      %v2256 = vrot.slane %v2254, 4
      %v2257 = vrot.slane %v1522, 5
      %v2258 = vsel %vm2251, %v2256, %v2257
      %v2259 = vrot.slane %v2257, 4
      %v2260 = vrot.slane %v1523, 5
      %v2261 = vsel %vm2251, %v2259, %v2260
      %v2262 = vrot.slane %v2260, 4
      %v2263 = vrot.slane %v1524, 5
      %v2264 = vsel %vm2251, %v2262, %v2263
      %v2265 = vrot.slane %v2263, 4
      %v2266 = vrot.slane %v1525, 5
      %v2267 = vsel %vm2251, %v2265, %v2266
      %v2268 = vrot.slane %v2266, 4
      %v2269 = vrot.slane %v1526, 5
      %v2270 = vsel %vm2251, %v2268, %v2269
      %v2271 = vrot.slane %v2269, 4
      %v2272 = vrot.slane %v1527, 5
      %v2273 = vsel %vm2251, %v2271, %v2272
      %v2274 = vrot.slane %v2272, 4
      %v2275 = vrot.slane %v1528, 5
      %v2276 = vsel %vm2251, %v2274, %v2275
      %v2277 = vrot.slane %v2275, 4
      %v2278 = vrot.slane %v1529, 5
      %v2279 = vsel %vm2251, %v2277, %v2278
      %v2280 = vrot.slane %v2278, 4
      %v2281 = vrot.slane %v1530, 5
      %v2282 = vsel %vm2251, %v2280, %v2281
      %v2283 = vrot.slane %v2281, 4
      %v2284 = vrot.slane %v1531, 5
      %v2285 = vsel %vm2251, %v2283, %v2284
      %v2286 = vrot.slane %v2284, 4
      %v2287 = vrot.slane %v1532, 5
      %v2288 = vsel %vm2251, %v2286, %v2287
      %v2289 = vrot.slane %v2287, 4
      %v2290 = vrot.slane %v1533, 5
      %v2291 = vsel %vm2251, %v2289, %v2290
      %v2292 = vrot.slane %v2290, 4
      %v2293 = vrot.slane %v1534, 5
      %v2294 = vsel %vm2251, %v2292, %v2293
      %v2295 = vrot.slane %v2293, 4
      %v2296 = vrot.slane %v1535, 5
      %v2297 = vsel %vm2251, %v2295, %v2296
      %v2298 = vrot.slane %v2296, 4
      %v2299 = vrot.slane %v1536, 5
      %v2300 = vsel %vm2251, %v2298, %v2299
      %v2301 = vrot.slane %v2299, 4
      %v2302 = vrot.slane %v1537, 5
      %v2303 = vsel %vm2251, %v2301, %v2302
      %v2304 = vrot.slane %v2302, 4
      %v2305 = vrot.slane %v1538, 5
      %v2306 = vsel %vm2251, %v2304, %v2305
      %v2307 = vrot.slane %v2305, 4
      %v2308 = vrot.slane %v1539, 5
      %v2309 = vsel %vm2251, %v2307, %v2308
      %v2310 = vrot.slane %v2308, 4
      %v2311 = vrot.slane %v1540, 5
      %v2312 = vsel %vm2251, %v2310, %v2311
      %v2313 = vrot.slane %v2311, 4
      %v2314 = vrot.slane %v1541, 5
      %v2315 = vsel %vm2251, %v2313, %v2314
      %v2316 = vrot.slane %v2314, 4
      %v2317 = vrot.slane %v1542, 5
      %v2318 = vsel %vm2251, %v2316, %v2317
      %v2319 = vrot.slane %v2317, 4
      %v2320 = vrot.slane %v1543, 5
      %v2321 = vsel %vm2251, %v2319, %v2320
      %v2322 = vrot.slane %v2320, 4
      %v2323 = vrot.slane %v1544, 5
      %v2324 = vsel %vm2251, %v2322, %v2323
      %v2325 = vrot.slane %v2323, 4
      %v2326 = vrot.slane %v1545, 5
      %v2327 = vsel %vm2251, %v2325, %v2326
      %v2328 = vrot.slane %v2326, 4
      %v2329 = vrot.slane %v1546, 5
      %v2330 = vsel %vm2251, %v2328, %v2329
      %v2331 = vrot.slane %v2329, 4
      %v2332 = vrot.slane %v1547, 5
      %v2333 = vsel %vm2251, %v2331, %v2332
      %v2334 = vrot.slane %v2332, 4
      %v2335 = vrot.slane %v1548, 5
      %v2336 = vsel %vm2251, %v2334, %v2335
      %v2337 = vrot.slane %v2335, 4
      %v2338 = vrot.slane %v1549, 5
      %v2339 = vsel %vm2251, %v2337, %v2338
      %v2340 = vrot.slane %v2338, 4
      %v2341 = vrot.slane %v1550, 5
      %v2342 = vsel %vm2251, %v2340, %v2341
      %v2343 = vrot.slane %v2341, 4
      %v2344 = vrot.slane %v1551, 5
      %v2345 = vsel %vm2251, %v2343, %v2344
      %v2346 = vrot.slane %v2344, 4
      %v2347 = vrot.slane %v1552, 5
      %v2348 = vsel %vm2251, %v2346, %v2347
      %v2349 = vrot.slane %v2347, 4
      %v2350 = vrot.slane %v1553, 5
      %v2351 = vsel %vm2251, %v2349, %v2350
      %v2352 = vrot.slane %v2350, 4
      %v2353 = vrot.slane %v1554, 5
      %v2354 = vsel %vm2251, %v2352, %v2353
      %v2355 = vrot.slane %v2353, 4
      %v2356 = vrot.slane %v1555, 5
      %v2357 = vsel %vm2251, %v2355, %v2356
      %v2358 = vrot.slane %v2356, 4
      %v2359 = vrot.slane %v1556, 5
      %v2360 = vsel %vm2251, %v2358, %v2359
      %v2361 = vrot.slane %v2359, 4
      %v2362 = vrot.slane %v1557, 5
      %v2363 = vsel %vm2251, %v2361, %v2362
      %v2364 = vrot.slane %v2362, 4
      %v2365 = vrot.slane %v1558, 5
      %v2366 = vsel %vm2251, %v2364, %v2365
      %v2367 = vrot.slane %v2365, 4
      %v2368 = vrot.slane %v1559, 5
      %v2369 = vsel %vm2251, %v2367, %v2368
      %v2370 = vrot.slane %v2368, 4
      %v2371 = vrot.slane %v1560, 5
      %v2372 = vsel %vm2251, %v2370, %v2371
      %v2373 = vrot.slane %v2371, 4
      %v2374 = vrot.slane %v1561, 5
      %v2375 = vsel %vm2251, %v2373, %v2374
      %v2376 = vrot.slane %v2374, 4
      %v2377 = vrot.slane %v1562, 5
      %v2378 = vsel %vm2251, %v2376, %v2377
      %v2379 = vrot.slane %v2377, 4
      %v2380 = vrot.slane %v1563, 5
      %v2381 = vsel %vm2251, %v2379, %v2380
      %v2382 = vrot.slane %v2380, 4
      %v2383 = vrot.slane %v1564, 5
      %v2384 = vsel %vm2251, %v2382, %v2383
      %v2385 = vrot.slane %v2383, 4
      %v2386 = vrot.slane %v1565, 5
      %v2387 = vsel %vm2251, %v2385, %v2386
      %v2388 = vrot.slane %v2386, 4
      %v2389 = vrot.slane %v1566, 5
      %v2390 = vsel %vm2251, %v2388, %v2389
      %v2391 = vrot.slane %v2389, 4
      %v2392 = vrot.slane %v1567, 5
      %v2393 = vsel %vm2251, %v2391, %v2392
      %v2394 = vrot.slane %v2392, 4
      %v2395 = vrot.slane %v1616, 5
      %v2396 = vsel %vm2251, %v2394, %v2395
      %2445 = vst [vmem:[#allocation2 + $0x8] sm:$0xf] %v2255
      %2446 = vst [vmem:[#allocation2 + $0x2c] sm:$0xf] %v2258
      %2447 = vst [vmem:[#allocation2 + $0x50] sm:$0xf] %v2261
      %2448 = vst [vmem:[#allocation2 + $0x74] sm:$0xf] %v2264
      %2449 = vst [vmem:[#allocation2 + $0x98] sm:$0xf] %v2267
      %2450 = vst [vmem:[#allocation2 + $0xbc] sm:$0xf] %v2270
      %2451 = vst [vmem:[#allocation2 + $0xe0] sm:$0xf] %v2273
      %2452 = vst [vmem:[#allocation2 + $0x104] sm:$0xf] %v2276
      %2453 = vst [vmem:[#allocation2 + $0x128] sm:$0xf] %v2279
      %2454 = vst [vmem:[#allocation2 + $0x14c] sm:$0xf] %v2282
      %2455 = vst [vmem:[#allocation2 + $0x170] sm:$0xf] %v2285
      %2456 = vst [vmem:[#allocation2 + $0x194] sm:$0xf] %v2288
      %2457 = vst [vmem:[#allocation2 + $0x1b8] sm:$0xf] %v2291
      %2458 = vst [vmem:[#allocation2 + $0x1dc] sm:$0xf] %v2294
      %2459 = vst [vmem:[#allocation2 + $0x200] sm:$0xf] %v2297
      %2460 = vst [vmem:[#allocation2 + $0x224] sm:$0xf] %v2300
      %2461 = vst [vmem:[#allocation2 + $0x248] sm:$0xf] %v2303
      %2462 = vst [vmem:[#allocation2 + $0x26c] sm:$0xf] %v2306
      %2463 = vst [vmem:[#allocation2 + $0x290] sm:$0xf] %v2309
      %2464 = vst [vmem:[#allocation2 + $0x2b4] sm:$0xf] %v2312
      %2465 = vst [vmem:[#allocation2 + $0x2d8] sm:$0xf] %v2315
      %2466 = vst [vmem:[#allocation2 + $0x2fc] sm:$0xf] %v2318
      %2467 = vst [vmem:[#allocation2 + $0x320] sm:$0xf] %v2321
      %2468 = vst [vmem:[#allocation2 + $0x344] sm:$0xf] %v2324
      %2469 = vst [vmem:[#allocation2 + $0x368] sm:$0xf] %v2327
      %2470 = vst [vmem:[#allocation2 + $0x38c] sm:$0xf] %v2330
      %2471 = vst [vmem:[#allocation2 + $0x3b0] sm:$0xf] %v2333
      %2472 = vst [vmem:[#allocation2 + $0x3d4] sm:$0xf] %v2336
      %2473 = vst [vmem:[#allocation2 + $0x3f8] sm:$0xf] %v2339
      %2474 = vst [vmem:[#allocation2 + $0x41c] sm:$0xf] %v2342
      %2475 = vst [vmem:[#allocation2 + $0x440] sm:$0xf] %v2345
      %2476 = vst [vmem:[#allocation2 + $0x464] sm:$0xf] %v2348
      %2477 = vst [vmem:[#allocation2 + $0x488] sm:$0xf] %v2351
      %2478 = vst [vmem:[#allocation2 + $0x4ac] sm:$0xf] %v2354
      %2479 = vst [vmem:[#allocation2 + $0x4d0] sm:$0xf] %v2357
      %2480 = vst [vmem:[#allocation2 + $0x4f4] sm:$0xf] %v2360
      %2481 = vst [vmem:[#allocation2 + $0x518] sm:$0xf] %v2363
      %2482 = vst [vmem:[#allocation2 + $0x53c] sm:$0xf] %v2366
      %2483 = vst [vmem:[#allocation2 + $0x560] sm:$0xf] %v2369
      %2484 = vst [vmem:[#allocation2 + $0x584] sm:$0xf] %v2372
      %2485 = vst [vmem:[#allocation2 + $0x5a8] sm:$0xf] %v2375
      %2486 = vst [vmem:[#allocation2 + $0x5cc] sm:$0xf] %v2378
      %2487 = vst [vmem:[#allocation2 + $0x5f0] sm:$0xf] %v2381
      %2488 = vst [vmem:[#allocation2 + $0x614] sm:$0xf] %v2384
      %2489 = vst [vmem:[#allocation2 + $0x638] sm:$0xf] %v2387
      %2490 = vst [vmem:[#allocation2 + $0x65c] sm:$0xf] %v2390
      %2491 = vst [vmem:[#allocation2 + $0x680] sm:$0xf] %v2393
      %2492 = vst [vmem:[#allocation2 + $0x6a4] sm:$0xf] %v2396
      %v2493 = vpack.c.bf16 %v1514, %v1514
      %v2494 = vpack.c.bf16 %v1515, %v1515
      %2495 = vst [vmem:[#allocation2 + $0xc] sm:$0xf] %v1523
      %2496 = vst [vmem:[#allocation2 + $0x30] sm:$0xf] %v1524
      %2497 = vst [vmem:[#allocation2 + $0x54] sm:$0xf] %v1525
      %2498 = vst [vmem:[#allocation2 + $0x78] sm:$0xf] %v1526
      %2499 = vst [vmem:[#allocation2 + $0x9c] sm:$0xf] %v1527
      %2500 = vst [vmem:[#allocation2 + $0xc0] sm:$0xf] %v1528
      %2501 = vst [vmem:[#allocation2 + $0xe4] sm:$0xf] %v1529
      %2502 = vst [vmem:[#allocation2 + $0x108] sm:$0xf] %v1530
      %2503 = vst [vmem:[#allocation2 + $0x12c] sm:$0xf] %v1531
      %2504 = vst [vmem:[#allocation2 + $0x150] sm:$0xf] %v1532
      %2505 = vst [vmem:[#allocation2 + $0x174] sm:$0xf] %v1533
      %2506 = vst [vmem:[#allocation2 + $0x198] sm:$0xf] %v1534
      %2507 = vst [vmem:[#allocation2 + $0x1bc] sm:$0xf] %v1535
      %2508 = vst [vmem:[#allocation2 + $0x1e0] sm:$0xf] %v1536
      %2509 = vst [vmem:[#allocation2 + $0x204] sm:$0xf] %v1537
      %2510 = vst [vmem:[#allocation2 + $0x228] sm:$0xf] %v1538
      %2511 = vst [vmem:[#allocation2 + $0x24c] sm:$0xf] %v1539
      %2512 = vst [vmem:[#allocation2 + $0x270] sm:$0xf] %v1540
      %2513 = vst [vmem:[#allocation2 + $0x294] sm:$0xf] %v1541
      %2514 = vst [vmem:[#allocation2 + $0x2b8] sm:$0xf] %v1542
      %2515 = vst [vmem:[#allocation2 + $0x2dc] sm:$0xf] %v1543
      %2516 = vst [vmem:[#allocation2 + $0x300] sm:$0xf] %v1544
      %2517 = vst [vmem:[#allocation2 + $0x324] sm:$0xf] %v1545
      %2518 = vst [vmem:[#allocation2 + $0x348] sm:$0xf] %v1546
      %2519 = vst [vmem:[#allocation2 + $0x36c] sm:$0xf] %v1547
      %2520 = vst [vmem:[#allocation2 + $0x390] sm:$0xf] %v1548
      %2521 = vst [vmem:[#allocation2 + $0x3b4] sm:$0xf] %v1549
      %2522 = vst [vmem:[#allocation2 + $0x3d8] sm:$0xf] %v1550
      %2523 = vst [vmem:[#allocation2 + $0x3fc] sm:$0xf] %v1551
      %2524 = vst [vmem:[#allocation2 + $0x420] sm:$0xf] %v1552
      %2525 = vst [vmem:[#allocation2 + $0x444] sm:$0xf] %v1553
      %2526 = vst [vmem:[#allocation2 + $0x468] sm:$0xf] %v1554
      %2527 = vst [vmem:[#allocation2 + $0x48c] sm:$0xf] %v1555
      %2528 = vst [vmem:[#allocation2 + $0x4b0] sm:$0xf] %v1556
      %2529 = vst [vmem:[#allocation2 + $0x4d4] sm:$0xf] %v1557
      %2530 = vst [vmem:[#allocation2 + $0x4f8] sm:$0xf] %v1558
      %2531 = vst [vmem:[#allocation2 + $0x51c] sm:$0xf] %v1559
      %2532 = vst [vmem:[#allocation2 + $0x540] sm:$0xf] %v1560
      %2533 = vst [vmem:[#allocation2 + $0x564] sm:$0xf] %v1561
      %2534 = vst [vmem:[#allocation2 + $0x588] sm:$0xf] %v1562
      %2535 = vst [vmem:[#allocation2 + $0x5ac] sm:$0xf] %v1563
      %2536 = vst [vmem:[#allocation2 + $0x5d0] sm:$0xf] %v1564
      %2537 = vst [vmem:[#allocation2 + $0x5f4] sm:$0xf] %v1565
      %2538 = vst [vmem:[#allocation2 + $0x618] sm:$0xf] %v1566
      %2539 = vst [vmem:[#allocation2 + $0x63c] sm:$0xf] %v1567
      %2540 = vst [vmem:[#allocation2 + $0x660] sm:$0xf] %v1616
      %2541 = vst [vmem:[#allocation2 + $0x684] sm:$0xf] %v2493
      %2542 = vst [vmem:[#allocation2 + $0x6a8] sm:$0xf] %v2494
      %v2543 = vpack.c.bf16 %v1516, %v1516
      %v2544 = vshrl.u32 %v1616, 16
      %v2546 = vrot.slane %v2544, 4
      %v2547 = vor.u32 %v2546, %v2102
      %v2548 = vrot.slane %v2547, 4
      %v2550 = vshll.u32 %v2493, 16
      %v2552 = vrot.slane %v2550, 5
      %v2553 = vsel %vm1619, %v2548, %v2552
      %v2554 = vshrl.u32 %v2493, 16
      %v2556 = vrot.slane %v2554, 4
      %v2557 = vor.u32 %v2556, %v2552
      %v2558 = vrot.slane %v2557, 4
      %v2560 = vshll.u32 %v2494, 16
      %v2562 = vrot.slane %v2560, 5
      %v2563 = vsel %vm1619, %v2558, %v2562
      %v2564 = vshrl.u32 %v2494, 16
      %v2566 = vrot.slane %v2564, 4
      %v2567 = vor.u32 %v2566, %v2562
      %v2568 = vrot.slane %v2567, 4
      %v2570 = vshll.u32 %v2543, 16
      %v2572 = vrot.slane %v2570, 5
      %v2573 = vsel %vm1619, %v2568, %v2572
      %2577 = vst [vmem:[#allocation2 + $0x10] sm:$0xf] %v1663
      %2578 = vst [vmem:[#allocation2 + $0x34] sm:$0xf] %v1673
      %2579 = vst [vmem:[#allocation2 + $0x58] sm:$0xf] %v1683
      %2580 = vst [vmem:[#allocation2 + $0x7c] sm:$0xf] %v1693
      %2581 = vst [vmem:[#allocation2 + $0xa0] sm:$0xf] %v1703
      %2582 = vst [vmem:[#allocation2 + $0xc4] sm:$0xf] %v1713
      %2583 = vst [vmem:[#allocation2 + $0xe8] sm:$0xf] %v1723
      %2584 = vst [vmem:[#allocation2 + $0x10c] sm:$0xf] %v1733
      %2585 = vst [vmem:[#allocation2 + $0x130] sm:$0xf] %v1743
      %2586 = vst [vmem:[#allocation2 + $0x154] sm:$0xf] %v1753
      %2587 = vst [vmem:[#allocation2 + $0x178] sm:$0xf] %v1763
      %2588 = vst [vmem:[#allocation2 + $0x19c] sm:$0xf] %v1773
      %2589 = vst [vmem:[#allocation2 + $0x1c0] sm:$0xf] %v1783
      %2590 = vst [vmem:[#allocation2 + $0x1e4] sm:$0xf] %v1793
      %2591 = vst [vmem:[#allocation2 + $0x208] sm:$0xf] %v1803
      %2592 = vst [vmem:[#allocation2 + $0x22c] sm:$0xf] %v1813
      %2593 = vst [vmem:[#allocation2 + $0x250] sm:$0xf] %v1823
      %2594 = vst [vmem:[#allocation2 + $0x274] sm:$0xf] %v1833
      %2595 = vst [vmem:[#allocation2 + $0x298] sm:$0xf] %v1843
      %2596 = vst [vmem:[#allocation2 + $0x2bc] sm:$0xf] %v1853
      %2597 = vst [vmem:[#allocation2 + $0x2e0] sm:$0xf] %v1863
      %2598 = vst [vmem:[#allocation2 + $0x304] sm:$0xf] %v1873
      %2599 = vst [vmem:[#allocation2 + $0x328] sm:$0xf] %v1883
      %2600 = vst [vmem:[#allocation2 + $0x34c] sm:$0xf] %v1893
      %2601 = vst [vmem:[#allocation2 + $0x370] sm:$0xf] %v1903
      %2602 = vst [vmem:[#allocation2 + $0x394] sm:$0xf] %v1913
      %2603 = vst [vmem:[#allocation2 + $0x3b8] sm:$0xf] %v1923
      %2604 = vst [vmem:[#allocation2 + $0x3dc] sm:$0xf] %v1933
      %2605 = vst [vmem:[#allocation2 + $0x400] sm:$0xf] %v1943
      %2606 = vst [vmem:[#allocation2 + $0x424] sm:$0xf] %v1953
      %2607 = vst [vmem:[#allocation2 + $0x448] sm:$0xf] %v1963
      %2608 = vst [vmem:[#allocation2 + $0x46c] sm:$0xf] %v1973
      %2609 = vst [vmem:[#allocation2 + $0x490] sm:$0xf] %v1983
      %2610 = vst [vmem:[#allocation2 + $0x4b4] sm:$0xf] %v1993
      %2611 = vst [vmem:[#allocation2 + $0x4d8] sm:$0xf] %v2003
      %2612 = vst [vmem:[#allocation2 + $0x4fc] sm:$0xf] %v2013
      %2613 = vst [vmem:[#allocation2 + $0x520] sm:$0xf] %v2023
      %2614 = vst [vmem:[#allocation2 + $0x544] sm:$0xf] %v2033
      %2615 = vst [vmem:[#allocation2 + $0x568] sm:$0xf] %v2043
      %2616 = vst [vmem:[#allocation2 + $0x58c] sm:$0xf] %v2053
      %2617 = vst [vmem:[#allocation2 + $0x5b0] sm:$0xf] %v2063
      %2618 = vst [vmem:[#allocation2 + $0x5d4] sm:$0xf] %v2073
      %2619 = vst [vmem:[#allocation2 + $0x5f8] sm:$0xf] %v2083
      %2620 = vst [vmem:[#allocation2 + $0x61c] sm:$0xf] %v2093
      %2621 = vst [vmem:[#allocation2 + $0x640] sm:$0xf] %v2103
      %2622 = vst [vmem:[#allocation2 + $0x664] sm:$0xf] %v2553
      %2623 = vst [vmem:[#allocation2 + $0x688] sm:$0xf] %v2563
      %2624 = vst [vmem:[#allocation2 + $0x6ac] sm:$0xf] %v2573
      %v2628 = vrot.slane %v2395, 4
      %v2629 = vrot.slane %v2493, 5
      %v2630 = vsel %vm2251, %v2628, %v2629
      %v2631 = vrot.slane %v2629, 4
      %v2632 = vrot.slane %v2494, 5
      %v2633 = vsel %vm2251, %v2631, %v2632
      %v2634 = vrot.slane %v2632, 4
      %v2635 = vrot.slane %v2543, 5
      %v2636 = vsel %vm2251, %v2634, %v2635
      %2640 = vst [vmem:[#allocation2 + $0x14] sm:$0xf] %v2264
      %2641 = vst [vmem:[#allocation2 + $0x38] sm:$0xf] %v2267
      %2642 = vst [vmem:[#allocation2 + $0x5c] sm:$0xf] %v2270
      %2643 = vst [vmem:[#allocation2 + $0x80] sm:$0xf] %v2273
      %2644 = vst [vmem:[#allocation2 + $0xa4] sm:$0xf] %v2276
      %2645 = vst [vmem:[#allocation2 + $0xc8] sm:$0xf] %v2279
      %2646 = vst [vmem:[#allocation2 + $0xec] sm:$0xf] %v2282
      %2647 = vst [vmem:[#allocation2 + $0x110] sm:$0xf] %v2285
      %2648 = vst [vmem:[#allocation2 + $0x134] sm:$0xf] %v2288
      %2649 = vst [vmem:[#allocation2 + $0x158] sm:$0xf] %v2291
      %2650 = vst [vmem:[#allocation2 + $0x17c] sm:$0xf] %v2294
      %2651 = vst [vmem:[#allocation2 + $0x1a0] sm:$0xf] %v2297
      %2652 = vst [vmem:[#allocation2 + $0x1c4] sm:$0xf] %v2300
      %2653 = vst [vmem:[#allocation2 + $0x1e8] sm:$0xf] %v2303
      %2654 = vst [vmem:[#allocation2 + $0x20c] sm:$0xf] %v2306
      %2655 = vst [vmem:[#allocation2 + $0x230] sm:$0xf] %v2309
      %2656 = vst [vmem:[#allocation2 + $0x254] sm:$0xf] %v2312
      %2657 = vst [vmem:[#allocation2 + $0x278] sm:$0xf] %v2315
      %2658 = vst [vmem:[#allocation2 + $0x29c] sm:$0xf] %v2318
      %2659 = vst [vmem:[#allocation2 + $0x2c0] sm:$0xf] %v2321
      %2660 = vst [vmem:[#allocation2 + $0x2e4] sm:$0xf] %v2324
      %2661 = vst [vmem:[#allocation2 + $0x308] sm:$0xf] %v2327
      %2662 = vst [vmem:[#allocation2 + $0x32c] sm:$0xf] %v2330
      %2663 = vst [vmem:[#allocation2 + $0x350] sm:$0xf] %v2333
      %2664 = vst [vmem:[#allocation2 + $0x374] sm:$0xf] %v2336
      %2665 = vst [vmem:[#allocation2 + $0x398] sm:$0xf] %v2339
      %2666 = vst [vmem:[#allocation2 + $0x3bc] sm:$0xf] %v2342
      %2667 = vst [vmem:[#allocation2 + $0x3e0] sm:$0xf] %v2345
      %2668 = vst [vmem:[#allocation2 + $0x404] sm:$0xf] %v2348
      %2669 = vst [vmem:[#allocation2 + $0x428] sm:$0xf] %v2351
      %2670 = vst [vmem:[#allocation2 + $0x44c] sm:$0xf] %v2354
      %2671 = vst [vmem:[#allocation2 + $0x470] sm:$0xf] %v2357
      %2672 = vst [vmem:[#allocation2 + $0x494] sm:$0xf] %v2360
      %2673 = vst [vmem:[#allocation2 + $0x4b8] sm:$0xf] %v2363
      %2674 = vst [vmem:[#allocation2 + $0x4dc] sm:$0xf] %v2366
      %2675 = vst [vmem:[#allocation2 + $0x500] sm:$0xf] %v2369
      %2676 = vst [vmem:[#allocation2 + $0x524] sm:$0xf] %v2372
      %2677 = vst [vmem:[#allocation2 + $0x548] sm:$0xf] %v2375
      %2678 = vst [vmem:[#allocation2 + $0x56c] sm:$0xf] %v2378
      %2679 = vst [vmem:[#allocation2 + $0x590] sm:$0xf] %v2381
      %2680 = vst [vmem:[#allocation2 + $0x5b4] sm:$0xf] %v2384
      %2681 = vst [vmem:[#allocation2 + $0x5d8] sm:$0xf] %v2387
      %2682 = vst [vmem:[#allocation2 + $0x5fc] sm:$0xf] %v2390
      %2683 = vst [vmem:[#allocation2 + $0x620] sm:$0xf] %v2393
      %2684 = vst [vmem:[#allocation2 + $0x644] sm:$0xf] %v2396
      %2685 = vst [vmem:[#allocation2 + $0x668] sm:$0xf] %v2630
      %2686 = vst [vmem:[#allocation2 + $0x68c] sm:$0xf] %v2633
      %2687 = vst [vmem:[#allocation2 + $0x6b0] sm:$0xf] %v2636
      %v2688 = vpack.c.bf16 %v1517, %v1517
      %v2689 = vpack.c.bf16 %v1518, %v1518
      %2690 = vst [vmem:[#allocation2 + $0x18] sm:$0xf] %v1526
      %2691 = vst [vmem:[#allocation2 + $0x3c] sm:$0xf] %v1527
      %2692 = vst [vmem:[#allocation2 + $0x60] sm:$0xf] %v1528
      %2693 = vst [vmem:[#allocation2 + $0x84] sm:$0xf] %v1529
      %2694 = vst [vmem:[#allocation2 + $0xa8] sm:$0xf] %v1530
      %2695 = vst [vmem:[#allocation2 + $0xcc] sm:$0xf] %v1531
      %2696 = vst [vmem:[#allocation2 + $0xf0] sm:$0xf] %v1532
      %2697 = vst [vmem:[#allocation2 + $0x114] sm:$0xf] %v1533
      %2698 = vst [vmem:[#allocation2 + $0x138] sm:$0xf] %v1534
      %2699 = vst [vmem:[#allocation2 + $0x15c] sm:$0xf] %v1535
      %2700 = vst [vmem:[#allocation2 + $0x180] sm:$0xf] %v1536
      %2701 = vst [vmem:[#allocation2 + $0x1a4] sm:$0xf] %v1537
      %2702 = vst [vmem:[#allocation2 + $0x1c8] sm:$0xf] %v1538
      %2703 = vst [vmem:[#allocation2 + $0x1ec] sm:$0xf] %v1539
      %2704 = vst [vmem:[#allocation2 + $0x210] sm:$0xf] %v1540
      %2705 = vst [vmem:[#allocation2 + $0x234] sm:$0xf] %v1541
      %2706 = vst [vmem:[#allocation2 + $0x258] sm:$0xf] %v1542
      %2707 = vst [vmem:[#allocation2 + $0x27c] sm:$0xf] %v1543
      %2708 = vst [vmem:[#allocation2 + $0x2a0] sm:$0xf] %v1544
      %2709 = vst [vmem:[#allocation2 + $0x2c4] sm:$0xf] %v1545
      %2710 = vst [vmem:[#allocation2 + $0x2e8] sm:$0xf] %v1546
      %2711 = vst [vmem:[#allocation2 + $0x30c] sm:$0xf] %v1547
      %2712 = vst [vmem:[#allocation2 + $0x330] sm:$0xf] %v1548
      %2713 = vst [vmem:[#allocation2 + $0x354] sm:$0xf] %v1549
      %2714 = vst [vmem:[#allocation2 + $0x378] sm:$0xf] %v1550
      %2715 = vst [vmem:[#allocation2 + $0x39c] sm:$0xf] %v1551
      %2716 = vst [vmem:[#allocation2 + $0x3c0] sm:$0xf] %v1552
      %2717 = vst [vmem:[#allocation2 + $0x3e4] sm:$0xf] %v1553
      %2718 = vst [vmem:[#allocation2 + $0x408] sm:$0xf] %v1554
      %2719 = vst [vmem:[#allocation2 + $0x42c] sm:$0xf] %v1555
      %2720 = vst [vmem:[#allocation2 + $0x450] sm:$0xf] %v1556
      %2721 = vst [vmem:[#allocation2 + $0x474] sm:$0xf] %v1557
      %2722 = vst [vmem:[#allocation2 + $0x498] sm:$0xf] %v1558
      %2723 = vst [vmem:[#allocation2 + $0x4bc] sm:$0xf] %v1559
      %2724 = vst [vmem:[#allocation2 + $0x4e0] sm:$0xf] %v1560
      %2725 = vst [vmem:[#allocation2 + $0x504] sm:$0xf] %v1561
      %2726 = vst [vmem:[#allocation2 + $0x528] sm:$0xf] %v1562
      %2727 = vst [vmem:[#allocation2 + $0x54c] sm:$0xf] %v1563
      %2728 = vst [vmem:[#allocation2 + $0x570] sm:$0xf] %v1564
      %2729 = vst [vmem:[#allocation2 + $0x594] sm:$0xf] %v1565
      %2730 = vst [vmem:[#allocation2 + $0x5b8] sm:$0xf] %v1566
      %2731 = vst [vmem:[#allocation2 + $0x5dc] sm:$0xf] %v1567
      %2732 = vst [vmem:[#allocation2 + $0x600] sm:$0xf] %v1616
      %2733 = vst [vmem:[#allocation2 + $0x624] sm:$0xf] %v2493
      %2734 = vst [vmem:[#allocation2 + $0x648] sm:$0xf] %v2494
      %2735 = vst [vmem:[#allocation2 + $0x66c] sm:$0xf] %v2543
      %2736 = vst [vmem:[#allocation2 + $0x690] sm:$0xf] %v2688
      %2737 = vst [vmem:[#allocation2 + $0x6b4] sm:$0xf] %v2689
      %v2738 = vpack.c.bf16 %v1519, %v1519
      %v2739 = vshrl.u32 %v2543, 16
      %v2741 = vrot.slane %v2739, 4
      %v2742 = vor.u32 %v2741, %v2572
      %v2743 = vrot.slane %v2742, 4
      %v2745 = vshll.u32 %v2688, 16
      %v2747 = vrot.slane %v2745, 5
      %v2748 = vsel %vm1619, %v2743, %v2747
      %v2749 = vshrl.u32 %v2688, 16
      %v2751 = vrot.slane %v2749, 4
      %v2752 = vor.u32 %v2751, %v2747
      %v2753 = vrot.slane %v2752, 4
      %v2755 = vshll.u32 %v2689, 16
      %v2757 = vrot.slane %v2755, 5
      %v2758 = vsel %vm1619, %v2753, %v2757
      %v2759 = vshrl.u32 %v2689, 16
      %v2761 = vrot.slane %v2759, 4
      %v2762 = vor.u32 %v2761, %v2757
      %v2763 = vrot.slane %v2762, 4
      %v2765 = vshll.u32 %v2738, 16
      %v2767 = vrot.slane %v2765, 5
      %v2768 = vsel %vm1619, %v2763, %v2767
      %2772 = vst [vmem:[#allocation2 + $0x1c] sm:$0xf] %v1693
      %2773 = vst [vmem:[#allocation2 + $0x40] sm:$0xf] %v1703
      %2774 = vst [vmem:[#allocation2 + $0x64] sm:$0xf] %v1713
      %2775 = vst [vmem:[#allocation2 + $0x88] sm:$0xf] %v1723
      %2776 = vst [vmem:[#allocation2 + $0xac] sm:$0xf] %v1733
      %2777 = vst [vmem:[#allocation2 + $0xd0] sm:$0xf] %v1743
      %2778 = vst [vmem:[#allocation2 + $0xf4] sm:$0xf] %v1753
      %2779 = vst [vmem:[#allocation2 + $0x118] sm:$0xf] %v1763
      %2780 = vst [vmem:[#allocation2 + $0x13c] sm:$0xf] %v1773
      %2781 = vst [vmem:[#allocation2 + $0x160] sm:$0xf] %v1783
      %2782 = vst [vmem:[#allocation2 + $0x184] sm:$0xf] %v1793
      %2783 = vst [vmem:[#allocation2 + $0x1a8] sm:$0xf] %v1803
      %2784 = vst [vmem:[#allocation2 + $0x1cc] sm:$0xf] %v1813
      %2785 = vst [vmem:[#allocation2 + $0x1f0] sm:$0xf] %v1823
      %2786 = vst [vmem:[#allocation2 + $0x214] sm:$0xf] %v1833
      %2787 = vst [vmem:[#allocation2 + $0x238] sm:$0xf] %v1843
      %2788 = vst [vmem:[#allocation2 + $0x25c] sm:$0xf] %v1853
      %2789 = vst [vmem:[#allocation2 + $0x280] sm:$0xf] %v1863
      %2790 = vst [vmem:[#allocation2 + $0x2a4] sm:$0xf] %v1873
      %2791 = vst [vmem:[#allocation2 + $0x2c8] sm:$0xf] %v1883
      %2792 = vst [vmem:[#allocation2 + $0x2ec] sm:$0xf] %v1893
      %2793 = vst [vmem:[#allocation2 + $0x310] sm:$0xf] %v1903
      %2794 = vst [vmem:[#allocation2 + $0x334] sm:$0xf] %v1913
      %2795 = vst [vmem:[#allocation2 + $0x358] sm:$0xf] %v1923
      %2796 = vst [vmem:[#allocation2 + $0x37c] sm:$0xf] %v1933
      %2797 = vst [vmem:[#allocation2 + $0x3a0] sm:$0xf] %v1943
      %2798 = vst [vmem:[#allocation2 + $0x3c4] sm:$0xf] %v1953
      %2799 = vst [vmem:[#allocation2 + $0x3e8] sm:$0xf] %v1963
      %2800 = vst [vmem:[#allocation2 + $0x40c] sm:$0xf] %v1973
      %2801 = vst [vmem:[#allocation2 + $0x430] sm:$0xf] %v1983
      %2802 = vst [vmem:[#allocation2 + $0x454] sm:$0xf] %v1993
      %2803 = vst [vmem:[#allocation2 + $0x478] sm:$0xf] %v2003
      %2804 = vst [vmem:[#allocation2 + $0x49c] sm:$0xf] %v2013
      %2805 = vst [vmem:[#allocation2 + $0x4c0] sm:$0xf] %v2023
      %2806 = vst [vmem:[#allocation2 + $0x4e4] sm:$0xf] %v2033
      %2807 = vst [vmem:[#allocation2 + $0x508] sm:$0xf] %v2043
      %2808 = vst [vmem:[#allocation2 + $0x52c] sm:$0xf] %v2053
      %2809 = vst [vmem:[#allocation2 + $0x550] sm:$0xf] %v2063
      %2810 = vst [vmem:[#allocation2 + $0x574] sm:$0xf] %v2073
      %2811 = vst [vmem:[#allocation2 + $0x598] sm:$0xf] %v2083
      %2812 = vst [vmem:[#allocation2 + $0x5bc] sm:$0xf] %v2093
      %2813 = vst [vmem:[#allocation2 + $0x5e0] sm:$0xf] %v2103
      %2814 = vst [vmem:[#allocation2 + $0x604] sm:$0xf] %v2553
      %2815 = vst [vmem:[#allocation2 + $0x628] sm:$0xf] %v2563
      %2816 = vst [vmem:[#allocation2 + $0x64c] sm:$0xf] %v2573
      %2817 = vst [vmem:[#allocation2 + $0x670] sm:$0xf] %v2748
      %2818 = vst [vmem:[#allocation2 + $0x694] sm:$0xf] %v2758
      %2819 = vst [vmem:[#allocation2 + $0x6b8] sm:$0xf] %v2768
      %v2823 = vrot.slane %v2635, 4
      %v2824 = vrot.slane %v2688, 5
      %v2825 = vsel %vm2251, %v2823, %v2824
      %v2826 = vrot.slane %v2824, 4
      %v2827 = vrot.slane %v2689, 5
      %v2828 = vsel %vm2251, %v2826, %v2827
      %v2829 = vrot.slane %v2827, 4
      %v2830 = vrot.slane %v2738, 5
      %v2831 = vsel %vm2251, %v2829, %v2830
      %2835 = vst [vmem:[#allocation2 + $0x20] sm:$0xf] %v2273
      %2836 = vst [vmem:[#allocation2 + $0x44] sm:$0xf] %v2276
      %2837 = vst [vmem:[#allocation2 + $0x68] sm:$0xf] %v2279
      %2838 = vst [vmem:[#allocation2 + $0x8c] sm:$0xf] %v2282
      %2839 = vst [vmem:[#allocation2 + $0xb0] sm:$0xf] %v2285
      %2840 = vst [vmem:[#allocation2 + $0xd4] sm:$0xf] %v2288
      %2841 = vst [vmem:[#allocation2 + $0xf8] sm:$0xf] %v2291
      %2842 = vst [vmem:[#allocation2 + $0x11c] sm:$0xf] %v2294
      %2843 = vst [vmem:[#allocation2 + $0x140] sm:$0xf] %v2297
      %2844 = vst [vmem:[#allocation2 + $0x164] sm:$0xf] %v2300
      %2845 = vst [vmem:[#allocation2 + $0x188] sm:$0xf] %v2303
      %2846 = vst [vmem:[#allocation2 + $0x1ac] sm:$0xf] %v2306
      %2847 = vst [vmem:[#allocation2 + $0x1d0] sm:$0xf] %v2309
      %2848 = vst [vmem:[#allocation2 + $0x1f4] sm:$0xf] %v2312
      %2849 = vst [vmem:[#allocation2 + $0x218] sm:$0xf] %v2315
      %2850 = vst [vmem:[#allocation2 + $0x23c] sm:$0xf] %v2318
      %2851 = vst [vmem:[#allocation2 + $0x260] sm:$0xf] %v2321
      %2852 = vst [vmem:[#allocation2 + $0x284] sm:$0xf] %v2324
      %2853 = vst [vmem:[#allocation2 + $0x2a8] sm:$0xf] %v2327
      %2854 = vst [vmem:[#allocation2 + $0x2cc] sm:$0xf] %v2330
      %2855 = vst [vmem:[#allocation2 + $0x2f0] sm:$0xf] %v2333
      %2856 = vst [vmem:[#allocation2 + $0x314] sm:$0xf] %v2336
      %2857 = vst [vmem:[#allocation2 + $0x338] sm:$0xf] %v2339
      %2858 = vst [vmem:[#allocation2 + $0x35c] sm:$0xf] %v2342
      %2859 = vst [vmem:[#allocation2 + $0x380] sm:$0xf] %v2345
      %2860 = vst [vmem:[#allocation2 + $0x3a4] sm:$0xf] %v2348
      %2861 = vst [vmem:[#allocation2 + $0x3c8] sm:$0xf] %v2351
      %2862 = vst [vmem:[#allocation2 + $0x3ec] sm:$0xf] %v2354
      %2863 = vst [vmem:[#allocation2 + $0x410] sm:$0xf] %v2357
      %2864 = vst [vmem:[#allocation2 + $0x434] sm:$0xf] %v2360
      %2865 = vst [vmem:[#allocation2 + $0x458] sm:$0xf] %v2363
      %2866 = vst [vmem:[#allocation2 + $0x47c] sm:$0xf] %v2366
      %2867 = vst [vmem:[#allocation2 + $0x4a0] sm:$0xf] %v2369
      %2868 = vst [vmem:[#allocation2 + $0x4c4] sm:$0xf] %v2372
      %2869 = vst [vmem:[#allocation2 + $0x4e8] sm:$0xf] %v2375
      %2870 = vst [vmem:[#allocation2 + $0x50c] sm:$0xf] %v2378
      %2871 = vst [vmem:[#allocation2 + $0x530] sm:$0xf] %v2381
      %2872 = vst [vmem:[#allocation2 + $0x554] sm:$0xf] %v2384
      %2873 = vst [vmem:[#allocation2 + $0x578] sm:$0xf] %v2387
      %2874 = vst [vmem:[#allocation2 + $0x59c] sm:$0xf] %v2390
      %2875 = vst [vmem:[#allocation2 + $0x5c0] sm:$0xf] %v2393
      %2876 = vst [vmem:[#allocation2 + $0x5e4] sm:$0xf] %v2396
      %2877 = vst [vmem:[#allocation2 + $0x608] sm:$0xf] %v2630
      %2878 = vst [vmem:[#allocation2 + $0x62c] sm:$0xf] %v2633
      %2879 = vst [vmem:[#allocation2 + $0x650] sm:$0xf] %v2636
      %2880 = vst [vmem:[#allocation2 + $0x674] sm:$0xf] %v2825
      %2881 = vst [vmem:[#allocation2 + $0x698] sm:$0xf] %v2828
      %2882 = vst [vmem:[#allocation2 + $0x6bc] sm:$0xf] %v2831
      %v2883 = vld [vmem:[#allocation2] sm:$0xff]
      %v2884 = vld [vmem:[#allocation2 + $0x8] sm:$0xff]
      %v2885 = vld [vmem:[#allocation2 + $0x10] sm:$0xff]
      %v2886 = vld [vmem:[#allocation2 + $0x18] sm:$0xff]
      %v2887 = vld [vmem:[#allocation2 + $0x20] sm:$0xf]
      %v2888 = vld [vmem:[#allocation2 + $0x24] sm:$0xff]
      %v2889 = vld [vmem:[#allocation2 + $0x2c] sm:$0xff]
      %v2890 = vld [vmem:[#allocation2 + $0x34] sm:$0xff]
      %v2891 = vld [vmem:[#allocation2 + $0x3c] sm:$0xff]
      %v2892 = vld [vmem:[#allocation2 + $0x44] sm:$0xf]
      %v2893 = vld [vmem:[#allocation2 + $0x48] sm:$0xff]
      %v2894 = vld [vmem:[#allocation2 + $0x50] sm:$0xff]
      %v2895 = vld [vmem:[#allocation2 + $0x58] sm:$0xff]
      %v2896 = vld [vmem:[#allocation2 + $0x60] sm:$0xff]
      %v2897 = vld [vmem:[#allocation2 + $0x68] sm:$0xf]
      %v2898 = vld [vmem:[#allocation2 + $0x6c] sm:$0xff]
      %v2899 = vld [vmem:[#allocation2 + $0x74] sm:$0xff]
      %v2900 = vld [vmem:[#allocation2 + $0x7c] sm:$0xff]
      %v2901 = vld [vmem:[#allocation2 + $0x84] sm:$0xff]
      %v2902 = vld [vmem:[#allocation2 + $0x8c] sm:$0xf]
      %v2903 = vld [vmem:[#allocation2 + $0x90] sm:$0xff]
      %v2904 = vld [vmem:[#allocation2 + $0x98] sm:$0xff]
      %v2905 = vld [vmem:[#allocation2 + $0xa0] sm:$0xff]
      %v2906 = vld [vmem:[#allocation2 + $0xa8] sm:$0xff]
      %v2907 = vld [vmem:[#allocation2 + $0xb0] sm:$0xf]
      %v2908 = vld [vmem:[#allocation2 + $0xb4] sm:$0xff]
      %v2909 = vld [vmem:[#allocation2 + $0xbc] sm:$0xff]
      %v2910 = vld [vmem:[#allocation2 + $0xc4] sm:$0xff]
      %v2911 = vld [vmem:[#allocation2 + $0xcc] sm:$0xff]
      %v2912 = vld [vmem:[#allocation2 + $0xd4] sm:$0xf]
      %v2913 = vld [vmem:[#allocation2 + $0xd8] sm:$0xff]
      %v2914 = vld [vmem:[#allocation2 + $0xe0] sm:$0xff]
      %v2915 = vld [vmem:[#allocation2 + $0xe8] sm:$0xff]
      %v2916 = vld [vmem:[#allocation2 + $0xf0] sm:$0xff]
      %v2917 = vld [vmem:[#allocation2 + $0xf8] sm:$0xf]
      %v2918 = vld [vmem:[#allocation2 + $0xfc] sm:$0xff]
      %v2919 = vld [vmem:[#allocation2 + $0x104] sm:$0xff]
      %v2920 = vld [vmem:[#allocation2 + $0x10c] sm:$0xff]
      %v2921 = vld [vmem:[#allocation2 + $0x114] sm:$0xff]
      %v2922 = vld [vmem:[#allocation2 + $0x11c] sm:$0xf]
      %v2923 = vld [vmem:[#allocation2 + $0x120] sm:$0xff]
      %v2924 = vld [vmem:[#allocation2 + $0x128] sm:$0xff]
      %v2925 = vld [vmem:[#allocation2 + $0x130] sm:$0xff]
      %v2926 = vld [vmem:[#allocation2 + $0x138] sm:$0xff]
      %v2927 = vld [vmem:[#allocation2 + $0x140] sm:$0xf]
      %v2928 = vld [vmem:[#allocation2 + $0x144] sm:$0xff]
      %v2929 = vld [vmem:[#allocation2 + $0x14c] sm:$0xff]
      %v2930 = vld [vmem:[#allocation2 + $0x154] sm:$0xff]
      %v2931 = vld [vmem:[#allocation2 + $0x15c] sm:$0xff]
      %v2932 = vld [vmem:[#allocation2 + $0x164] sm:$0xf]
      %v2933 = vld [vmem:[#allocation2 + $0x168] sm:$0xff]
      %v2934 = vld [vmem:[#allocation2 + $0x170] sm:$0xff]
      %v2935 = vld [vmem:[#allocation2 + $0x178] sm:$0xff]
      %v2936 = vld [vmem:[#allocation2 + $0x180] sm:$0xff]
      %v2937 = vld [vmem:[#allocation2 + $0x188] sm:$0xf]
      %v2938 = vld [vmem:[#allocation2 + $0x18c] sm:$0xff]
      %v2939 = vld [vmem:[#allocation2 + $0x194] sm:$0xff]
      %v2940 = vld [vmem:[#allocation2 + $0x19c] sm:$0xff]
      %v2941 = vld [vmem:[#allocation2 + $0x1a4] sm:$0xff]
      %v2942 = vld [vmem:[#allocation2 + $0x1ac] sm:$0xf]
      %v2943 = vld [vmem:[#allocation2 + $0x1b0] sm:$0xff]
      %v2944 = vld [vmem:[#allocation2 + $0x1b8] sm:$0xff]
      %v2945 = vld [vmem:[#allocation2 + $0x1c0] sm:$0xff]
      %v2946 = vld [vmem:[#allocation2 + $0x1c8] sm:$0xff]
      %v2947 = vld [vmem:[#allocation2 + $0x1d0] sm:$0xf]
      %v2948 = vld [vmem:[#allocation2 + $0x1d4] sm:$0xff]
      %v2949 = vld [vmem:[#allocation2 + $0x1dc] sm:$0xff]
      %v2950 = vld [vmem:[#allocation2 + $0x1e4] sm:$0xff]
      %v2951 = vld [vmem:[#allocation2 + $0x1ec] sm:$0xff]
      %v2952 = vld [vmem:[#allocation2 + $0x1f4] sm:$0xf]
      %v2953 = vld [vmem:[#allocation2 + $0x1f8] sm:$0xff]
      %v2954 = vld [vmem:[#allocation2 + $0x200] sm:$0xff]
      %v2955 = vld [vmem:[#allocation2 + $0x208] sm:$0xff]
      %v2956 = vld [vmem:[#allocation2 + $0x210] sm:$0xff]
      %v2957 = vld [vmem:[#allocation2 + $0x218] sm:$0xf]
      %v2958 = vld [vmem:[#allocation2 + $0x21c] sm:$0xff]
      %v2959 = vld [vmem:[#allocation2 + $0x224] sm:$0xff]
      %v2960 = vld [vmem:[#allocation2 + $0x22c] sm:$0xff]
      %v2961 = vld [vmem:[#allocation2 + $0x234] sm:$0xff]
      %v2962 = vld [vmem:[#allocation2 + $0x23c] sm:$0xf]
      %v2963 = vld [vmem:[#allocation2 + $0x240] sm:$0xff]
      %v2964 = vld [vmem:[#allocation2 + $0x248] sm:$0xff]
      %v2965 = vld [vmem:[#allocation2 + $0x250] sm:$0xff]
      %v2966 = vld [vmem:[#allocation2 + $0x258] sm:$0xff]
      %v2967 = vld [vmem:[#allocation2 + $0x260] sm:$0xf]
      %v2968 = vld [vmem:[#allocation2 + $0x264] sm:$0xff]
      %v2969 = vld [vmem:[#allocation2 + $0x26c] sm:$0xff]
      %v2970 = vld [vmem:[#allocation2 + $0x274] sm:$0xff]
      %v2971 = vld [vmem:[#allocation2 + $0x27c] sm:$0xff]
      %v2972 = vld [vmem:[#allocation2 + $0x284] sm:$0xf]
      %v2973 = vld [vmem:[#allocation2 + $0x288] sm:$0xff]
      %v2974 = vld [vmem:[#allocation2 + $0x290] sm:$0xff]
      %v2975 = vld [vmem:[#allocation2 + $0x298] sm:$0xff]
      %v2976 = vld [vmem:[#allocation2 + $0x2a0] sm:$0xff]
      %v2977 = vld [vmem:[#allocation2 + $0x2a8] sm:$0xf]
      %v2978 = vld [vmem:[#allocation2 + $0x2ac] sm:$0xff]
      %v2979 = vld [vmem:[#allocation2 + $0x2b4] sm:$0xff]
      %v2980 = vld [vmem:[#allocation2 + $0x2bc] sm:$0xff]
      %v2981 = vld [vmem:[#allocation2 + $0x2c4] sm:$0xff]
      %v2982 = vld [vmem:[#allocation2 + $0x2cc] sm:$0xf]
      %v2983 = vld [vmem:[#allocation2 + $0x2d0] sm:$0xff]
      %v2984 = vld [vmem:[#allocation2 + $0x2d8] sm:$0xff]
      %v2985 = vld [vmem:[#allocation2 + $0x2e0] sm:$0xff]
      %v2986 = vld [vmem:[#allocation2 + $0x2e8] sm:$0xff]
      %v2987 = vld [vmem:[#allocation2 + $0x2f0] sm:$0xf]
      %v2988 = vld [vmem:[#allocation2 + $0x2f4] sm:$0xff]
      %v2989 = vld [vmem:[#allocation2 + $0x2fc] sm:$0xff]
      %v2990 = vld [vmem:[#allocation2 + $0x304] sm:$0xff]
      %v2991 = vld [vmem:[#allocation2 + $0x30c] sm:$0xff]
      %v2992 = vld [vmem:[#allocation2 + $0x314] sm:$0xf]
      %v2993 = vld [vmem:[#allocation2 + $0x318] sm:$0xff]
      %v2994 = vld [vmem:[#allocation2 + $0x320] sm:$0xff]
      %v2995 = vld [vmem:[#allocation2 + $0x328] sm:$0xff]
      %v2996 = vld [vmem:[#allocation2 + $0x330] sm:$0xff]
      %v2997 = vld [vmem:[#allocation2 + $0x338] sm:$0xf]
      %v2998 = vld [vmem:[#allocation2 + $0x33c] sm:$0xff]
      %v2999 = vld [vmem:[#allocation2 + $0x344] sm:$0xff]
      %v3000 = vld [vmem:[#allocation2 + $0x34c] sm:$0xff]
      %v3001 = vld [vmem:[#allocation2 + $0x354] sm:$0xff]
      %v3002 = vld [vmem:[#allocation2 + $0x35c] sm:$0xf]
      %v3003 = vld [vmem:[#allocation2 + $0x360] sm:$0xff]
      %v3004 = vld [vmem:[#allocation2 + $0x368] sm:$0xff]
      %v3005 = vld [vmem:[#allocation2 + $0x370] sm:$0xff]
      %v3006 = vld [vmem:[#allocation2 + $0x378] sm:$0xff]
      %v3007 = vld [vmem:[#allocation2 + $0x380] sm:$0xf]
      %v3008 = vld [vmem:[#allocation2 + $0x384] sm:$0xff]
      %v3009 = vld [vmem:[#allocation2 + $0x38c] sm:$0xff]
      %v3010 = vld [vmem:[#allocation2 + $0x394] sm:$0xff]
      %v3011 = vld [vmem:[#allocation2 + $0x39c] sm:$0xff]
      %v3012 = vld [vmem:[#allocation2 + $0x3a4] sm:$0xf]
      %v3013 = vld [vmem:[#allocation2 + $0x3a8] sm:$0xff]
      %v3014 = vld [vmem:[#allocation2 + $0x3b0] sm:$0xff]
      %v3015 = vld [vmem:[#allocation2 + $0x3b8] sm:$0xff]
      %v3016 = vld [vmem:[#allocation2 + $0x3c0] sm:$0xff]
      %v3017 = vld [vmem:[#allocation2 + $0x3c8] sm:$0xf]
      %v3018 = vld [vmem:[#allocation2 + $0x3cc] sm:$0xff]
      %v3019 = vld [vmem:[#allocation2 + $0x3d4] sm:$0xff]
      %v3020 = vld [vmem:[#allocation2 + $0x3dc] sm:$0xff]
      %v3021 = vld [vmem:[#allocation2 + $0x3e4] sm:$0xff]
      %v3022 = vld [vmem:[#allocation2 + $0x3ec] sm:$0xf]
      %v3023 = vld [vmem:[#allocation2 + $0x3f0] sm:$0xff]
      %v3024 = vld [vmem:[#allocation2 + $0x3f8] sm:$0xff]
      %v3025 = vld [vmem:[#allocation2 + $0x400] sm:$0xff]
      %v3026 = vld [vmem:[#allocation2 + $0x408] sm:$0xff]
      %v3027 = vld [vmem:[#allocation2 + $0x410] sm:$0xf]
      %v3028 = vld [vmem:[#allocation2 + $0x414] sm:$0xff]
      %v3029 = vld [vmem:[#allocation2 + $0x41c] sm:$0xff]
      %v3030 = vld [vmem:[#allocation2 + $0x424] sm:$0xff]
      %v3031 = vld [vmem:[#allocation2 + $0x42c] sm:$0xff]
      %v3032 = vld [vmem:[#allocation2 + $0x434] sm:$0xf]
      %v3033 = vld [vmem:[#allocation2 + $0x438] sm:$0xff]
      %v3034 = vld [vmem:[#allocation2 + $0x440] sm:$0xff]
      %v3035 = vld [vmem:[#allocation2 + $0x448] sm:$0xff]
      %v3036 = vld [vmem:[#allocation2 + $0x450] sm:$0xff]
      %v3037 = vld [vmem:[#allocation2 + $0x458] sm:$0xf]
      %v3038 = vld [vmem:[#allocation2 + $0x45c] sm:$0xff]
      %v3039 = vld [vmem:[#allocation2 + $0x464] sm:$0xff]
      %v3040 = vld [vmem:[#allocation2 + $0x46c] sm:$0xff]
      %v3041 = vld [vmem:[#allocation2 + $0x474] sm:$0xff]
      %v3042 = vld [vmem:[#allocation2 + $0x47c] sm:$0xf]
      %v3043 = vld [vmem:[#allocation2 + $0x480] sm:$0xff]
      %v3044 = vld [vmem:[#allocation2 + $0x488] sm:$0xff]
      %v3045 = vld [vmem:[#allocation2 + $0x490] sm:$0xff]
      %v3046 = vld [vmem:[#allocation2 + $0x498] sm:$0xff]
      %v3047 = vld [vmem:[#allocation2 + $0x4a0] sm:$0xf]
      %v3048 = vld [vmem:[#allocation2 + $0x4a4] sm:$0xff]
      %v3049 = vld [vmem:[#allocation2 + $0x4ac] sm:$0xff]
      %v3050 = vld [vmem:[#allocation2 + $0x4b4] sm:$0xff]
      %v3051 = vld [vmem:[#allocation2 + $0x4bc] sm:$0xff]
      %v3052 = vld [vmem:[#allocation2 + $0x4c4] sm:$0xf]
      %v3053 = vld [vmem:[#allocation2 + $0x4c8] sm:$0xff]
      %v3054 = vld [vmem:[#allocation2 + $0x4d0] sm:$0xff]
      %v3055 = vld [vmem:[#allocation2 + $0x4d8] sm:$0xff]
      %v3056 = vld [vmem:[#allocation2 + $0x4e0] sm:$0xff]
      %v3057 = vld [vmem:[#allocation2 + $0x4e8] sm:$0xf]
      %v3058 = vld [vmem:[#allocation2 + $0x4ec] sm:$0xff]
      %v3059 = vld [vmem:[#allocation2 + $0x4f4] sm:$0xff]
      %v3060 = vld [vmem:[#allocation2 + $0x4fc] sm:$0xff]
      %v3061 = vld [vmem:[#allocation2 + $0x504] sm:$0xff]
      %v3062 = vld [vmem:[#allocation2 + $0x50c] sm:$0xf]
      %v3063 = vld [vmem:[#allocation2 + $0x510] sm:$0xff]
      %v3064 = vld [vmem:[#allocation2 + $0x518] sm:$0xff]
      %v3065 = vld [vmem:[#allocation2 + $0x520] sm:$0xff]
      %v3066 = vld [vmem:[#allocation2 + $0x528] sm:$0xff]
      %v3067 = vld [vmem:[#allocation2 + $0x530] sm:$0xf]
      %v3068 = vld [vmem:[#allocation2 + $0x534] sm:$0xff]
      %v3069 = vld [vmem:[#allocation2 + $0x53c] sm:$0xff]
      %v3070 = vld [vmem:[#allocation2 + $0x544] sm:$0xff]
      %v3071 = vld [vmem:[#allocation2 + $0x54c] sm:$0xff]
      %v3072 = vld [vmem:[#allocation2 + $0x554] sm:$0xf]
      %v3073 = vld [vmem:[#allocation2 + $0x558] sm:$0xff]
      %v3074 = vld [vmem:[#allocation2 + $0x560] sm:$0xff]
      %v3075 = vld [vmem:[#allocation2 + $0x568] sm:$0xff]
      %v3076 = vld [vmem:[#allocation2 + $0x570] sm:$0xff]
      %v3077 = vld [vmem:[#allocation2 + $0x578] sm:$0xf]
      %v3078 = vld [vmem:[#allocation2 + $0x57c] sm:$0xff]
      %v3079 = vld [vmem:[#allocation2 + $0x584] sm:$0xff]
      %v3080 = vld [vmem:[#allocation2 + $0x58c] sm:$0xff]
      %v3081 = vld [vmem:[#allocation2 + $0x594] sm:$0xff]
      %v3082 = vld [vmem:[#allocation2 + $0x59c] sm:$0xf]
      %v3083 = vld [vmem:[#allocation2 + $0x5a0] sm:$0xff]
      %v3084 = vld [vmem:[#allocation2 + $0x5a8] sm:$0xff]
      %v3085 = vld [vmem:[#allocation2 + $0x5b0] sm:$0xff]
      %v3086 = vld [vmem:[#allocation2 + $0x5b8] sm:$0xff]
      %v3087 = vld [vmem:[#allocation2 + $0x5c0] sm:$0xf]
      %v3088 = vld [vmem:[#allocation2 + $0x5c4] sm:$0xff]
      %v3089 = vld [vmem:[#allocation2 + $0x5cc] sm:$0xff]
      %v3090 = vld [vmem:[#allocation2 + $0x5d4] sm:$0xff]
      %v3091 = vld [vmem:[#allocation2 + $0x5dc] sm:$0xff]
      %v3092 = vld [vmem:[#allocation2 + $0x5e4] sm:$0xf]
      %v3093 = vld [vmem:[#allocation2 + $0x5e8] sm:$0xff]
      %v3094 = vld [vmem:[#allocation2 + $0x5f0] sm:$0xff]
      %v3095 = vld [vmem:[#allocation2 + $0x5f8] sm:$0xff]
      %v3096 = vld [vmem:[#allocation2 + $0x600] sm:$0xff]
      %v3097 = vld [vmem:[#allocation2 + $0x608] sm:$0xf]
      %v3098 = vld [vmem:[#allocation2 + $0x60c] sm:$0xff]
      %v3099 = vld [vmem:[#allocation2 + $0x614] sm:$0xff]
      %v3100 = vld [vmem:[#allocation2 + $0x61c] sm:$0xff]
      %v3101 = vld [vmem:[#allocation2 + $0x624] sm:$0xff]
      %v3102 = vld [vmem:[#allocation2 + $0x62c] sm:$0xf]
      %v3103 = vld [vmem:[#allocation2 + $0x630] sm:$0xff]
      %v3104 = vld [vmem:[#allocation2 + $0x638] sm:$0xff]
      %v3105 = vld [vmem:[#allocation2 + $0x640] sm:$0xff]
      %v3106 = vld [vmem:[#allocation2 + $0x648] sm:$0xff]
      %v3107 = vld [vmem:[#allocation2 + $0x650] sm:$0xf]
      %v3108 = vld [vmem:[#allocation2 + $0x654] sm:$0xff]
      %v3109 = vld [vmem:[#allocation2 + $0x65c] sm:$0xff]
      %v3110 = vld [vmem:[#allocation2 + $0x664] sm:$0xff]
      %v3111 = vld [vmem:[#allocation2 + $0x66c] sm:$0xff]
      %v3112 = vld [vmem:[#allocation2 + $0x674] sm:$0xf]
      %v3113 = vld [vmem:[#allocation2 + $0x678] sm:$0xff]
      %v3114 = vld [vmem:[#allocation2 + $0x680] sm:$0xff]
      %v3115 = vld [vmem:[#allocation2 + $0x688] sm:$0xff]
      %v3116 = vld [vmem:[#allocation2 + $0x690] sm:$0xff]
      %v3117 = vld [vmem:[#allocation2 + $0x698] sm:$0xf]
      %v3118 = vld [vmem:[#allocation2 + $0x69c] sm:$0xff]
      %v3119 = vld [vmem:[#allocation2 + $0x6a4] sm:$0xff]
      %v3120 = vld [vmem:[#allocation2 + $0x6ac] sm:$0xff]
      %v3121 = vld [vmem:[#allocation2 + $0x6b4] sm:$0xff]
      %v3122 = vld [vmem:[#allocation2 + $0x6bc] sm:$0xf]
      %v3123 = vld [vmem:[%s5] sm:$0xf]
      %v3124 = vld [vmem:[%s5 + $0x4] sm:$0xf]
      %v3125 = vld [vmem:[%s5 + $0x8] sm:$0xf]
      %v3126 = vld [vmem:[%s5 + $0xc] sm:$0xf]
      %v3127 = vld [vmem:[%s5 + $0x10] sm:$0xf]
      %v3128 = vld [vmem:[%s5 + $0x14] sm:$0xf]
      %v3129 = vld [vmem:[%s5 + $0x18] sm:$0xf]
      %v3130 = vld [vmem:[%s5 + $0x1c] sm:$0xf]
      %v3131 = vld [vmem:[%s5 + $0x20] sm:$0xf]
      %v3132 = vld [vmem:[%s5 + $0x24] sm:$0xf]
      %v3133 = vld [vmem:[%s5 + $0x28] sm:$0xf]
      %v3134 = vld [vmem:[%s5 + $0x2c] sm:$0xf]
      %v3135 = vld [vmem:[%s5 + $0x30] sm:$0xf]
      %v3136 = vld [vmem:[%s5 + $0x34] sm:$0xf]
      %v3137 = vld [vmem:[%s5 + $0x38] sm:$0xf]
      %v3138 = vld [vmem:[%s5 + $0x3c] sm:$0xf]
      %v3139 = vld [vmem:[%s5 + $0x40] sm:$0xf]
      %v3140 = vld [vmem:[%s5 + $0x44] sm:$0xf]
      %v3141 = vld [vmem:[%s5 + $0x48] sm:$0xf]
      %v3142 = vld [vmem:[%s5 + $0x4c] sm:$0xf]
      %v3143 = vld [vmem:[%s5 + $0x50] sm:$0xf]
      %v3144 = vld [vmem:[%s5 + $0x54] sm:$0xf]
      %v3145 = vld [vmem:[%s5 + $0x58] sm:$0xf]
      %v3146 = vld [vmem:[%s5 + $0x5c] sm:$0xf]
      %v3147 = vld [vmem:[%s5 + $0x60] sm:$0xf]
      %v3148 = vld [vmem:[%s5 + $0x64] sm:$0xf]
      %v3149 = vld [vmem:[%s5 + $0x68] sm:$0xf]
      %v3150 = vld [vmem:[%s5 + $0x6c] sm:$0xf]
      %v3151 = vld [vmem:[%s5 + $0x70] sm:$0xf]
      %v3152 = vld [vmem:[%s5 + $0x74] sm:$0xf]
      %v3153 = vld [vmem:[%s5 + $0x78] sm:$0xf]
      %v3154 = vld [vmem:[%s5 + $0x7c] sm:$0xf]
      %v3155 = vld [vmem:[%s5 + $0x80] sm:$0xf]
      %v3156 = vld [vmem:[%s5 + $0x84] sm:$0xf]
      %v3157 = vld [vmem:[%s5 + $0x88] sm:$0xf]
      %v3158 = vld [vmem:[%s5 + $0x8c] sm:$0xf]
      %v3159 = vld [vmem:[%s5 + $0x90] sm:$0xf]
      %v3160 = vld [vmem:[%s5 + $0x94] sm:$0xf]
      %v3161 = vld [vmem:[%s5 + $0x98] sm:$0xf]
      %v3162 = vld [vmem:[%s5 + $0x9c] sm:$0xf]
      %v3163 = vld [vmem:[%s5 + $0xa0] sm:$0xf]
      %v3164 = vld [vmem:[%s5 + $0xa4] sm:$0xf]
      %v3165 = vld [vmem:[%s5 + $0xa8] sm:$0xf]
      %v3166 = vld [vmem:[%s5 + $0xac] sm:$0xf]
      %v3167 = vld [vmem:[%s5 + $0xb0] sm:$0xf]
      %v3168 = vld [vmem:[%s5 + $0xb4] sm:$0xf]
      %v3169 = vld [vmem:[%s5 + $0xb8] sm:$0xf]
      %v3170 = vld [vmem:[%s5 + $0xbc] sm:$0xf]
      %v3171 = vld [vmem:[%s5 + $0xc0] sm:$0xf]
      %v3172 = vld [vmem:[%s5 + $0xc4] sm:$0xf]
      %v3173 = vld [vmem:[%s5 + $0xc8] sm:$0xf]
      %v3174 = vld [vmem:[%s5 + $0xcc] sm:$0xf]
      %v3175 = vld [vmem:[%s5 + $0xd0] sm:$0xf]
      %v3176 = vld [vmem:[%s5 + $0xd4] sm:$0xf]
      %v3177 = vld [vmem:[%s5 + $0xd8] sm:$0xf]
      %v3178 = vld [vmem:[%s5 + $0xdc] sm:$0xf]
      %v3179 = vld [vmem:[%s5 + $0xe0] sm:$0xf]
      %v3180 = vld [vmem:[%s5 + $0xe4] sm:$0xf]
      %v3181 = vld [vmem:[%s5 + $0xe8] sm:$0xf]
      %v3182 = vld [vmem:[%s5 + $0xec] sm:$0xf]
      %v3183 = vld [vmem:[%s5 + $0xf0] sm:$0xf]
      %v3184 = vld [vmem:[%s5 + $0xf4] sm:$0xf]
      %v3185 = vld [vmem:[%s5 + $0xf8] sm:$0xf]
      %v3186 = vld [vmem:[%s5 + $0xfc] sm:$0xf]
      %v3187 = vld [vmem:[%s5 + $0x100] sm:$0xf]
      %v3188 = vld [vmem:[%s5 + $0x104] sm:$0xf]
      %v3189 = vld [vmem:[%s5 + $0x108] sm:$0xf]
      %v3190 = vld [vmem:[%s5 + $0x10c] sm:$0xf]
      %v3191 = vld [vmem:[%s5 + $0x110] sm:$0xf]
      %v3192 = vld [vmem:[%s5 + $0x114] sm:$0xf]
      %v3193 = vld [vmem:[%s5 + $0x118] sm:$0xf]
      %v3194 = vld [vmem:[%s5 + $0x11c] sm:$0xf]
      %v3195 = vld [vmem:[%s5 + $0x120] sm:$0xf]
      %v3196 = vld [vmem:[%s5 + $0x124] sm:$0xf]
      %v3197 = vld [vmem:[%s5 + $0x128] sm:$0xf]
      %v3198 = vld [vmem:[%s5 + $0x12c] sm:$0xf]
      %v3199 = vld [vmem:[%s5 + $0x130] sm:$0xf]
      %v3200 = vld [vmem:[%s5 + $0x134] sm:$0xf]
      %v3201 = vld [vmem:[%s5 + $0x138] sm:$0xf]
      %v3202 = vld [vmem:[%s5 + $0x13c] sm:$0xf]
      %v3203 = vld [vmem:[%s5 + $0x140] sm:$0xf]
      %v3204 = vld [vmem:[%s5 + $0x144] sm:$0xf]
      %v3205 = vld [vmem:[%s5 + $0x148] sm:$0xf]
      %v3206 = vld [vmem:[%s5 + $0x14c] sm:$0xf]
      %v3207 = vld [vmem:[%s5 + $0x150] sm:$0xf]
      %v3208 = vld [vmem:[%s5 + $0x154] sm:$0xf]
      %v3209 = vld [vmem:[%s5 + $0x158] sm:$0xf]
      %v3210 = vld [vmem:[%s5 + $0x15c] sm:$0xf]
      %v3211 = vld [vmem:[%s5 + $0x160] sm:$0xf]
      %v3212 = vld [vmem:[%s5 + $0x164] sm:$0xf]
      %v3213 = vld [vmem:[%s5 + $0x168] sm:$0xf]
      %v3214 = vld [vmem:[%s5 + $0x16c] sm:$0xf]
      %v3215 = vld [vmem:[%s5 + $0x170] sm:$0xf]
      %v3216 = vld [vmem:[%s5 + $0x174] sm:$0xf]
      %v3217 = vld [vmem:[%s5 + $0x178] sm:$0xf]
      %v3218 = vld [vmem:[%s5 + $0x17c] sm:$0xf]
      %v3219 = vld [vmem:[%s5 + $0x180] sm:$0xf]
      %v3220 = vld [vmem:[%s5 + $0x184] sm:$0xf]
      %v3221 = vld [vmem:[%s5 + $0x188] sm:$0xf]
      %v3222 = vld [vmem:[%s5 + $0x18c] sm:$0xf]
      %v3223 = vld [vmem:[%s5 + $0x190] sm:$0xf]
      %v3224 = vld [vmem:[%s5 + $0x194] sm:$0xf]
      %v3225 = vld [vmem:[%s5 + $0x198] sm:$0xf]
      %v3226 = vld [vmem:[%s5 + $0x19c] sm:$0xf]
      %v3227 = vld [vmem:[%s5 + $0x1a0] sm:$0xf]
      %v3228 = vld [vmem:[%s5 + $0x1a4] sm:$0xf]
      %v3229 = vld [vmem:[%s5 + $0x1a8] sm:$0xf]
      %v3230 = vld [vmem:[%s5 + $0x1ac] sm:$0xf]
      %v3231 = vld [vmem:[%s5 + $0x1b0] sm:$0xf]
      %v3232 = vld [vmem:[%s5 + $0x1b4] sm:$0xf]
      %v3233 = vld [vmem:[%s5 + $0x1b8] sm:$0xf]
      %v3234 = vld [vmem:[%s5 + $0x1bc] sm:$0xf]
      %v3235 = vld [vmem:[%s5 + $0x1c0] sm:$0xf]
      %v3236 = vld [vmem:[%s5 + $0x1c4] sm:$0xf]
      %v3237 = vld [vmem:[%s5 + $0x1c8] sm:$0xf]
      %v3238 = vld [vmem:[%s5 + $0x1cc] sm:$0xf]
      %v3239 = vld [vmem:[%s5 + $0x1d0] sm:$0xf]
      %v3240 = vld [vmem:[%s5 + $0x1d4] sm:$0xf]
      %v3241 = vld [vmem:[%s5 + $0x1d8] sm:$0xf]
      %v3242 = vld [vmem:[%s5 + $0x1dc] sm:$0xf]
      %v3243 = vld [vmem:[%s5 + $0x1e0] sm:$0xf]
      %v3244 = vld [vmem:[%s5 + $0x1e4] sm:$0xf]
      %v3245 = vld [vmem:[%s5 + $0x1e8] sm:$0xf]
      %v3246 = vld [vmem:[%s5 + $0x1ec] sm:$0xf]
      %v3247 = vld [vmem:[%s5 + $0x1f0] sm:$0xf]
      %v3248 = vld [vmem:[%s5 + $0x1f4] sm:$0xf]
      %v3249 = vld [vmem:[%s5 + $0x1f8] sm:$0xf]
      %v3250 = vld [vmem:[%s5 + $0x1fc] sm:$0xf]
      %v3251 = vld [vmem:[%s5 + $0x200] sm:$0xf]
      %v3252 = vld [vmem:[%s5 + $0x204] sm:$0xf]
      %v3253 = vld [vmem:[%s5 + $0x208] sm:$0xf]
      %v3254 = vld [vmem:[%s5 + $0x20c] sm:$0xf]
      %v3255 = vld [vmem:[%s5 + $0x210] sm:$0xf]
      %v3256 = vld [vmem:[%s5 + $0x214] sm:$0xf]
      %v3257 = vld [vmem:[%s5 + $0x218] sm:$0xf]
      %v3258 = vld [vmem:[%s5 + $0x21c] sm:$0xf]
      %v3259 = vld [vmem:[%s5 + $0x220] sm:$0xf]
      %v3260 = vld [vmem:[%s5 + $0x224] sm:$0xf]
      %v3261 = vld [vmem:[%s5 + $0x228] sm:$0xf]
      %v3262 = vld [vmem:[%s5 + $0x22c] sm:$0xf]
      %v3263 = vld [vmem:[%s5 + $0x230] sm:$0xf]
      %v3264 = vld [vmem:[%s5 + $0x234] sm:$0xf]
      %v3265 = vld [vmem:[%s5 + $0x238] sm:$0xf]
      %v3266 = vld [vmem:[%s5 + $0x23c] sm:$0xf]
      %v3507 = vunpack.c.l.b16 %v2883
      %v3508 = vunpack.c.h.b16 %v2883
      %v3509 = vunpack.c.l.b16 %v2884
      %v3510 = vunpack.c.h.b16 %v2884
      %v3511 = vunpack.c.l.b16 %v2885
      %v3512 = vunpack.c.h.b16 %v2885
      %v3513 = vunpack.c.l.b16 %v2886
      %v3514 = vunpack.c.h.b16 %v2886
      %v3515 = vunpack.c.l.b16 %v2887
      %v3516 = vunpack.c.l.b16 %v2888
      %v3517 = vunpack.c.h.b16 %v2888
      %v3518 = vunpack.c.l.b16 %v2889
      %v3519 = vunpack.c.h.b16 %v2889
      %v3520 = vunpack.c.l.b16 %v2890
      %v3521 = vunpack.c.h.b16 %v2890
      %v3522 = vunpack.c.l.b16 %v2891
      %v3523 = vunpack.c.h.b16 %v2891
      %v3524 = vunpack.c.l.b16 %v2892
      %v3525 = vunpack.c.l.b16 %v2893
      %v3526 = vunpack.c.h.b16 %v2893
      %v3527 = vunpack.c.l.b16 %v2894
      %v3528 = vunpack.c.h.b16 %v2894
      %v3529 = vunpack.c.l.b16 %v2895
      %v3530 = vunpack.c.h.b16 %v2895
      %v3531 = vunpack.c.l.b16 %v2896
      %v3532 = vunpack.c.h.b16 %v2896
      %v3533 = vunpack.c.l.b16 %v2897
      %v3534 = vunpack.c.l.b16 %v2898
      %v3535 = vunpack.c.h.b16 %v2898
      %v3536 = vunpack.c.l.b16 %v2899
      %v3537 = vunpack.c.h.b16 %v2899
      %v3538 = vunpack.c.l.b16 %v2900
      %v3539 = vunpack.c.h.b16 %v2900
      %v3540 = vunpack.c.l.b16 %v2901
      %v3541 = vunpack.c.h.b16 %v2901
      %v3542 = vunpack.c.l.b16 %v2902
      %v3543 = vunpack.c.l.b16 %v2903
      %v3544 = vunpack.c.h.b16 %v2903
      %v3545 = vunpack.c.l.b16 %v2904
      %v3546 = vunpack.c.h.b16 %v2904
      %v3547 = vunpack.c.l.b16 %v2905
      %v3548 = vunpack.c.h.b16 %v2905
      %v3549 = vunpack.c.l.b16 %v2906
      %v3550 = vunpack.c.h.b16 %v2906
      %v3551 = vunpack.c.l.b16 %v2907
      %v3552 = vunpack.c.l.b16 %v2908
      %v3553 = vunpack.c.h.b16 %v2908
      %v3554 = vunpack.c.l.b16 %v2909
      %v3555 = vunpack.c.h.b16 %v2909
      %v3556 = vunpack.c.l.b16 %v2910
      %v3557 = vunpack.c.h.b16 %v2910
      %v3558 = vunpack.c.l.b16 %v2911
      %v3559 = vunpack.c.h.b16 %v2911
      %v3560 = vunpack.c.l.b16 %v2912
      %v3561 = vunpack.c.l.b16 %v2913
      %v3562 = vunpack.c.h.b16 %v2913
      %v3563 = vunpack.c.l.b16 %v2914
      %v3564 = vunpack.c.h.b16 %v2914
      %v3565 = vunpack.c.l.b16 %v2915
      %v3566 = vunpack.c.h.b16 %v2915
      %v3567 = vunpack.c.l.b16 %v2916
      %v3568 = vunpack.c.h.b16 %v2916
      %v3569 = vunpack.c.l.b16 %v2917
      %v3570 = vunpack.c.l.b16 %v2918
      %v3571 = vunpack.c.h.b16 %v2918
      %v3572 = vunpack.c.l.b16 %v2919
      %v3573 = vunpack.c.h.b16 %v2919
      %v3574 = vunpack.c.l.b16 %v2920
      %v3575 = vunpack.c.h.b16 %v2920
      %v3576 = vunpack.c.l.b16 %v2921
      %v3577 = vunpack.c.h.b16 %v2921
      %v3578 = vunpack.c.l.b16 %v2922
      %v3579 = vunpack.c.l.b16 %v2923
      %v3580 = vunpack.c.h.b16 %v2923
      %v3581 = vunpack.c.l.b16 %v2924
      %v3582 = vunpack.c.h.b16 %v2924
      %v3583 = vunpack.c.l.b16 %v2925
      %v3584 = vunpack.c.h.b16 %v2925
      %v3585 = vunpack.c.l.b16 %v2926
      %v3586 = vunpack.c.h.b16 %v2926
      %v3587 = vunpack.c.l.b16 %v2927
      %v3588 = vunpack.c.l.b16 %v2928
      %v3589 = vunpack.c.h.b16 %v2928
      %v3590 = vunpack.c.l.b16 %v2929
      %v3591 = vunpack.c.h.b16 %v2929
      %v3592 = vunpack.c.l.b16 %v2930
      %v3593 = vunpack.c.h.b16 %v2930
      %v3594 = vunpack.c.l.b16 %v2931
      %v3595 = vunpack.c.h.b16 %v2931
      %v3596 = vunpack.c.l.b16 %v2932
      %v3597 = vunpack.c.l.b16 %v2933
      %v3598 = vunpack.c.h.b16 %v2933
      %v3599 = vunpack.c.l.b16 %v2934
      %v3600 = vunpack.c.h.b16 %v2934
      %v3601 = vunpack.c.l.b16 %v2935
      %v3602 = vunpack.c.h.b16 %v2935
      %v3603 = vunpack.c.l.b16 %v2936
      %v3604 = vunpack.c.h.b16 %v2936
      %v3605 = vunpack.c.l.b16 %v2937
      %v3606 = vunpack.c.l.b16 %v2938
      %v3607 = vunpack.c.h.b16 %v2938
      %v3608 = vunpack.c.l.b16 %v2939
      %v3609 = vunpack.c.h.b16 %v2939
      %v3610 = vunpack.c.l.b16 %v2940
      %v3611 = vunpack.c.h.b16 %v2940
      %v3612 = vunpack.c.l.b16 %v2941
      %v3613 = vunpack.c.h.b16 %v2941
      %v3614 = vunpack.c.l.b16 %v2942
      %v3615 = vunpack.c.l.b16 %v2943
      %v3616 = vunpack.c.h.b16 %v2943
      %v3617 = vunpack.c.l.b16 %v2944
      %v3618 = vunpack.c.h.b16 %v2944
      %v3619 = vunpack.c.l.b16 %v2945
      %v3620 = vunpack.c.h.b16 %v2945
      %v3621 = vunpack.c.l.b16 %v2946
      %v3622 = vunpack.c.h.b16 %v2946
      %v3623 = vunpack.c.l.b16 %v2947
      %v3624 = vunpack.c.l.b16 %v2948
      %v3625 = vunpack.c.h.b16 %v2948
      %v3626 = vunpack.c.l.b16 %v2949
      %v3627 = vunpack.c.h.b16 %v2949
      %v3628 = vunpack.c.l.b16 %v2950
      %v3629 = vunpack.c.h.b16 %v2950
      %v3630 = vunpack.c.l.b16 %v2951
      %v3631 = vunpack.c.h.b16 %v2951
      %v3632 = vunpack.c.l.b16 %v2952
      %v3633 = vunpack.c.l.b16 %v2953
      %v3634 = vunpack.c.h.b16 %v2953
      %v3635 = vunpack.c.l.b16 %v2954
      %v3636 = vunpack.c.h.b16 %v2954
      %v3637 = vunpack.c.l.b16 %v2955
      %v3638 = vunpack.c.h.b16 %v2955
      %v3639 = vunpack.c.l.b16 %v2956
      %v3640 = vunpack.c.h.b16 %v2956
      %v3641 = vunpack.c.l.b16 %v2957
      %v3642 = vunpack.c.l.b16 %v2958
      %v3643 = vunpack.c.h.b16 %v2958
      %v3644 = vunpack.c.l.b16 %v2959
      %v3645 = vunpack.c.h.b16 %v2959
      %v3646 = vunpack.c.l.b16 %v2960
      %v3647 = vunpack.c.h.b16 %v2960
      %v3648 = vunpack.c.l.b16 %v2961
      %v3649 = vunpack.c.h.b16 %v2961
      %v3650 = vunpack.c.l.b16 %v2962
      %v3651 = vunpack.c.l.b16 %v2963
      %v3652 = vunpack.c.h.b16 %v2963
      %v3653 = vunpack.c.l.b16 %v2964
      %v3654 = vunpack.c.h.b16 %v2964
      %v3655 = vunpack.c.l.b16 %v2965
      %v3656 = vunpack.c.h.b16 %v2965
      %v3657 = vunpack.c.l.b16 %v2966
      %v3658 = vunpack.c.h.b16 %v2966
      %v3659 = vunpack.c.l.b16 %v2967
      %v3660 = vunpack.c.l.b16 %v2968
      %v3661 = vunpack.c.h.b16 %v2968
      %v3662 = vunpack.c.l.b16 %v2969
      %v3663 = vunpack.c.h.b16 %v2969
      %v3664 = vunpack.c.l.b16 %v2970
      %v3665 = vunpack.c.h.b16 %v2970
      %v3666 = vunpack.c.l.b16 %v2971
      %v3667 = vunpack.c.h.b16 %v2971
      %v3668 = vunpack.c.l.b16 %v2972
      %v3669 = vunpack.c.l.b16 %v2973
      %v3670 = vunpack.c.h.b16 %v2973
      %v3671 = vunpack.c.l.b16 %v2974
      %v3672 = vunpack.c.h.b16 %v2974
      %v3673 = vunpack.c.l.b16 %v2975
      %v3674 = vunpack.c.h.b16 %v2975
      %v3675 = vunpack.c.l.b16 %v2976
      %v3676 = vunpack.c.h.b16 %v2976
      %v3677 = vunpack.c.l.b16 %v2977
      %v3678 = vunpack.c.l.b16 %v2978
      %v3679 = vunpack.c.h.b16 %v2978
      %v3680 = vunpack.c.l.b16 %v2979
      %v3681 = vunpack.c.h.b16 %v2979
      %v3682 = vunpack.c.l.b16 %v2980
      %v3683 = vunpack.c.h.b16 %v2980
      %v3684 = vunpack.c.l.b16 %v2981
      %v3685 = vunpack.c.h.b16 %v2981
      %v3686 = vunpack.c.l.b16 %v2982
      %v3687 = vunpack.c.l.b16 %v2983
      %v3688 = vunpack.c.h.b16 %v2983
      %v3689 = vunpack.c.l.b16 %v2984
      %v3690 = vunpack.c.h.b16 %v2984
      %v3691 = vunpack.c.l.b16 %v2985
      %v3692 = vunpack.c.h.b16 %v2985
      %v3693 = vunpack.c.l.b16 %v2986
      %v3694 = vunpack.c.h.b16 %v2986
      %v3695 = vunpack.c.l.b16 %v2987
      %v3696 = vunpack.c.l.b16 %v2988
      %v3697 = vunpack.c.h.b16 %v2988
      %v3698 = vunpack.c.l.b16 %v2989
      %v3699 = vunpack.c.h.b16 %v2989
      %v3700 = vunpack.c.l.b16 %v2990
      %v3701 = vunpack.c.h.b16 %v2990
      %v3702 = vunpack.c.l.b16 %v2991
      %v3703 = vunpack.c.h.b16 %v2991
      %v3704 = vunpack.c.l.b16 %v2992
      %v3705 = vunpack.c.l.b16 %v2993
      %v3706 = vunpack.c.h.b16 %v2993
      %v3707 = vunpack.c.l.b16 %v2994
      %v3708 = vunpack.c.h.b16 %v2994
      %v3709 = vunpack.c.l.b16 %v2995
      %v3710 = vunpack.c.h.b16 %v2995
      %v3711 = vunpack.c.l.b16 %v2996
      %v3712 = vunpack.c.h.b16 %v2996
      %v3713 = vunpack.c.l.b16 %v2997
      %v3714 = vunpack.c.l.b16 %v2998
      %v3715 = vunpack.c.h.b16 %v2998
      %v3716 = vunpack.c.l.b16 %v2999
      %v3717 = vunpack.c.h.b16 %v2999
      %v3718 = vunpack.c.l.b16 %v3000
      %v3719 = vunpack.c.h.b16 %v3000
      %v3720 = vunpack.c.l.b16 %v3001
      %v3721 = vunpack.c.h.b16 %v3001
      %v3722 = vunpack.c.l.b16 %v3002
      %v3723 = vunpack.c.l.b16 %v3003
      %v3724 = vunpack.c.h.b16 %v3003
      %v3725 = vunpack.c.l.b16 %v3004
      %v3726 = vunpack.c.h.b16 %v3004
      %v3727 = vunpack.c.l.b16 %v3005
      %v3728 = vunpack.c.h.b16 %v3005
      %v3729 = vunpack.c.l.b16 %v3006
      %v3730 = vunpack.c.h.b16 %v3006
      %v3731 = vunpack.c.l.b16 %v3007
      %v3732 = vunpack.c.l.b16 %v3008
      %v3733 = vunpack.c.h.b16 %v3008
      %v3734 = vunpack.c.l.b16 %v3009
      %v3735 = vunpack.c.h.b16 %v3009
      %v3736 = vunpack.c.l.b16 %v3010
      %v3737 = vunpack.c.h.b16 %v3010
      %v3738 = vunpack.c.l.b16 %v3011
      %v3739 = vunpack.c.h.b16 %v3011
      %v3740 = vunpack.c.l.b16 %v3012
      %v3741 = vunpack.c.l.b16 %v3013
      %v3742 = vunpack.c.h.b16 %v3013
      %v3743 = vunpack.c.l.b16 %v3014
      %v3744 = vunpack.c.h.b16 %v3014
      %v3745 = vunpack.c.l.b16 %v3015
      %v3746 = vunpack.c.h.b16 %v3015
      %v3747 = vunpack.c.l.b16 %v3016
      %v3748 = vunpack.c.h.b16 %v3016
      %v3749 = vunpack.c.l.b16 %v3017
      %v3750 = vunpack.c.l.b16 %v3018
      %v3751 = vunpack.c.h.b16 %v3018
      %v3752 = vunpack.c.l.b16 %v3019
      %v3753 = vunpack.c.h.b16 %v3019
      %v3754 = vunpack.c.l.b16 %v3020
      %v3755 = vunpack.c.h.b16 %v3020
      %v3756 = vunpack.c.l.b16 %v3021
      %v3757 = vunpack.c.h.b16 %v3021
      %v3758 = vunpack.c.l.b16 %v3022
      %v3759 = vunpack.c.l.b16 %v3023
      %v3760 = vunpack.c.h.b16 %v3023
      %v3761 = vunpack.c.l.b16 %v3024
      %v3762 = vunpack.c.h.b16 %v3024
      %v3763 = vunpack.c.l.b16 %v3025
      %v3764 = vunpack.c.h.b16 %v3025
      %v3765 = vunpack.c.l.b16 %v3026
      %v3766 = vunpack.c.h.b16 %v3026
      %v3767 = vunpack.c.l.b16 %v3027
      %v3768 = vunpack.c.l.b16 %v3028
      %v3769 = vunpack.c.h.b16 %v3028
      %v3770 = vunpack.c.l.b16 %v3029
      %v3771 = vunpack.c.h.b16 %v3029
      %v3772 = vunpack.c.l.b16 %v3030
      %v3773 = vunpack.c.h.b16 %v3030
      %v3774 = vunpack.c.l.b16 %v3031
      %v3775 = vunpack.c.h.b16 %v3031
      %v3776 = vunpack.c.l.b16 %v3032
      %v3777 = vunpack.c.l.b16 %v3033
      %v3778 = vunpack.c.h.b16 %v3033
      %v3779 = vunpack.c.l.b16 %v3034
      %v3780 = vunpack.c.h.b16 %v3034
      %v3781 = vunpack.c.l.b16 %v3035
      %v3782 = vunpack.c.h.b16 %v3035
      %v3783 = vunpack.c.l.b16 %v3036
      %v3784 = vunpack.c.h.b16 %v3036
      %v3785 = vunpack.c.l.b16 %v3037
      %v3786 = vunpack.c.l.b16 %v3038
      %v3787 = vunpack.c.h.b16 %v3038
      %v3788 = vunpack.c.l.b16 %v3039
      %v3789 = vunpack.c.h.b16 %v3039
      %v3790 = vunpack.c.l.b16 %v3040
      %v3791 = vunpack.c.h.b16 %v3040
      %v3792 = vunpack.c.l.b16 %v3041
      %v3793 = vunpack.c.h.b16 %v3041
      %v3794 = vunpack.c.l.b16 %v3042
      %v3795 = vunpack.c.l.b16 %v3043
      %v3796 = vunpack.c.h.b16 %v3043
      %v3797 = vunpack.c.l.b16 %v3044
      %v3798 = vunpack.c.h.b16 %v3044
      %v3799 = vunpack.c.l.b16 %v3045
      %v3800 = vunpack.c.h.b16 %v3045
      %v3801 = vunpack.c.l.b16 %v3046
      %v3802 = vunpack.c.h.b16 %v3046
      %v3803 = vunpack.c.l.b16 %v3047
      %v3804 = vunpack.c.l.b16 %v3048
      %v3805 = vunpack.c.h.b16 %v3048
      %v3806 = vunpack.c.l.b16 %v3049
      %v3807 = vunpack.c.h.b16 %v3049
      %v3808 = vunpack.c.l.b16 %v3050
      %v3809 = vunpack.c.h.b16 %v3050
      %v3810 = vunpack.c.l.b16 %v3051
      %v3811 = vunpack.c.h.b16 %v3051
      %v3812 = vunpack.c.l.b16 %v3052
      %v3813 = vunpack.c.l.b16 %v3053
      %v3814 = vunpack.c.h.b16 %v3053
      %v3815 = vunpack.c.l.b16 %v3054
      %v3816 = vunpack.c.h.b16 %v3054
      %v3817 = vunpack.c.l.b16 %v3055
      %v3818 = vunpack.c.h.b16 %v3055
      %v3819 = vunpack.c.l.b16 %v3056
      %v3820 = vunpack.c.h.b16 %v3056
      %v3821 = vunpack.c.l.b16 %v3057
      %v3822 = vunpack.c.l.b16 %v3058
      %v3823 = vunpack.c.h.b16 %v3058
      %v3824 = vunpack.c.l.b16 %v3059
      %v3825 = vunpack.c.h.b16 %v3059
      %v3826 = vunpack.c.l.b16 %v3060
      %v3827 = vunpack.c.h.b16 %v3060
      %v3828 = vunpack.c.l.b16 %v3061
      %v3829 = vunpack.c.h.b16 %v3061
      %v3830 = vunpack.c.l.b16 %v3062
      %v3831 = vunpack.c.l.b16 %v3063
      %v3832 = vunpack.c.h.b16 %v3063
      %v3833 = vunpack.c.l.b16 %v3064
      %v3834 = vunpack.c.h.b16 %v3064
      %v3835 = vunpack.c.l.b16 %v3065
      %v3836 = vunpack.c.h.b16 %v3065
      %v3837 = vunpack.c.l.b16 %v3066
      %v3838 = vunpack.c.h.b16 %v3066
      %v3839 = vunpack.c.l.b16 %v3067
      %v3840 = vunpack.c.l.b16 %v3068
      %v3841 = vunpack.c.h.b16 %v3068
      %v3842 = vunpack.c.l.b16 %v3069
      %v3843 = vunpack.c.h.b16 %v3069
      %v3844 = vunpack.c.l.b16 %v3070
      %v3845 = vunpack.c.h.b16 %v3070
      %v3846 = vunpack.c.l.b16 %v3071
      %v3847 = vunpack.c.h.b16 %v3071
      %v3848 = vunpack.c.l.b16 %v3072
      %v3849 = vunpack.c.l.b16 %v3073
      %v3850 = vunpack.c.h.b16 %v3073
      %v3851 = vunpack.c.l.b16 %v3074
      %v3852 = vunpack.c.h.b16 %v3074
      %v3853 = vunpack.c.l.b16 %v3075
      %v3854 = vunpack.c.h.b16 %v3075
      %v3855 = vunpack.c.l.b16 %v3076
      %v3856 = vunpack.c.h.b16 %v3076
      %v3857 = vunpack.c.l.b16 %v3077
      %v3858 = vunpack.c.l.b16 %v3078
      %v3859 = vunpack.c.h.b16 %v3078
      %v3860 = vunpack.c.l.b16 %v3079
      %v3861 = vunpack.c.h.b16 %v3079
      %v3862 = vunpack.c.l.b16 %v3080
      %v3863 = vunpack.c.h.b16 %v3080
      %v3864 = vunpack.c.l.b16 %v3081
      %v3865 = vunpack.c.h.b16 %v3081
      %v3866 = vunpack.c.l.b16 %v3082
      %v3867 = vunpack.c.l.b16 %v3083
      %v3868 = vunpack.c.h.b16 %v3083
      %v3869 = vunpack.c.l.b16 %v3084
      %v3870 = vunpack.c.h.b16 %v3084
      %v3871 = vunpack.c.l.b16 %v3085
      %v3872 = vunpack.c.h.b16 %v3085
      %v3873 = vunpack.c.l.b16 %v3086
      %v3874 = vunpack.c.h.b16 %v3086
      %v3875 = vunpack.c.l.b16 %v3087
      %v3876 = vunpack.c.l.b16 %v3088
      %v3877 = vunpack.c.h.b16 %v3088
      %v3878 = vunpack.c.l.b16 %v3089
      %v3879 = vunpack.c.h.b16 %v3089
      %v3880 = vunpack.c.l.b16 %v3090
      %v3881 = vunpack.c.h.b16 %v3090
      %v3882 = vunpack.c.l.b16 %v3091
      %v3883 = vunpack.c.h.b16 %v3091
      %v3884 = vunpack.c.l.b16 %v3092
      %v3885 = vunpack.c.l.b16 %v3093
      %v3886 = vunpack.c.h.b16 %v3093
      %v3887 = vunpack.c.l.b16 %v3094
      %v3888 = vunpack.c.h.b16 %v3094
      %v3889 = vunpack.c.l.b16 %v3095
      %v3890 = vunpack.c.h.b16 %v3095
      %v3891 = vunpack.c.l.b16 %v3096
      %v3892 = vunpack.c.h.b16 %v3096
      %v3893 = vunpack.c.l.b16 %v3097
      %v3894 = vunpack.c.l.b16 %v3098
      %v3895 = vunpack.c.h.b16 %v3098
      %v3896 = vunpack.c.l.b16 %v3099
      %v3897 = vunpack.c.h.b16 %v3099
      %v3898 = vunpack.c.l.b16 %v3100
      %v3899 = vunpack.c.h.b16 %v3100
      %v3900 = vunpack.c.l.b16 %v3101
      %v3901 = vunpack.c.h.b16 %v3101
      %v3902 = vunpack.c.l.b16 %v3102
      %v3903 = vunpack.c.l.b16 %v3103
      %v3904 = vunpack.c.h.b16 %v3103
      %v3905 = vunpack.c.l.b16 %v3104
      %v3906 = vunpack.c.h.b16 %v3104
      %v3907 = vunpack.c.l.b16 %v3105
      %v3908 = vunpack.c.h.b16 %v3105
      %v3909 = vunpack.c.l.b16 %v3106
      %v3910 = vunpack.c.h.b16 %v3106
      %v3911 = vunpack.c.l.b16 %v3107
      %v3912 = vunpack.c.l.b16 %v3108
      %v3913 = vunpack.c.h.b16 %v3108
      %v3914 = vunpack.c.l.b16 %v3109
      %v3915 = vunpack.c.h.b16 %v3109
      %v3916 = vunpack.c.l.b16 %v3110
      %v3917 = vunpack.c.h.b16 %v3110
      %v3918 = vunpack.c.l.b16 %v3111
      %v3919 = vunpack.c.h.b16 %v3111
      %v3920 = vunpack.c.l.b16 %v3112
      %v3921 = vunpack.c.l.b16 %v3113
      %v3922 = vunpack.c.h.b16 %v3113
      %v3923 = vunpack.c.l.b16 %v3114
      %v3924 = vunpack.c.h.b16 %v3114
      %v3925 = vunpack.c.l.b16 %v3115
      %v3926 = vunpack.c.h.b16 %v3115
      %v3927 = vunpack.c.l.b16 %v3116
      %v3928 = vunpack.c.h.b16 %v3116
      %v3929 = vunpack.c.l.b16 %v3117
      %v3930 = vunpack.c.l.b16 %v3118
      %v3931 = vunpack.c.h.b16 %v3118
      %v3932 = vunpack.c.l.b16 %v3119
      %v3933 = vunpack.c.h.b16 %v3119
      %v3934 = vunpack.c.l.b16 %v3120
      %v3935 = vunpack.c.h.b16 %v3120
      %v3936 = vunpack.c.l.b16 %v3121
      %v3937 = vunpack.c.h.b16 %v3121
      %v3938 = vunpack.c.l.b16 %v3122
      %v3939 = vpack.c.b16 %v3516, %v3507
      %v3940 = vpack.c.b16 %v3517, %v3508
      %v3941 = vpack.c.b16 %v3518, %v3509
      %v3942 = vpack.c.b16 %v3519, %v3510
      %v3943 = vpack.c.b16 %v3520, %v3511
      %v3944 = vpack.c.b16 %v3521, %v3512
      %v3945 = vpack.c.b16 %v3522, %v3513
      %v3946 = vpack.c.b16 %v3523, %v3514
      %v3947 = vpack.c.b16 %v3524, %v3515
      %v3948 = vpack.c.b16 %v3534, %v3525
      %v3949 = vpack.c.b16 %v3535, %v3526
      %v3950 = vpack.c.b16 %v3536, %v3527
      %v3951 = vpack.c.b16 %v3537, %v3528
      %v3952 = vpack.c.b16 %v3538, %v3529
      %v3953 = vpack.c.b16 %v3539, %v3530
      %v3954 = vpack.c.b16 %v3540, %v3531
      %v3955 = vpack.c.b16 %v3541, %v3532
      %v3956 = vpack.c.b16 %v3542, %v3533
      %v3957 = vpack.c.b16 %v3552, %v3543
      %v3958 = vpack.c.b16 %v3553, %v3544
      %v3959 = vpack.c.b16 %v3554, %v3545
      %v3960 = vpack.c.b16 %v3555, %v3546
      %v3961 = vpack.c.b16 %v3556, %v3547
      %v3962 = vpack.c.b16 %v3557, %v3548
      %v3963 = vpack.c.b16 %v3558, %v3549
      %v3964 = vpack.c.b16 %v3559, %v3550
      %v3965 = vpack.c.b16 %v3560, %v3551
      %v3966 = vpack.c.b16 %v3570, %v3561
      %v3967 = vpack.c.b16 %v3571, %v3562
      %v3968 = vpack.c.b16 %v3572, %v3563
      %v3969 = vpack.c.b16 %v3573, %v3564
      %v3970 = vpack.c.b16 %v3574, %v3565
      %v3971 = vpack.c.b16 %v3575, %v3566
      %v3972 = vpack.c.b16 %v3576, %v3567
      %v3973 = vpack.c.b16 %v3577, %v3568
      %v3974 = vpack.c.b16 %v3578, %v3569
      %v3975 = vpack.c.b16 %v3588, %v3579
      %v3976 = vpack.c.b16 %v3589, %v3580
      %v3977 = vpack.c.b16 %v3590, %v3581
      %v3978 = vpack.c.b16 %v3591, %v3582
      %v3979 = vpack.c.b16 %v3592, %v3583
      %v3980 = vpack.c.b16 %v3593, %v3584
      %v3981 = vpack.c.b16 %v3594, %v3585
      %v3982 = vpack.c.b16 %v3595, %v3586
      %v3983 = vpack.c.b16 %v3596, %v3587
      %v3984 = vpack.c.b16 %v3606, %v3597
      %v3985 = vpack.c.b16 %v3607, %v3598
      %v3986 = vpack.c.b16 %v3608, %v3599
      %v3987 = vpack.c.b16 %v3609, %v3600
      %v3988 = vpack.c.b16 %v3610, %v3601
      %v3989 = vpack.c.b16 %v3611, %v3602
      %v3990 = vpack.c.b16 %v3612, %v3603
      %v3991 = vpack.c.b16 %v3613, %v3604
      %v3992 = vpack.c.b16 %v3614, %v3605
      %v3993 = vpack.c.b16 %v3624, %v3615
      %v3994 = vpack.c.b16 %v3625, %v3616
      %v3995 = vpack.c.b16 %v3626, %v3617
      %v3996 = vpack.c.b16 %v3627, %v3618
      %v3997 = vpack.c.b16 %v3628, %v3619
      %v3998 = vpack.c.b16 %v3629, %v3620
      %v3999 = vpack.c.b16 %v3630, %v3621
      %v4000 = vpack.c.b16 %v3631, %v3622
      %v4001 = vpack.c.b16 %v3632, %v3623
      %v4002 = vpack.c.b16 %v3642, %v3633
      %v4003 = vpack.c.b16 %v3643, %v3634
      %v4004 = vpack.c.b16 %v3644, %v3635
      %v4005 = vpack.c.b16 %v3645, %v3636
      %v4006 = vpack.c.b16 %v3646, %v3637
      %v4007 = vpack.c.b16 %v3647, %v3638
      %v4008 = vpack.c.b16 %v3648, %v3639
      %v4009 = vpack.c.b16 %v3649, %v3640
      %v4010 = vpack.c.b16 %v3650, %v3641
      %v4011 = vpack.c.b16 %v3660, %v3651
      %v4012 = vpack.c.b16 %v3661, %v3652
      %v4013 = vpack.c.b16 %v3662, %v3653
      %v4014 = vpack.c.b16 %v3663, %v3654
      %v4015 = vpack.c.b16 %v3664, %v3655
      %v4016 = vpack.c.b16 %v3665, %v3656
      %v4017 = vpack.c.b16 %v3666, %v3657
      %v4018 = vpack.c.b16 %v3667, %v3658
      %v4019 = vpack.c.b16 %v3668, %v3659
      %v4020 = vpack.c.b16 %v3678, %v3669
      %v4021 = vpack.c.b16 %v3679, %v3670
      %v4022 = vpack.c.b16 %v3680, %v3671
      %v4023 = vpack.c.b16 %v3681, %v3672
      %v4024 = vpack.c.b16 %v3682, %v3673
      %v4025 = vpack.c.b16 %v3683, %v3674
      %v4026 = vpack.c.b16 %v3684, %v3675
      %v4027 = vpack.c.b16 %v3685, %v3676
      %v4028 = vpack.c.b16 %v3686, %v3677
      %v4029 = vpack.c.b16 %v3696, %v3687
      %v4030 = vpack.c.b16 %v3697, %v3688
      %v4031 = vpack.c.b16 %v3698, %v3689
      %v4032 = vpack.c.b16 %v3699, %v3690
      %v4033 = vpack.c.b16 %v3700, %v3691
      %v4034 = vpack.c.b16 %v3701, %v3692
      %v4035 = vpack.c.b16 %v3702, %v3693
      %v4036 = vpack.c.b16 %v3703, %v3694
      %v4037 = vpack.c.b16 %v3704, %v3695
      %v4038 = vpack.c.b16 %v3714, %v3705
      %v4039 = vpack.c.b16 %v3715, %v3706
      %v4040 = vpack.c.b16 %v3716, %v3707
      %v4041 = vpack.c.b16 %v3717, %v3708
      %v4042 = vpack.c.b16 %v3718, %v3709
      %v4043 = vpack.c.b16 %v3719, %v3710
      %v4044 = vpack.c.b16 %v3720, %v3711
      %v4045 = vpack.c.b16 %v3721, %v3712
      %v4046 = vpack.c.b16 %v3722, %v3713
      %v4047 = vpack.c.b16 %v3732, %v3723
      %v4048 = vpack.c.b16 %v3733, %v3724
      %v4049 = vpack.c.b16 %v3734, %v3725
      %v4050 = vpack.c.b16 %v3735, %v3726
      %v4051 = vpack.c.b16 %v3736, %v3727
      %v4052 = vpack.c.b16 %v3737, %v3728
      %v4053 = vpack.c.b16 %v3738, %v3729
      %v4054 = vpack.c.b16 %v3739, %v3730
      %v4055 = vpack.c.b16 %v3740, %v3731
      %v4056 = vpack.c.b16 %v3750, %v3741
      %v4057 = vpack.c.b16 %v3751, %v3742
      %v4058 = vpack.c.b16 %v3752, %v3743
      %v4059 = vpack.c.b16 %v3753, %v3744
      %v4060 = vpack.c.b16 %v3754, %v3745
      %v4061 = vpack.c.b16 %v3755, %v3746
      %v4062 = vpack.c.b16 %v3756, %v3747
      %v4063 = vpack.c.b16 %v3757, %v3748
      %v4064 = vpack.c.b16 %v3758, %v3749
      %v4065 = vpack.c.b16 %v3768, %v3759
      %v4066 = vpack.c.b16 %v3769, %v3760
      %v4067 = vpack.c.b16 %v3770, %v3761
      %v4068 = vpack.c.b16 %v3771, %v3762
      %v4069 = vpack.c.b16 %v3772, %v3763
      %v4070 = vpack.c.b16 %v3773, %v3764
      %v4071 = vpack.c.b16 %v3774, %v3765
      %v4072 = vpack.c.b16 %v3775, %v3766
      %v4073 = vpack.c.b16 %v3776, %v3767
      %v4074 = vpack.c.b16 %v3786, %v3777
      %v4075 = vpack.c.b16 %v3787, %v3778
      %v4076 = vpack.c.b16 %v3788, %v3779
      %v4077 = vpack.c.b16 %v3789, %v3780
      %v4078 = vpack.c.b16 %v3790, %v3781
      %v4079 = vpack.c.b16 %v3791, %v3782
      %v4080 = vpack.c.b16 %v3792, %v3783
      %v4081 = vpack.c.b16 %v3793, %v3784
      %v4082 = vpack.c.b16 %v3794, %v3785
      %v4083 = vpack.c.b16 %v3804, %v3795
      %v4084 = vpack.c.b16 %v3805, %v3796
      %v4085 = vpack.c.b16 %v3806, %v3797
      %v4086 = vpack.c.b16 %v3807, %v3798
      %v4087 = vpack.c.b16 %v3808, %v3799
      %v4088 = vpack.c.b16 %v3809, %v3800
      %v4089 = vpack.c.b16 %v3810, %v3801
      %v4090 = vpack.c.b16 %v3811, %v3802
      %v4091 = vpack.c.b16 %v3812, %v3803
      %v4092 = vpack.c.b16 %v3822, %v3813
      %v4093 = vpack.c.b16 %v3823, %v3814
      %v4094 = vpack.c.b16 %v3824, %v3815
      %v4095 = vpack.c.b16 %v3825, %v3816
      %v4096 = vpack.c.b16 %v3826, %v3817
      %v4097 = vpack.c.b16 %v3827, %v3818
      %v4098 = vpack.c.b16 %v3828, %v3819
      %v4099 = vpack.c.b16 %v3829, %v3820
      %v4100 = vpack.c.b16 %v3830, %v3821
      %v4101 = vpack.c.b16 %v3840, %v3831
      %v4102 = vpack.c.b16 %v3841, %v3832
      %v4103 = vpack.c.b16 %v3842, %v3833
      %v4104 = vpack.c.b16 %v3843, %v3834
      %v4105 = vpack.c.b16 %v3844, %v3835
      %v4106 = vpack.c.b16 %v3845, %v3836
      %v4107 = vpack.c.b16 %v3846, %v3837
      %v4108 = vpack.c.b16 %v3847, %v3838
      %v4109 = vpack.c.b16 %v3848, %v3839
      %v4110 = vpack.c.b16 %v3858, %v3849
      %v4111 = vpack.c.b16 %v3859, %v3850
      %v4112 = vpack.c.b16 %v3860, %v3851
      %v4113 = vpack.c.b16 %v3861, %v3852
      %v4114 = vpack.c.b16 %v3862, %v3853
      %v4115 = vpack.c.b16 %v3863, %v3854
      %v4116 = vpack.c.b16 %v3864, %v3855
      %v4117 = vpack.c.b16 %v3865, %v3856
      %v4118 = vpack.c.b16 %v3866, %v3857
      %v4119 = vpack.c.b16 %v3876, %v3867
      %v4120 = vpack.c.b16 %v3877, %v3868
      %v4121 = vpack.c.b16 %v3878, %v3869
      %v4122 = vpack.c.b16 %v3879, %v3870
      %v4123 = vpack.c.b16 %v3880, %v3871
      %v4124 = vpack.c.b16 %v3881, %v3872
      %v4125 = vpack.c.b16 %v3882, %v3873
      %v4126 = vpack.c.b16 %v3883, %v3874
      %v4127 = vpack.c.b16 %v3884, %v3875
      %v4128 = vpack.c.b16 %v3894, %v3885
      %v4129 = vpack.c.b16 %v3895, %v3886
      %v4130 = vpack.c.b16 %v3896, %v3887
      %v4131 = vpack.c.b16 %v3897, %v3888
      %v4132 = vpack.c.b16 %v3898, %v3889
      %v4133 = vpack.c.b16 %v3899, %v3890
      %v4134 = vpack.c.b16 %v3900, %v3891
      %v4135 = vpack.c.b16 %v3901, %v3892
      %v4136 = vpack.c.b16 %v3902, %v3893
      %v4137 = vpack.c.b16 %v3912, %v3903
      %v4138 = vpack.c.b16 %v3913, %v3904
      %v4139 = vpack.c.b16 %v3914, %v3905
      %v4140 = vpack.c.b16 %v3915, %v3906
      %v4141 = vpack.c.b16 %v3916, %v3907
      %v4142 = vpack.c.b16 %v3917, %v3908
      %v4143 = vpack.c.b16 %v3918, %v3909
      %v4144 = vpack.c.b16 %v3919, %v3910
      %v4145 = vpack.c.b16 %v3920, %v3911
      %v4146 = vpack.c.b16 %v3930, %v3921
      %v4147 = vpack.c.b16 %v3931, %v3922
      %v4148 = vpack.c.b16 %v3932, %v3923
      %v4149 = vpack.c.b16 %v3933, %v3924
      %v4150 = vpack.c.b16 %v3934, %v3925
      %v4151 = vpack.c.b16 %v3935, %v3926
      %v4152 = vpack.c.b16 %v3936, %v3927
      %v4153 = vpack.c.b16 %v3937, %v3928
      %v4154 = vpack.c.b16 %v3938, %v3929
      %v4515 = vunpack.c.l.b16 %v3123
      %v4516 = vunpack.c.l.b16 %v3124
      %v4517 = vunpack.c.l.b16 %v3125
      %v4518 = vunpack.c.l.b16 %v3126
      %v4519 = vunpack.c.l.b16 %v3127
      %v4520 = vunpack.c.l.b16 %v3128
      %v4521 = vunpack.c.l.b16 %v3129
      %v4522 = vunpack.c.l.b16 %v3130
      %v4523 = vunpack.c.l.b16 %v3131
      %v4524 = vunpack.c.l.b16 %v3132
      %v4525 = vunpack.c.l.b16 %v3133
      %v4526 = vunpack.c.l.b16 %v3134
      %v4527 = vunpack.c.l.b16 %v3135
      %v4528 = vunpack.c.l.b16 %v3136
      %v4529 = vunpack.c.l.b16 %v3137
      %v4530 = vunpack.c.l.b16 %v3138
      %v4531 = vunpack.c.l.b16 %v3139
      %v4532 = vunpack.c.l.b16 %v3140
      %v4533 = vunpack.c.l.b16 %v3141
      %v4534 = vunpack.c.l.b16 %v3142
      %v4535 = vunpack.c.l.b16 %v3143
      %v4536 = vunpack.c.l.b16 %v3144
      %v4537 = vunpack.c.l.b16 %v3145
      %v4538 = vunpack.c.l.b16 %v3146
      %v4539 = vunpack.c.l.b16 %v3147
      %v4540 = vunpack.c.l.b16 %v3148
      %v4541 = vunpack.c.l.b16 %v3149
      %v4542 = vunpack.c.l.b16 %v3150
      %v4543 = vunpack.c.l.b16 %v3151
      %v4544 = vunpack.c.l.b16 %v3152
      %v4545 = vunpack.c.l.b16 %v3153
      %v4546 = vunpack.c.l.b16 %v3154
      %v4547 = vunpack.c.l.b16 %v3155
      %v4548 = vunpack.c.l.b16 %v3156
      %v4549 = vunpack.c.l.b16 %v3157
      %v4550 = vunpack.c.l.b16 %v3158
      %v4551 = vunpack.c.l.b16 %v3159
      %v4552 = vunpack.c.l.b16 %v3160
      %v4553 = vunpack.c.l.b16 %v3161
      %v4554 = vunpack.c.l.b16 %v3162
      %v4555 = vunpack.c.l.b16 %v3163
      %v4556 = vunpack.c.l.b16 %v3164
      %v4557 = vunpack.c.l.b16 %v3165
      %v4558 = vunpack.c.l.b16 %v3166
      %v4559 = vunpack.c.l.b16 %v3167
      %v4560 = vunpack.c.l.b16 %v3168
      %v4561 = vunpack.c.l.b16 %v3169
      %v4562 = vunpack.c.l.b16 %v3170
      %v4563 = vunpack.c.l.b16 %v3171
      %v4564 = vunpack.c.l.b16 %v3172
      %v4565 = vunpack.c.l.b16 %v3173
      %v4566 = vunpack.c.l.b16 %v3174
      %v4567 = vunpack.c.l.b16 %v3175
      %v4568 = vunpack.c.l.b16 %v3176
      %v4569 = vunpack.c.l.b16 %v3177
      %v4570 = vunpack.c.l.b16 %v3178
      %v4571 = vunpack.c.l.b16 %v3179
      %v4572 = vunpack.c.l.b16 %v3180
      %v4573 = vunpack.c.l.b16 %v3181
      %v4574 = vunpack.c.l.b16 %v3182
      %v4575 = vunpack.c.l.b16 %v3183
      %v4576 = vunpack.c.l.b16 %v3184
      %v4577 = vunpack.c.l.b16 %v3185
      %v4578 = vunpack.c.l.b16 %v3186
      %v4579 = vunpack.c.l.b16 %v3187
      %v4580 = vunpack.c.l.b16 %v3188
      %v4581 = vunpack.c.l.b16 %v3189
      %v4582 = vunpack.c.l.b16 %v3190
      %v4583 = vunpack.c.l.b16 %v3191
      %v4584 = vunpack.c.l.b16 %v3192
      %v4585 = vunpack.c.l.b16 %v3193
      %v4586 = vunpack.c.l.b16 %v3194
      %v4587 = vunpack.c.l.b16 %v3195
      %v4588 = vunpack.c.l.b16 %v3196
      %v4589 = vunpack.c.l.b16 %v3197
      %v4590 = vunpack.c.l.b16 %v3198
      %v4591 = vunpack.c.l.b16 %v3199
      %v4592 = vunpack.c.l.b16 %v3200
      %v4593 = vunpack.c.l.b16 %v3201
      %v4594 = vunpack.c.l.b16 %v3202
      %v4595 = vunpack.c.l.b16 %v3203
      %v4596 = vunpack.c.l.b16 %v3204
      %v4597 = vunpack.c.l.b16 %v3205
      %v4598 = vunpack.c.l.b16 %v3206
      %v4599 = vunpack.c.l.b16 %v3207
      %v4600 = vunpack.c.l.b16 %v3208
      %v4601 = vunpack.c.l.b16 %v3209
      %v4602 = vunpack.c.l.b16 %v3210
      %v4603 = vunpack.c.l.b16 %v3211
      %v4604 = vunpack.c.l.b16 %v3212
      %v4605 = vunpack.c.l.b16 %v3213
      %v4606 = vunpack.c.l.b16 %v3214
      %v4607 = vunpack.c.l.b16 %v3215
      %v4608 = vunpack.c.l.b16 %v3216
      %v4609 = vunpack.c.l.b16 %v3217
      %v4610 = vunpack.c.l.b16 %v3218
      %v4611 = vunpack.c.l.b16 %v3219
      %v4612 = vunpack.c.l.b16 %v3220
      %v4613 = vunpack.c.l.b16 %v3221
      %v4614 = vunpack.c.l.b16 %v3222
      %v4615 = vunpack.c.l.b16 %v3223
      %v4616 = vunpack.c.l.b16 %v3224
      %v4617 = vunpack.c.l.b16 %v3225
      %v4618 = vunpack.c.l.b16 %v3226
      %v4619 = vunpack.c.l.b16 %v3227
      %v4620 = vunpack.c.l.b16 %v3228
      %v4621 = vunpack.c.l.b16 %v3229
      %v4622 = vunpack.c.l.b16 %v3230
      %v4623 = vunpack.c.l.b16 %v3231
      %v4624 = vunpack.c.l.b16 %v3232
      %v4625 = vunpack.c.l.b16 %v3233
      %v4626 = vunpack.c.l.b16 %v3234
      %v4627 = vunpack.c.l.b16 %v3235
      %v4628 = vunpack.c.l.b16 %v3236
      %v4629 = vunpack.c.l.b16 %v3237
      %v4630 = vunpack.c.l.b16 %v3238
      %v4631 = vunpack.c.l.b16 %v3239
      %v4632 = vunpack.c.l.b16 %v3240
      %v4633 = vunpack.c.l.b16 %v3241
      %v4634 = vunpack.c.l.b16 %v3242
      %v4635 = vunpack.c.l.b16 %v3243
      %v4636 = vunpack.c.l.b16 %v3244
      %v4637 = vunpack.c.l.b16 %v3245
      %v4638 = vunpack.c.l.b16 %v3246
      %v4639 = vunpack.c.l.b16 %v3247
      %v4640 = vunpack.c.l.b16 %v3248
      %v4641 = vunpack.c.l.b16 %v3249
      %v4642 = vunpack.c.l.b16 %v3250
      %v4643 = vunpack.c.l.b16 %v3251
      %v4644 = vunpack.c.l.b16 %v3252
      %v4645 = vunpack.c.l.b16 %v3253
      %v4646 = vunpack.c.l.b16 %v3254
      %v4647 = vunpack.c.l.b16 %v3255
      %v4648 = vunpack.c.l.b16 %v3256
      %v4649 = vunpack.c.l.b16 %v3257
      %v4650 = vunpack.c.l.b16 %v3258
      %v4651 = vunpack.c.l.b16 %v3259
      %v4652 = vunpack.c.l.b16 %v3260
      %v4653 = vunpack.c.l.b16 %v3261
      %v4654 = vunpack.c.l.b16 %v3262
      %v4655 = vunpack.c.l.b16 %v3263
      %v4656 = vunpack.c.l.b16 %v3264
      %v4657 = vunpack.c.l.b16 %v3265
      %v4658 = vunpack.c.l.b16 %v3266
      %v4659 = vpack.c.b16 %v4516, %v4515
      %v4660 = vpack.c.b16 %v4518, %v4517
      %v4661 = vpack.c.b16 %v4520, %v4519
      %v4662 = vpack.c.b16 %v4522, %v4521
      %v4663 = vpack.c.b16 %v4524, %v4523
      %v4664 = vpack.c.b16 %v4526, %v4525
      %v4665 = vpack.c.b16 %v4528, %v4527
      %v4666 = vpack.c.b16 %v4530, %v4529
      %v4667 = vpack.c.b16 %v4532, %v4531
      %v4668 = vpack.c.b16 %v4534, %v4533
      %v4669 = vpack.c.b16 %v4536, %v4535
      %v4670 = vpack.c.b16 %v4538, %v4537
      %v4671 = vpack.c.b16 %v4540, %v4539
      %v4672 = vpack.c.b16 %v4542, %v4541
      %v4673 = vpack.c.b16 %v4544, %v4543
      %v4674 = vpack.c.b16 %v4546, %v4545
      %v4675 = vpack.c.b16 %v4548, %v4547
      %v4676 = vpack.c.b16 %v4550, %v4549
      %v4677 = vpack.c.b16 %v4552, %v4551
      %v4678 = vpack.c.b16 %v4554, %v4553
      %v4679 = vpack.c.b16 %v4556, %v4555
      %v4680 = vpack.c.b16 %v4558, %v4557
      %v4681 = vpack.c.b16 %v4560, %v4559
      %v4682 = vpack.c.b16 %v4562, %v4561
      %v4683 = vpack.c.b16 %v4564, %v4563
      %v4684 = vpack.c.b16 %v4566, %v4565
      %v4685 = vpack.c.b16 %v4568, %v4567
      %v4686 = vpack.c.b16 %v4570, %v4569
      %v4687 = vpack.c.b16 %v4572, %v4571
      %v4688 = vpack.c.b16 %v4574, %v4573
      %v4689 = vpack.c.b16 %v4576, %v4575
      %v4690 = vpack.c.b16 %v4578, %v4577
      %v4691 = vpack.c.b16 %v4580, %v4579
      %v4692 = vpack.c.b16 %v4582, %v4581
      %v4693 = vpack.c.b16 %v4584, %v4583
      %v4694 = vpack.c.b16 %v4586, %v4585
      %v4695 = vpack.c.b16 %v4588, %v4587
      %v4696 = vpack.c.b16 %v4590, %v4589
      %v4697 = vpack.c.b16 %v4592, %v4591
      %v4698 = vpack.c.b16 %v4594, %v4593
      %v4699 = vpack.c.b16 %v4596, %v4595
      %v4700 = vpack.c.b16 %v4598, %v4597
      %v4701 = vpack.c.b16 %v4600, %v4599
      %v4702 = vpack.c.b16 %v4602, %v4601
      %v4703 = vpack.c.b16 %v4604, %v4603
      %v4704 = vpack.c.b16 %v4606, %v4605
      %v4705 = vpack.c.b16 %v4608, %v4607
      %v4706 = vpack.c.b16 %v4610, %v4609
      %v4707 = vpack.c.b16 %v4612, %v4611
      %v4708 = vpack.c.b16 %v4614, %v4613
      %v4709 = vpack.c.b16 %v4616, %v4615
      %v4710 = vpack.c.b16 %v4618, %v4617
      %v4711 = vpack.c.b16 %v4620, %v4619
      %v4712 = vpack.c.b16 %v4622, %v4621
      %v4713 = vpack.c.b16 %v4624, %v4623
      %v4714 = vpack.c.b16 %v4626, %v4625
      %v4715 = vpack.c.b16 %v4628, %v4627
      %v4716 = vpack.c.b16 %v4630, %v4629
      %v4717 = vpack.c.b16 %v4632, %v4631
      %v4718 = vpack.c.b16 %v4634, %v4633
      %v4719 = vpack.c.b16 %v4636, %v4635
      %v4720 = vpack.c.b16 %v4638, %v4637
      %v4721 = vpack.c.b16 %v4640, %v4639
      %v4722 = vpack.c.b16 %v4642, %v4641
      %v4723 = vpack.c.b16 %v4644, %v4643
      %v4724 = vpack.c.b16 %v4646, %v4645
      %v4725 = vpack.c.b16 %v4648, %v4647
      %v4726 = vpack.c.b16 %v4650, %v4649
      %v4727 = vpack.c.b16 %v4652, %v4651
      %v4728 = vpack.c.b16 %v4654, %v4653
      %v4729 = vpack.c.b16 %v4656, %v4655
      %v4730 = vpack.c.b16 %v4658, %v4657
      %4803 = vmatpush.bf16.msra.mxu0 %v4666
      %4804 = vmatpush.bf16.msra.mxu0 %v4665
      %4805 = vmatpush.bf16.msra.mxu0 %v4664
      %4806 = vmatpush.bf16.msra.mxu0 %v4663
      %4807 = vmatpush.bf16.msra.mxu0 %v4662
      %4808 = vmatpush.bf16.msra.mxu0 %v4661
      %4809 = vmatpush.bf16.msra.mxu0 %v4660
      %4810 = vmatpush.bf16.msra.mxu0 %v4659
      %4811 = vmatmul.bf16.gmra.mxu0 %v3939
      %v4812 = vpop.f32.mrf.mxu0
      %v4813 = vadd.f32 0.0, %v4812
      %v4814 = vpop.f32.mrf.mxu0
      %v4815 = vadd.f32 0.0, %v4814
      %4816 = vmatmul.bf16.gmra.mxu0 %v3948
      %v4817 = vpop.f32.mrf.mxu0
      %v4818 = vadd.f32 0.0, %v4817
      %v4819 = vpop.f32.mrf.mxu0
      %v4820 = vadd.f32 0.0, %v4819
      %4821 = vmatmul.bf16.gmra.mxu0 %v3957
      %v4822 = vpop.f32.mrf.mxu0
      %v4823 = vadd.f32 0.0, %v4822
      %v4824 = vpop.f32.mrf.mxu0
      %v4825 = vadd.f32 0.0, %v4824
      %4826 = vmatmul.bf16.gmra.mxu0 %v3966
      %v4827 = vpop.f32.mrf.mxu0
      %v4828 = vadd.f32 0.0, %v4827
      %v4829 = vpop.f32.mrf.mxu0
      %v4830 = vadd.f32 0.0, %v4829
      %4831 = vmatmul.bf16.gmra.mxu0 %v3975
      %v4832 = vpop.f32.mrf.mxu0
      %v4833 = vadd.f32 0.0, %v4832
      %v4834 = vpop.f32.mrf.mxu0
      %v4835 = vadd.f32 0.0, %v4834
      %4836 = vmatmul.bf16.gmra.mxu0 %v3984
      %v4837 = vpop.f32.mrf.mxu0
      %v4838 = vadd.f32 0.0, %v4837
      %v4839 = vpop.f32.mrf.mxu0
      %v4840 = vadd.f32 0.0, %v4839
      %4841 = vmatmul.bf16.gmra.mxu0 %v3993
      %v4842 = vpop.f32.mrf.mxu0
      %v4843 = vadd.f32 0.0, %v4842
      %v4844 = vpop.f32.mrf.mxu0
      %v4845 = vadd.f32 0.0, %v4844
      %4846 = vmatmul.bf16.gmra.mxu0 %v4002
      %v4847 = vpop.f32.mrf.mxu0
      %v4848 = vadd.f32 0.0, %v4847
      %v4849 = vpop.f32.mrf.mxu0
      %v4850 = vadd.f32 0.0, %v4849
      %4851 = vmatmul.bf16.gmra.mxu0 %v4011
      %v4852 = vpop.f32.mrf.mxu0
      %v4853 = vadd.f32 0.0, %v4852
      %v4854 = vpop.f32.mrf.mxu0
      %v4855 = vadd.f32 0.0, %v4854
      %4856 = vmatmul.bf16.gmra.mxu0 %v4020
      %v4857 = vpop.f32.mrf.mxu0
      %v4858 = vadd.f32 0.0, %v4857
      %v4859 = vpop.f32.mrf.mxu0
      %v4860 = vadd.f32 0.0, %v4859
      %4861 = vmatmul.bf16.gmra.mxu0 %v4029
      %v4862 = vpop.f32.mrf.mxu0
      %v4863 = vadd.f32 0.0, %v4862
      %v4864 = vpop.f32.mrf.mxu0
      %v4865 = vadd.f32 0.0, %v4864
      %4866 = vmatmul.bf16.gmra.mxu0 %v4038
      %v4867 = vpop.f32.mrf.mxu0
      %v4868 = vadd.f32 0.0, %v4867
      %v4869 = vpop.f32.mrf.mxu0
      %v4870 = vadd.f32 0.0, %v4869
      %4871 = vmatmul.bf16.gmra.mxu0 %v4047
      %v4872 = vpop.f32.mrf.mxu0
      %v4873 = vadd.f32 0.0, %v4872
      %v4874 = vpop.f32.mrf.mxu0
      %v4875 = vadd.f32 0.0, %v4874
      %4876 = vmatmul.bf16.gmra.mxu0 %v4056
      %v4877 = vpop.f32.mrf.mxu0
      %v4878 = vadd.f32 0.0, %v4877
      %v4879 = vpop.f32.mrf.mxu0
      %v4880 = vadd.f32 0.0, %v4879
      %4881 = vmatmul.bf16.gmra.mxu0 %v4065
      %v4882 = vpop.f32.mrf.mxu0
      %v4883 = vadd.f32 0.0, %v4882
      %v4884 = vpop.f32.mrf.mxu0
      %v4885 = vadd.f32 0.0, %v4884
      %4886 = vmatmul.bf16.gmra.mxu0 %v4074
      %v4887 = vpop.f32.mrf.mxu0
      %v4888 = vadd.f32 0.0, %v4887
      %v4889 = vpop.f32.mrf.mxu0
      %v4890 = vadd.f32 0.0, %v4889
      %4891 = vmatmul.bf16.gmra.mxu0 %v4083
      %v4892 = vpop.f32.mrf.mxu0
      %v4893 = vadd.f32 0.0, %v4892
      %v4894 = vpop.f32.mrf.mxu0
      %v4895 = vadd.f32 0.0, %v4894
      %4896 = vmatmul.bf16.gmra.mxu0 %v4092
      %v4897 = vpop.f32.mrf.mxu0
      %v4898 = vadd.f32 0.0, %v4897
      %v4899 = vpop.f32.mrf.mxu0
      %v4900 = vadd.f32 0.0, %v4899
      %4901 = vmatmul.bf16.gmra.mxu0 %v4101
      %v4902 = vpop.f32.mrf.mxu0
      %v4903 = vadd.f32 0.0, %v4902
      %v4904 = vpop.f32.mrf.mxu0
      %v4905 = vadd.f32 0.0, %v4904
      %4906 = vmatmul.bf16.gmra.mxu0 %v4110
      %v4907 = vpop.f32.mrf.mxu0
      %v4908 = vadd.f32 0.0, %v4907
      %v4909 = vpop.f32.mrf.mxu0
      %v4910 = vadd.f32 0.0, %v4909
      %4911 = vmatmul.bf16.gmra.mxu0 %v4119
      %v4912 = vpop.f32.mrf.mxu0
      %v4913 = vadd.f32 0.0, %v4912
      %v4914 = vpop.f32.mrf.mxu0
      %v4915 = vadd.f32 0.0, %v4914
      %4916 = vmatmul.bf16.gmra.mxu0 %v4128
      %v4917 = vpop.f32.mrf.mxu0
      %v4918 = vadd.f32 0.0, %v4917
      %v4919 = vpop.f32.mrf.mxu0
      %v4920 = vadd.f32 0.0, %v4919
      %4921 = vmatmul.bf16.gmra.mxu0 %v4137
      %v4922 = vpop.f32.mrf.mxu0
      %v4923 = vadd.f32 0.0, %v4922
      %v4924 = vpop.f32.mrf.mxu0
      %v4925 = vadd.f32 0.0, %v4924
      %4926 = vmatmul.bf16.gmra.mxu0 %v4146
      %v4927 = vpop.f32.mrf.mxu0
      %v4928 = vadd.f32 0.0, %v4927
      %v4929 = vpop.f32.mrf.mxu0
      %v4930 = vadd.f32 0.0, %v4929
      %4931 = vdwg.mxu0
      %4932 = vmatpush.bf16.msra.mxu0 %v4674
      %4933 = vmatpush.bf16.msra.mxu0 %v4673
      %4934 = vmatpush.bf16.msra.mxu0 %v4672
      %4935 = vmatpush.bf16.msra.mxu0 %v4671
      %4936 = vmatpush.bf16.msra.mxu0 %v4670
      %4937 = vmatpush.bf16.msra.mxu0 %v4669
      %4938 = vmatpush.bf16.msra.mxu0 %v4668
      %4939 = vmatpush.bf16.msra.mxu0 %v4667
      %4940 = vmatmul.bf16.gmra.mxu0 %v3940
      %v4941 = vpop.f32.mrf.mxu0
      %v4942 = vadd.f32 %v4813, %v4941
      %v4943 = vpop.f32.mrf.mxu0
      %v4944 = vadd.f32 %v4815, %v4943
      %4945 = vmatmul.bf16.gmra.mxu0 %v3949
      %v4946 = vpop.f32.mrf.mxu0
      %v4947 = vadd.f32 %v4818, %v4946
      %v4948 = vpop.f32.mrf.mxu0
      %v4949 = vadd.f32 %v4820, %v4948
      %4950 = vmatmul.bf16.gmra.mxu0 %v3958
      %v4951 = vpop.f32.mrf.mxu0
      %v4952 = vadd.f32 %v4823, %v4951
      %v4953 = vpop.f32.mrf.mxu0
      %v4954 = vadd.f32 %v4825, %v4953
      %4955 = vmatmul.bf16.gmra.mxu0 %v3967
      %v4956 = vpop.f32.mrf.mxu0
      %v4957 = vadd.f32 %v4828, %v4956
      %v4958 = vpop.f32.mrf.mxu0
      %v4959 = vadd.f32 %v4830, %v4958
      %4960 = vmatmul.bf16.gmra.mxu0 %v3976
      %v4961 = vpop.f32.mrf.mxu0
      %v4962 = vadd.f32 %v4833, %v4961
      %v4963 = vpop.f32.mrf.mxu0
      %v4964 = vadd.f32 %v4835, %v4963
      %4965 = vmatmul.bf16.gmra.mxu0 %v3985
      %v4966 = vpop.f32.mrf.mxu0
      %v4967 = vadd.f32 %v4838, %v4966
      %v4968 = vpop.f32.mrf.mxu0
      %v4969 = vadd.f32 %v4840, %v4968
      %4970 = vmatmul.bf16.gmra.mxu0 %v3994
      %v4971 = vpop.f32.mrf.mxu0
      %v4972 = vadd.f32 %v4843, %v4971
      %v4973 = vpop.f32.mrf.mxu0
      %v4974 = vadd.f32 %v4845, %v4973
      %4975 = vmatmul.bf16.gmra.mxu0 %v4003
      %v4976 = vpop.f32.mrf.mxu0
      %v4977 = vadd.f32 %v4848, %v4976
      %v4978 = vpop.f32.mrf.mxu0
      %v4979 = vadd.f32 %v4850, %v4978
      %4980 = vmatmul.bf16.gmra.mxu0 %v4012
      %v4981 = vpop.f32.mrf.mxu0
      %v4982 = vadd.f32 %v4853, %v4981
      %v4983 = vpop.f32.mrf.mxu0
      %v4984 = vadd.f32 %v4855, %v4983
      %4985 = vmatmul.bf16.gmra.mxu0 %v4021
      %v4986 = vpop.f32.mrf.mxu0
      %v4987 = vadd.f32 %v4858, %v4986
      %v4988 = vpop.f32.mrf.mxu0
      %v4989 = vadd.f32 %v4860, %v4988
      %4990 = vmatmul.bf16.gmra.mxu0 %v4030
      %v4991 = vpop.f32.mrf.mxu0
      %v4992 = vadd.f32 %v4863, %v4991
      %v4993 = vpop.f32.mrf.mxu0
      %v4994 = vadd.f32 %v4865, %v4993
      %4995 = vmatmul.bf16.gmra.mxu0 %v4039
      %v4996 = vpop.f32.mrf.mxu0
      %v4997 = vadd.f32 %v4868, %v4996
      %v4998 = vpop.f32.mrf.mxu0
      %v4999 = vadd.f32 %v4870, %v4998
      %5000 = vmatmul.bf16.gmra.mxu0 %v4048
      %v5001 = vpop.f32.mrf.mxu0
      %v5002 = vadd.f32 %v4873, %v5001
      %v5003 = vpop.f32.mrf.mxu0
      %v5004 = vadd.f32 %v4875, %v5003
      %5005 = vmatmul.bf16.gmra.mxu0 %v4057
      %v5006 = vpop.f32.mrf.mxu0
      %v5007 = vadd.f32 %v4878, %v5006
      %v5008 = vpop.f32.mrf.mxu0
      %v5009 = vadd.f32 %v4880, %v5008
      %5010 = vmatmul.bf16.gmra.mxu0 %v4066
      %v5011 = vpop.f32.mrf.mxu0
      %v5012 = vadd.f32 %v4883, %v5011
      %v5013 = vpop.f32.mrf.mxu0
      %v5014 = vadd.f32 %v4885, %v5013
      %5015 = vmatmul.bf16.gmra.mxu0 %v4075
      %v5016 = vpop.f32.mrf.mxu0
      %v5017 = vadd.f32 %v4888, %v5016
      %v5018 = vpop.f32.mrf.mxu0
      %v5019 = vadd.f32 %v4890, %v5018
      %5020 = vmatmul.bf16.gmra.mxu0 %v4084
      %v5021 = vpop.f32.mrf.mxu0
      %v5022 = vadd.f32 %v4893, %v5021
      %v5023 = vpop.f32.mrf.mxu0
      %v5024 = vadd.f32 %v4895, %v5023
      %5025 = vmatmul.bf16.gmra.mxu0 %v4093
      %v5026 = vpop.f32.mrf.mxu0
      %v5027 = vadd.f32 %v4898, %v5026
      %v5028 = vpop.f32.mrf.mxu0
      %v5029 = vadd.f32 %v4900, %v5028
      %5030 = vmatmul.bf16.gmra.mxu0 %v4102
      %v5031 = vpop.f32.mrf.mxu0
      %v5032 = vadd.f32 %v4903, %v5031
      %v5033 = vpop.f32.mrf.mxu0
      %v5034 = vadd.f32 %v4905, %v5033
      %5035 = vmatmul.bf16.gmra.mxu0 %v4111
      %v5036 = vpop.f32.mrf.mxu0
      %v5037 = vadd.f32 %v4908, %v5036
      %v5038 = vpop.f32.mrf.mxu0
      %v5039 = vadd.f32 %v4910, %v5038
      %5040 = vmatmul.bf16.gmra.mxu0 %v4120
      %v5041 = vpop.f32.mrf.mxu0
      %v5042 = vadd.f32 %v4913, %v5041
      %v5043 = vpop.f32.mrf.mxu0
      %v5044 = vadd.f32 %v4915, %v5043
      %5045 = vmatmul.bf16.gmra.mxu0 %v4129
      %v5046 = vpop.f32.mrf.mxu0
      %v5047 = vadd.f32 %v4918, %v5046
      %v5048 = vpop.f32.mrf.mxu0
      %v5049 = vadd.f32 %v4920, %v5048
      %5050 = vmatmul.bf16.gmra.mxu0 %v4138
      %v5051 = vpop.f32.mrf.mxu0
      %v5052 = vadd.f32 %v4923, %v5051
      %v5053 = vpop.f32.mrf.mxu0
      %v5054 = vadd.f32 %v4925, %v5053
      %5055 = vmatmul.bf16.gmra.mxu0 %v4147
      %v5056 = vpop.f32.mrf.mxu0
      %v5057 = vadd.f32 %v4928, %v5056
      %v5058 = vpop.f32.mrf.mxu0
      %v5059 = vadd.f32 %v4930, %v5058
      %5060 = vdwg.mxu0
      %5061 = vmatpush.bf16.msra.mxu0 %v4682
      %5062 = vmatpush.bf16.msra.mxu0 %v4681
      %5063 = vmatpush.bf16.msra.mxu0 %v4680
      %5064 = vmatpush.bf16.msra.mxu0 %v4679
      %5065 = vmatpush.bf16.msra.mxu0 %v4678
      %5066 = vmatpush.bf16.msra.mxu0 %v4677
      %5067 = vmatpush.bf16.msra.mxu0 %v4676
      %5068 = vmatpush.bf16.msra.mxu0 %v4675
      %5069 = vmatmul.bf16.gmra.mxu0 %v3941
      %v5070 = vpop.f32.mrf.mxu0
      %v5071 = vadd.f32 %v4942, %v5070
      %v5072 = vpop.f32.mrf.mxu0
      %v5073 = vadd.f32 %v4944, %v5072
      %5074 = vmatmul.bf16.gmra.mxu0 %v3950
      %v5075 = vpop.f32.mrf.mxu0
      %v5076 = vadd.f32 %v4947, %v5075
      %v5077 = vpop.f32.mrf.mxu0
      %v5078 = vadd.f32 %v4949, %v5077
      %5079 = vmatmul.bf16.gmra.mxu0 %v3959
      %v5080 = vpop.f32.mrf.mxu0
      %v5081 = vadd.f32 %v4952, %v5080
      %v5082 = vpop.f32.mrf.mxu0
      %v5083 = vadd.f32 %v4954, %v5082
      %5084 = vmatmul.bf16.gmra.mxu0 %v3968
      %v5085 = vpop.f32.mrf.mxu0
      %v5086 = vadd.f32 %v4957, %v5085
      %v5087 = vpop.f32.mrf.mxu0
      %v5088 = vadd.f32 %v4959, %v5087
      %5089 = vmatmul.bf16.gmra.mxu0 %v3977
      %v5090 = vpop.f32.mrf.mxu0
      %v5091 = vadd.f32 %v4962, %v5090
      %v5092 = vpop.f32.mrf.mxu0
      %v5093 = vadd.f32 %v4964, %v5092
      %5094 = vmatmul.bf16.gmra.mxu0 %v3986
      %v5095 = vpop.f32.mrf.mxu0
      %v5096 = vadd.f32 %v4967, %v5095
      %v5097 = vpop.f32.mrf.mxu0
      %v5098 = vadd.f32 %v4969, %v5097
      %5099 = vmatmul.bf16.gmra.mxu0 %v3995
      %v5100 = vpop.f32.mrf.mxu0
      %v5101 = vadd.f32 %v4972, %v5100
      %v5102 = vpop.f32.mrf.mxu0
      %v5103 = vadd.f32 %v4974, %v5102
      %5104 = vmatmul.bf16.gmra.mxu0 %v4004
      %v5105 = vpop.f32.mrf.mxu0
      %v5106 = vadd.f32 %v4977, %v5105
      %v5107 = vpop.f32.mrf.mxu0
      %v5108 = vadd.f32 %v4979, %v5107
      %5109 = vmatmul.bf16.gmra.mxu0 %v4013
      %v5110 = vpop.f32.mrf.mxu0
      %v5111 = vadd.f32 %v4982, %v5110
      %v5112 = vpop.f32.mrf.mxu0
      %v5113 = vadd.f32 %v4984, %v5112
      %5114 = vmatmul.bf16.gmra.mxu0 %v4022
      %v5115 = vpop.f32.mrf.mxu0
      %v5116 = vadd.f32 %v4987, %v5115
      %v5117 = vpop.f32.mrf.mxu0
      %v5118 = vadd.f32 %v4989, %v5117
      %5119 = vmatmul.bf16.gmra.mxu0 %v4031
      %v5120 = vpop.f32.mrf.mxu0
      %v5121 = vadd.f32 %v4992, %v5120
      %v5122 = vpop.f32.mrf.mxu0
      %v5123 = vadd.f32 %v4994, %v5122
      %5124 = vmatmul.bf16.gmra.mxu0 %v4040
      %v5125 = vpop.f32.mrf.mxu0
      %v5126 = vadd.f32 %v4997, %v5125
      %v5127 = vpop.f32.mrf.mxu0
      %v5128 = vadd.f32 %v4999, %v5127
      %5129 = vmatmul.bf16.gmra.mxu0 %v4049
      %v5130 = vpop.f32.mrf.mxu0
      %v5131 = vadd.f32 %v5002, %v5130
      %v5132 = vpop.f32.mrf.mxu0
      %v5133 = vadd.f32 %v5004, %v5132
      %5134 = vmatmul.bf16.gmra.mxu0 %v4058
      %v5135 = vpop.f32.mrf.mxu0
      %v5136 = vadd.f32 %v5007, %v5135
      %v5137 = vpop.f32.mrf.mxu0
      %v5138 = vadd.f32 %v5009, %v5137
      %5139 = vmatmul.bf16.gmra.mxu0 %v4067
      %v5140 = vpop.f32.mrf.mxu0
      %v5141 = vadd.f32 %v5012, %v5140
      %v5142 = vpop.f32.mrf.mxu0
      %v5143 = vadd.f32 %v5014, %v5142
      %5144 = vmatmul.bf16.gmra.mxu0 %v4076
      %v5145 = vpop.f32.mrf.mxu0
      %v5146 = vadd.f32 %v5017, %v5145
      %v5147 = vpop.f32.mrf.mxu0
      %v5148 = vadd.f32 %v5019, %v5147
      %5149 = vmatmul.bf16.gmra.mxu0 %v4085
      %v5150 = vpop.f32.mrf.mxu0
      %v5151 = vadd.f32 %v5022, %v5150
      %v5152 = vpop.f32.mrf.mxu0
      %v5153 = vadd.f32 %v5024, %v5152
      %5154 = vmatmul.bf16.gmra.mxu0 %v4094
      %v5155 = vpop.f32.mrf.mxu0
      %v5156 = vadd.f32 %v5027, %v5155
      %v5157 = vpop.f32.mrf.mxu0
      %v5158 = vadd.f32 %v5029, %v5157
      %5159 = vmatmul.bf16.gmra.mxu0 %v4103
      %v5160 = vpop.f32.mrf.mxu0
      %v5161 = vadd.f32 %v5032, %v5160
      %v5162 = vpop.f32.mrf.mxu0
      %v5163 = vadd.f32 %v5034, %v5162
      %5164 = vmatmul.bf16.gmra.mxu0 %v4112
      %v5165 = vpop.f32.mrf.mxu0
      %v5166 = vadd.f32 %v5037, %v5165
      %v5167 = vpop.f32.mrf.mxu0
      %v5168 = vadd.f32 %v5039, %v5167
      %5169 = vmatmul.bf16.gmra.mxu0 %v4121
      %v5170 = vpop.f32.mrf.mxu0
      %v5171 = vadd.f32 %v5042, %v5170
      %v5172 = vpop.f32.mrf.mxu0
      %v5173 = vadd.f32 %v5044, %v5172
      %5174 = vmatmul.bf16.gmra.mxu0 %v4130
      %v5175 = vpop.f32.mrf.mxu0
      %v5176 = vadd.f32 %v5047, %v5175
      %v5177 = vpop.f32.mrf.mxu0
      %v5178 = vadd.f32 %v5049, %v5177
      %5179 = vmatmul.bf16.gmra.mxu0 %v4139
      %v5180 = vpop.f32.mrf.mxu0
      %v5181 = vadd.f32 %v5052, %v5180
      %v5182 = vpop.f32.mrf.mxu0
      %v5183 = vadd.f32 %v5054, %v5182
      %5184 = vmatmul.bf16.gmra.mxu0 %v4148
      %v5185 = vpop.f32.mrf.mxu0
      %v5186 = vadd.f32 %v5057, %v5185
      %v5187 = vpop.f32.mrf.mxu0
      %v5188 = vadd.f32 %v5059, %v5187
      %5189 = vdwg.mxu0
      %5190 = vmatpush.bf16.msra.mxu0 %v4690
      %5191 = vmatpush.bf16.msra.mxu0 %v4689
      %5192 = vmatpush.bf16.msra.mxu0 %v4688
      %5193 = vmatpush.bf16.msra.mxu0 %v4687
      %5194 = vmatpush.bf16.msra.mxu0 %v4686
      %5195 = vmatpush.bf16.msra.mxu0 %v4685
      %5196 = vmatpush.bf16.msra.mxu0 %v4684
      %5197 = vmatpush.bf16.msra.mxu0 %v4683
      %5198 = vmatmul.bf16.gmra.mxu0 %v3942
      %v5199 = vpop.f32.mrf.mxu0
      %v5200 = vadd.f32 %v5071, %v5199
      %v5201 = vpop.f32.mrf.mxu0
      %v5202 = vadd.f32 %v5073, %v5201
      %5203 = vmatmul.bf16.gmra.mxu0 %v3951
      %v5204 = vpop.f32.mrf.mxu0
      %v5205 = vadd.f32 %v5076, %v5204
      %v5206 = vpop.f32.mrf.mxu0
      %v5207 = vadd.f32 %v5078, %v5206
      %5208 = vmatmul.bf16.gmra.mxu0 %v3960
      %v5209 = vpop.f32.mrf.mxu0
      %v5210 = vadd.f32 %v5081, %v5209
      %v5211 = vpop.f32.mrf.mxu0
      %v5212 = vadd.f32 %v5083, %v5211
      %5213 = vmatmul.bf16.gmra.mxu0 %v3969
      %v5214 = vpop.f32.mrf.mxu0
      %v5215 = vadd.f32 %v5086, %v5214
      %v5216 = vpop.f32.mrf.mxu0
      %v5217 = vadd.f32 %v5088, %v5216
      %5218 = vmatmul.bf16.gmra.mxu0 %v3978
      %v5219 = vpop.f32.mrf.mxu0
      %v5220 = vadd.f32 %v5091, %v5219
      %v5221 = vpop.f32.mrf.mxu0
      %v5222 = vadd.f32 %v5093, %v5221
      %5223 = vmatmul.bf16.gmra.mxu0 %v3987
      %v5224 = vpop.f32.mrf.mxu0
      %v5225 = vadd.f32 %v5096, %v5224
      %v5226 = vpop.f32.mrf.mxu0
      %v5227 = vadd.f32 %v5098, %v5226
      %5228 = vmatmul.bf16.gmra.mxu0 %v3996
      %v5229 = vpop.f32.mrf.mxu0
      %v5230 = vadd.f32 %v5101, %v5229
      %v5231 = vpop.f32.mrf.mxu0
      %v5232 = vadd.f32 %v5103, %v5231
      %5233 = vmatmul.bf16.gmra.mxu0 %v4005
      %v5234 = vpop.f32.mrf.mxu0
      %v5235 = vadd.f32 %v5106, %v5234
      %v5236 = vpop.f32.mrf.mxu0
      %v5237 = vadd.f32 %v5108, %v5236
      %5238 = vmatmul.bf16.gmra.mxu0 %v4014
      %v5239 = vpop.f32.mrf.mxu0
      %v5240 = vadd.f32 %v5111, %v5239
      %v5241 = vpop.f32.mrf.mxu0
      %v5242 = vadd.f32 %v5113, %v5241
      %5243 = vmatmul.bf16.gmra.mxu0 %v4023
      %v5244 = vpop.f32.mrf.mxu0
      %v5245 = vadd.f32 %v5116, %v5244
      %v5246 = vpop.f32.mrf.mxu0
      %v5247 = vadd.f32 %v5118, %v5246
      %5248 = vmatmul.bf16.gmra.mxu0 %v4032
      %v5249 = vpop.f32.mrf.mxu0
      %v5250 = vadd.f32 %v5121, %v5249
      %v5251 = vpop.f32.mrf.mxu0
      %v5252 = vadd.f32 %v5123, %v5251
      %5253 = vmatmul.bf16.gmra.mxu0 %v4041
      %v5254 = vpop.f32.mrf.mxu0
      %v5255 = vadd.f32 %v5126, %v5254
      %v5256 = vpop.f32.mrf.mxu0
      %v5257 = vadd.f32 %v5128, %v5256
      %5258 = vmatmul.bf16.gmra.mxu0 %v4050
      %v5259 = vpop.f32.mrf.mxu0
      %v5260 = vadd.f32 %v5131, %v5259
      %v5261 = vpop.f32.mrf.mxu0
      %v5262 = vadd.f32 %v5133, %v5261
      %5263 = vmatmul.bf16.gmra.mxu0 %v4059
      %v5264 = vpop.f32.mrf.mxu0
      %v5265 = vadd.f32 %v5136, %v5264
      %v5266 = vpop.f32.mrf.mxu0
      %v5267 = vadd.f32 %v5138, %v5266
      %5268 = vmatmul.bf16.gmra.mxu0 %v4068
      %v5269 = vpop.f32.mrf.mxu0
      %v5270 = vadd.f32 %v5141, %v5269
      %v5271 = vpop.f32.mrf.mxu0
      %v5272 = vadd.f32 %v5143, %v5271
      %5273 = vmatmul.bf16.gmra.mxu0 %v4077
      %v5274 = vpop.f32.mrf.mxu0
      %v5275 = vadd.f32 %v5146, %v5274
      %v5276 = vpop.f32.mrf.mxu0
      %v5277 = vadd.f32 %v5148, %v5276
      %5278 = vmatmul.bf16.gmra.mxu0 %v4086
      %v5279 = vpop.f32.mrf.mxu0
      %v5280 = vadd.f32 %v5151, %v5279
      %v5281 = vpop.f32.mrf.mxu0
      %v5282 = vadd.f32 %v5153, %v5281
      %5283 = vmatmul.bf16.gmra.mxu0 %v4095
      %v5284 = vpop.f32.mrf.mxu0
      %v5285 = vadd.f32 %v5156, %v5284
      %v5286 = vpop.f32.mrf.mxu0
      %v5287 = vadd.f32 %v5158, %v5286
      %5288 = vmatmul.bf16.gmra.mxu0 %v4104
      %v5289 = vpop.f32.mrf.mxu0
      %v5290 = vadd.f32 %v5161, %v5289
      %v5291 = vpop.f32.mrf.mxu0
      %v5292 = vadd.f32 %v5163, %v5291
      %5293 = vmatmul.bf16.gmra.mxu0 %v4113
      %v5294 = vpop.f32.mrf.mxu0
      %v5295 = vadd.f32 %v5166, %v5294
      %v5296 = vpop.f32.mrf.mxu0
      %v5297 = vadd.f32 %v5168, %v5296
      %5298 = vmatmul.bf16.gmra.mxu0 %v4122
      %v5299 = vpop.f32.mrf.mxu0
      %v5300 = vadd.f32 %v5171, %v5299
      %v5301 = vpop.f32.mrf.mxu0
      %v5302 = vadd.f32 %v5173, %v5301
      %5303 = vmatmul.bf16.gmra.mxu0 %v4131
      %v5304 = vpop.f32.mrf.mxu0
      %v5305 = vadd.f32 %v5176, %v5304
      %v5306 = vpop.f32.mrf.mxu0
      %v5307 = vadd.f32 %v5178, %v5306
      %5308 = vmatmul.bf16.gmra.mxu0 %v4140
      %v5309 = vpop.f32.mrf.mxu0
      %v5310 = vadd.f32 %v5181, %v5309
      %v5311 = vpop.f32.mrf.mxu0
      %v5312 = vadd.f32 %v5183, %v5311
      %5313 = vmatmul.bf16.gmra.mxu0 %v4149
      %v5314 = vpop.f32.mrf.mxu0
      %v5315 = vadd.f32 %v5186, %v5314
      %v5316 = vpop.f32.mrf.mxu0
      %v5317 = vadd.f32 %v5188, %v5316
      %5318 = vdwg.mxu0
      %5319 = vmatpush.bf16.msra.mxu0 %v4698
      %5320 = vmatpush.bf16.msra.mxu0 %v4697
      %5321 = vmatpush.bf16.msra.mxu0 %v4696
      %5322 = vmatpush.bf16.msra.mxu0 %v4695
      %5323 = vmatpush.bf16.msra.mxu0 %v4694
      %5324 = vmatpush.bf16.msra.mxu0 %v4693
      %5325 = vmatpush.bf16.msra.mxu0 %v4692
      %5326 = vmatpush.bf16.msra.mxu0 %v4691
      %5327 = vmatmul.bf16.gmra.mxu0 %v3943
      %v5328 = vpop.f32.mrf.mxu0
      %v5329 = vadd.f32 %v5200, %v5328
      %v5330 = vpop.f32.mrf.mxu0
      %v5331 = vadd.f32 %v5202, %v5330
      %5332 = vmatmul.bf16.gmra.mxu0 %v3952
      %v5333 = vpop.f32.mrf.mxu0
      %v5334 = vadd.f32 %v5205, %v5333
      %v5335 = vpop.f32.mrf.mxu0
      %v5336 = vadd.f32 %v5207, %v5335
      %5337 = vmatmul.bf16.gmra.mxu0 %v3961
      %v5338 = vpop.f32.mrf.mxu0
      %v5339 = vadd.f32 %v5210, %v5338
      %v5340 = vpop.f32.mrf.mxu0
      %v5341 = vadd.f32 %v5212, %v5340
      %5342 = vmatmul.bf16.gmra.mxu0 %v3970
      %v5343 = vpop.f32.mrf.mxu0
      %v5344 = vadd.f32 %v5215, %v5343
      %v5345 = vpop.f32.mrf.mxu0
      %v5346 = vadd.f32 %v5217, %v5345
      %5347 = vmatmul.bf16.gmra.mxu0 %v3979
      %v5348 = vpop.f32.mrf.mxu0
      %v5349 = vadd.f32 %v5220, %v5348
      %v5350 = vpop.f32.mrf.mxu0
      %v5351 = vadd.f32 %v5222, %v5350
      %5352 = vmatmul.bf16.gmra.mxu0 %v3988
      %v5353 = vpop.f32.mrf.mxu0
      %v5354 = vadd.f32 %v5225, %v5353
      %v5355 = vpop.f32.mrf.mxu0
      %v5356 = vadd.f32 %v5227, %v5355
      %5357 = vmatmul.bf16.gmra.mxu0 %v3997
      %v5358 = vpop.f32.mrf.mxu0
      %v5359 = vadd.f32 %v5230, %v5358
      %v5360 = vpop.f32.mrf.mxu0
      %v5361 = vadd.f32 %v5232, %v5360
      %5362 = vmatmul.bf16.gmra.mxu0 %v4006
      %v5363 = vpop.f32.mrf.mxu0
      %v5364 = vadd.f32 %v5235, %v5363
      %v5365 = vpop.f32.mrf.mxu0
      %v5366 = vadd.f32 %v5237, %v5365
      %5367 = vmatmul.bf16.gmra.mxu0 %v4015
      %v5368 = vpop.f32.mrf.mxu0
      %v5369 = vadd.f32 %v5240, %v5368
      %v5370 = vpop.f32.mrf.mxu0
      %v5371 = vadd.f32 %v5242, %v5370
      %5372 = vmatmul.bf16.gmra.mxu0 %v4024
      %v5373 = vpop.f32.mrf.mxu0
      %v5374 = vadd.f32 %v5245, %v5373
      %v5375 = vpop.f32.mrf.mxu0
      %v5376 = vadd.f32 %v5247, %v5375
      %5377 = vmatmul.bf16.gmra.mxu0 %v4033
      %v5378 = vpop.f32.mrf.mxu0
      %v5379 = vadd.f32 %v5250, %v5378
      %v5380 = vpop.f32.mrf.mxu0
      %v5381 = vadd.f32 %v5252, %v5380
      %5382 = vmatmul.bf16.gmra.mxu0 %v4042
      %v5383 = vpop.f32.mrf.mxu0
      %v5384 = vadd.f32 %v5255, %v5383
      %v5385 = vpop.f32.mrf.mxu0
      %v5386 = vadd.f32 %v5257, %v5385
      %5387 = vmatmul.bf16.gmra.mxu0 %v4051
      %v5388 = vpop.f32.mrf.mxu0
      %v5389 = vadd.f32 %v5260, %v5388
      %v5390 = vpop.f32.mrf.mxu0
      %v5391 = vadd.f32 %v5262, %v5390
      %5392 = vmatmul.bf16.gmra.mxu0 %v4060
      %v5393 = vpop.f32.mrf.mxu0
      %v5394 = vadd.f32 %v5265, %v5393
      %v5395 = vpop.f32.mrf.mxu0
      %v5396 = vadd.f32 %v5267, %v5395
      %5397 = vmatmul.bf16.gmra.mxu0 %v4069
      %v5398 = vpop.f32.mrf.mxu0
      %v5399 = vadd.f32 %v5270, %v5398
      %v5400 = vpop.f32.mrf.mxu0
      %v5401 = vadd.f32 %v5272, %v5400
      %5402 = vmatmul.bf16.gmra.mxu0 %v4078
      %v5403 = vpop.f32.mrf.mxu0
      %v5404 = vadd.f32 %v5275, %v5403
      %v5405 = vpop.f32.mrf.mxu0
      %v5406 = vadd.f32 %v5277, %v5405
      %5407 = vmatmul.bf16.gmra.mxu0 %v4087
      %v5408 = vpop.f32.mrf.mxu0
      %v5409 = vadd.f32 %v5280, %v5408
      %v5410 = vpop.f32.mrf.mxu0
      %v5411 = vadd.f32 %v5282, %v5410
      %5412 = vmatmul.bf16.gmra.mxu0 %v4096
      %v5413 = vpop.f32.mrf.mxu0
      %v5414 = vadd.f32 %v5285, %v5413
      %v5415 = vpop.f32.mrf.mxu0
      %v5416 = vadd.f32 %v5287, %v5415
      %5417 = vmatmul.bf16.gmra.mxu0 %v4105
      %v5418 = vpop.f32.mrf.mxu0
      %v5419 = vadd.f32 %v5290, %v5418
      %v5420 = vpop.f32.mrf.mxu0
      %v5421 = vadd.f32 %v5292, %v5420
      %5422 = vmatmul.bf16.gmra.mxu0 %v4114
      %v5423 = vpop.f32.mrf.mxu0
      %v5424 = vadd.f32 %v5295, %v5423
      %v5425 = vpop.f32.mrf.mxu0
      %v5426 = vadd.f32 %v5297, %v5425
      %5427 = vmatmul.bf16.gmra.mxu0 %v4123
      %v5428 = vpop.f32.mrf.mxu0
      %v5429 = vadd.f32 %v5300, %v5428
      %v5430 = vpop.f32.mrf.mxu0
      %v5431 = vadd.f32 %v5302, %v5430
      %5432 = vmatmul.bf16.gmra.mxu0 %v4132
      %v5433 = vpop.f32.mrf.mxu0
      %v5434 = vadd.f32 %v5305, %v5433
      %v5435 = vpop.f32.mrf.mxu0
      %v5436 = vadd.f32 %v5307, %v5435
      %5437 = vmatmul.bf16.gmra.mxu0 %v4141
      %v5438 = vpop.f32.mrf.mxu0
      %v5439 = vadd.f32 %v5310, %v5438
      %v5440 = vpop.f32.mrf.mxu0
      %v5441 = vadd.f32 %v5312, %v5440
      %5442 = vmatmul.bf16.gmra.mxu0 %v4150
      %v5443 = vpop.f32.mrf.mxu0
      %v5444 = vadd.f32 %v5315, %v5443
      %v5445 = vpop.f32.mrf.mxu0
      %v5446 = vadd.f32 %v5317, %v5445
      %5447 = vdwg.mxu0
      %5448 = vmatpush.bf16.msra.mxu0 %v4706
      %5449 = vmatpush.bf16.msra.mxu0 %v4705
      %5450 = vmatpush.bf16.msra.mxu0 %v4704
      %5451 = vmatpush.bf16.msra.mxu0 %v4703
      %5452 = vmatpush.bf16.msra.mxu0 %v4702
      %5453 = vmatpush.bf16.msra.mxu0 %v4701
      %5454 = vmatpush.bf16.msra.mxu0 %v4700
      %5455 = vmatpush.bf16.msra.mxu0 %v4699
      %5456 = vmatmul.bf16.gmra.mxu0 %v3944
      %v5457 = vpop.f32.mrf.mxu0
      %v5458 = vadd.f32 %v5329, %v5457
      %v5459 = vpop.f32.mrf.mxu0
      %v5460 = vadd.f32 %v5331, %v5459
      %5461 = vmatmul.bf16.gmra.mxu0 %v3953
      %v5462 = vpop.f32.mrf.mxu0
      %v5463 = vadd.f32 %v5334, %v5462
      %v5464 = vpop.f32.mrf.mxu0
      %v5465 = vadd.f32 %v5336, %v5464
      %5466 = vmatmul.bf16.gmra.mxu0 %v3962
      %v5467 = vpop.f32.mrf.mxu0
      %v5468 = vadd.f32 %v5339, %v5467
      %v5469 = vpop.f32.mrf.mxu0
      %v5470 = vadd.f32 %v5341, %v5469
      %5471 = vmatmul.bf16.gmra.mxu0 %v3971
      %v5472 = vpop.f32.mrf.mxu0
      %v5473 = vadd.f32 %v5344, %v5472
      %v5474 = vpop.f32.mrf.mxu0
      %v5475 = vadd.f32 %v5346, %v5474
      %5476 = vmatmul.bf16.gmra.mxu0 %v3980
      %v5477 = vpop.f32.mrf.mxu0
      %v5478 = vadd.f32 %v5349, %v5477
      %v5479 = vpop.f32.mrf.mxu0
      %v5480 = vadd.f32 %v5351, %v5479
      %5481 = vmatmul.bf16.gmra.mxu0 %v3989
      %v5482 = vpop.f32.mrf.mxu0
      %v5483 = vadd.f32 %v5354, %v5482
      %v5484 = vpop.f32.mrf.mxu0
      %v5485 = vadd.f32 %v5356, %v5484
      %5486 = vmatmul.bf16.gmra.mxu0 %v3998
      %v5487 = vpop.f32.mrf.mxu0
      %v5488 = vadd.f32 %v5359, %v5487
      %v5489 = vpop.f32.mrf.mxu0
      %v5490 = vadd.f32 %v5361, %v5489
      %5491 = vmatmul.bf16.gmra.mxu0 %v4007
      %v5492 = vpop.f32.mrf.mxu0
      %v5493 = vadd.f32 %v5364, %v5492
      %v5494 = vpop.f32.mrf.mxu0
      %v5495 = vadd.f32 %v5366, %v5494
      %5496 = vmatmul.bf16.gmra.mxu0 %v4016
      %v5497 = vpop.f32.mrf.mxu0
      %v5498 = vadd.f32 %v5369, %v5497
      %v5499 = vpop.f32.mrf.mxu0
      %v5500 = vadd.f32 %v5371, %v5499
      %5501 = vmatmul.bf16.gmra.mxu0 %v4025
      %v5502 = vpop.f32.mrf.mxu0
      %v5503 = vadd.f32 %v5374, %v5502
      %v5504 = vpop.f32.mrf.mxu0
      %v5505 = vadd.f32 %v5376, %v5504
      %5506 = vmatmul.bf16.gmra.mxu0 %v4034
      %v5507 = vpop.f32.mrf.mxu0
      %v5508 = vadd.f32 %v5379, %v5507
      %v5509 = vpop.f32.mrf.mxu0
      %v5510 = vadd.f32 %v5381, %v5509
      %5511 = vmatmul.bf16.gmra.mxu0 %v4043
      %v5512 = vpop.f32.mrf.mxu0
      %v5513 = vadd.f32 %v5384, %v5512
      %v5514 = vpop.f32.mrf.mxu0
      %v5515 = vadd.f32 %v5386, %v5514
      %5516 = vmatmul.bf16.gmra.mxu0 %v4052
      %v5517 = vpop.f32.mrf.mxu0
      %v5518 = vadd.f32 %v5389, %v5517
      %v5519 = vpop.f32.mrf.mxu0
      %v5520 = vadd.f32 %v5391, %v5519
      %5521 = vmatmul.bf16.gmra.mxu0 %v4061
      %v5522 = vpop.f32.mrf.mxu0
      %v5523 = vadd.f32 %v5394, %v5522
      %v5524 = vpop.f32.mrf.mxu0
      %v5525 = vadd.f32 %v5396, %v5524
      %5526 = vmatmul.bf16.gmra.mxu0 %v4070
      %v5527 = vpop.f32.mrf.mxu0
      %v5528 = vadd.f32 %v5399, %v5527
      %v5529 = vpop.f32.mrf.mxu0
      %v5530 = vadd.f32 %v5401, %v5529
      %5531 = vmatmul.bf16.gmra.mxu0 %v4079
      %v5532 = vpop.f32.mrf.mxu0
      %v5533 = vadd.f32 %v5404, %v5532
      %v5534 = vpop.f32.mrf.mxu0
      %v5535 = vadd.f32 %v5406, %v5534
      %5536 = vmatmul.bf16.gmra.mxu0 %v4088
      %v5537 = vpop.f32.mrf.mxu0
      %v5538 = vadd.f32 %v5409, %v5537
      %v5539 = vpop.f32.mrf.mxu0
      %v5540 = vadd.f32 %v5411, %v5539
      %5541 = vmatmul.bf16.gmra.mxu0 %v4097
      %v5542 = vpop.f32.mrf.mxu0
      %v5543 = vadd.f32 %v5414, %v5542
      %v5544 = vpop.f32.mrf.mxu0
      %v5545 = vadd.f32 %v5416, %v5544
      %5546 = vmatmul.bf16.gmra.mxu0 %v4106
      %v5547 = vpop.f32.mrf.mxu0
      %v5548 = vadd.f32 %v5419, %v5547
      %v5549 = vpop.f32.mrf.mxu0
      %v5550 = vadd.f32 %v5421, %v5549
      %5551 = vmatmul.bf16.gmra.mxu0 %v4115
      %v5552 = vpop.f32.mrf.mxu0
      %v5553 = vadd.f32 %v5424, %v5552
      %v5554 = vpop.f32.mrf.mxu0
      %v5555 = vadd.f32 %v5426, %v5554
      %5556 = vmatmul.bf16.gmra.mxu0 %v4124
      %v5557 = vpop.f32.mrf.mxu0
      %v5558 = vadd.f32 %v5429, %v5557
      %v5559 = vpop.f32.mrf.mxu0
      %v5560 = vadd.f32 %v5431, %v5559
      %5561 = vmatmul.bf16.gmra.mxu0 %v4133
      %v5562 = vpop.f32.mrf.mxu0
      %v5563 = vadd.f32 %v5434, %v5562
      %v5564 = vpop.f32.mrf.mxu0
      %v5565 = vadd.f32 %v5436, %v5564
      %5566 = vmatmul.bf16.gmra.mxu0 %v4142
      %v5567 = vpop.f32.mrf.mxu0
      %v5568 = vadd.f32 %v5439, %v5567
      %v5569 = vpop.f32.mrf.mxu0
      %v5570 = vadd.f32 %v5441, %v5569
      %5571 = vmatmul.bf16.gmra.mxu0 %v4151
      %v5572 = vpop.f32.mrf.mxu0
      %v5573 = vadd.f32 %v5444, %v5572
      %v5574 = vpop.f32.mrf.mxu0
      %v5575 = vadd.f32 %v5446, %v5574
      %5576 = vdwg.mxu0
      %5577 = vmatpush.bf16.msra.mxu0 %v4714
      %5578 = vmatpush.bf16.msra.mxu0 %v4713
      %5579 = vmatpush.bf16.msra.mxu0 %v4712
      %5580 = vmatpush.bf16.msra.mxu0 %v4711
      %5581 = vmatpush.bf16.msra.mxu0 %v4710
      %5582 = vmatpush.bf16.msra.mxu0 %v4709
      %5583 = vmatpush.bf16.msra.mxu0 %v4708
      %5584 = vmatpush.bf16.msra.mxu0 %v4707
      %5585 = vmatmul.bf16.gmra.mxu0 %v3945
      %v5586 = vpop.f32.mrf.mxu0
      %v5587 = vadd.f32 %v5458, %v5586
      %v5588 = vpop.f32.mrf.mxu0
      %v5589 = vadd.f32 %v5460, %v5588
      %5590 = vmatmul.bf16.gmra.mxu0 %v3954
      %v5591 = vpop.f32.mrf.mxu0
      %v5592 = vadd.f32 %v5463, %v5591
      %v5593 = vpop.f32.mrf.mxu0
      %v5594 = vadd.f32 %v5465, %v5593
      %5595 = vmatmul.bf16.gmra.mxu0 %v3963
      %v5596 = vpop.f32.mrf.mxu0
      %v5597 = vadd.f32 %v5468, %v5596
      %v5598 = vpop.f32.mrf.mxu0
      %v5599 = vadd.f32 %v5470, %v5598
      %5600 = vmatmul.bf16.gmra.mxu0 %v3972
      %v5601 = vpop.f32.mrf.mxu0
      %v5602 = vadd.f32 %v5473, %v5601
      %v5603 = vpop.f32.mrf.mxu0
      %v5604 = vadd.f32 %v5475, %v5603
      %5605 = vmatmul.bf16.gmra.mxu0 %v3981
      %v5606 = vpop.f32.mrf.mxu0
      %v5607 = vadd.f32 %v5478, %v5606
      %v5608 = vpop.f32.mrf.mxu0
      %v5609 = vadd.f32 %v5480, %v5608
      %5610 = vmatmul.bf16.gmra.mxu0 %v3990
      %v5611 = vpop.f32.mrf.mxu0
      %v5612 = vadd.f32 %v5483, %v5611
      %v5613 = vpop.f32.mrf.mxu0
      %v5614 = vadd.f32 %v5485, %v5613
      %5615 = vmatmul.bf16.gmra.mxu0 %v3999
      %v5616 = vpop.f32.mrf.mxu0
      %v5617 = vadd.f32 %v5488, %v5616
      %v5618 = vpop.f32.mrf.mxu0
      %v5619 = vadd.f32 %v5490, %v5618
      %5620 = vmatmul.bf16.gmra.mxu0 %v4008
      %v5621 = vpop.f32.mrf.mxu0
      %v5622 = vadd.f32 %v5493, %v5621
      %v5623 = vpop.f32.mrf.mxu0
      %v5624 = vadd.f32 %v5495, %v5623
      %5625 = vmatmul.bf16.gmra.mxu0 %v4017
      %v5626 = vpop.f32.mrf.mxu0
      %v5627 = vadd.f32 %v5498, %v5626
      %v5628 = vpop.f32.mrf.mxu0
      %v5629 = vadd.f32 %v5500, %v5628
      %5630 = vmatmul.bf16.gmra.mxu0 %v4026
      %v5631 = vpop.f32.mrf.mxu0
      %v5632 = vadd.f32 %v5503, %v5631
      %v5633 = vpop.f32.mrf.mxu0
      %v5634 = vadd.f32 %v5505, %v5633
      %5635 = vmatmul.bf16.gmra.mxu0 %v4035
      %v5636 = vpop.f32.mrf.mxu0
      %v5637 = vadd.f32 %v5508, %v5636
      %v5638 = vpop.f32.mrf.mxu0
      %v5639 = vadd.f32 %v5510, %v5638
      %5640 = vmatmul.bf16.gmra.mxu0 %v4044
      %v5641 = vpop.f32.mrf.mxu0
      %v5642 = vadd.f32 %v5513, %v5641
      %v5643 = vpop.f32.mrf.mxu0
      %v5644 = vadd.f32 %v5515, %v5643
      %5645 = vmatmul.bf16.gmra.mxu0 %v4053
      %v5646 = vpop.f32.mrf.mxu0
      %v5647 = vadd.f32 %v5518, %v5646
      %v5648 = vpop.f32.mrf.mxu0
      %v5649 = vadd.f32 %v5520, %v5648
      %5650 = vmatmul.bf16.gmra.mxu0 %v4062
      %v5651 = vpop.f32.mrf.mxu0
      %v5652 = vadd.f32 %v5523, %v5651
      %v5653 = vpop.f32.mrf.mxu0
      %v5654 = vadd.f32 %v5525, %v5653
      %5655 = vmatmul.bf16.gmra.mxu0 %v4071
      %v5656 = vpop.f32.mrf.mxu0
      %v5657 = vadd.f32 %v5528, %v5656
      %v5658 = vpop.f32.mrf.mxu0
      %v5659 = vadd.f32 %v5530, %v5658
      %5660 = vmatmul.bf16.gmra.mxu0 %v4080
      %v5661 = vpop.f32.mrf.mxu0
      %v5662 = vadd.f32 %v5533, %v5661
      %v5663 = vpop.f32.mrf.mxu0
      %v5664 = vadd.f32 %v5535, %v5663
      %5665 = vmatmul.bf16.gmra.mxu0 %v4089
      %v5666 = vpop.f32.mrf.mxu0
      %v5667 = vadd.f32 %v5538, %v5666
      %v5668 = vpop.f32.mrf.mxu0
      %v5669 = vadd.f32 %v5540, %v5668
      %5670 = vmatmul.bf16.gmra.mxu0 %v4098
      %v5671 = vpop.f32.mrf.mxu0
      %v5672 = vadd.f32 %v5543, %v5671
      %v5673 = vpop.f32.mrf.mxu0
      %v5674 = vadd.f32 %v5545, %v5673
      %5675 = vmatmul.bf16.gmra.mxu0 %v4107
      %v5676 = vpop.f32.mrf.mxu0
      %v5677 = vadd.f32 %v5548, %v5676
      %v5678 = vpop.f32.mrf.mxu0
      %v5679 = vadd.f32 %v5550, %v5678
      %5680 = vmatmul.bf16.gmra.mxu0 %v4116
      %v5681 = vpop.f32.mrf.mxu0
      %v5682 = vadd.f32 %v5553, %v5681
      %v5683 = vpop.f32.mrf.mxu0
      %v5684 = vadd.f32 %v5555, %v5683
      %5685 = vmatmul.bf16.gmra.mxu0 %v4125
      %v5686 = vpop.f32.mrf.mxu0
      %v5687 = vadd.f32 %v5558, %v5686
      %v5688 = vpop.f32.mrf.mxu0
      %v5689 = vadd.f32 %v5560, %v5688
      %5690 = vmatmul.bf16.gmra.mxu0 %v4134
      %v5691 = vpop.f32.mrf.mxu0
      %v5692 = vadd.f32 %v5563, %v5691
      %v5693 = vpop.f32.mrf.mxu0
      %v5694 = vadd.f32 %v5565, %v5693
      %5695 = vmatmul.bf16.gmra.mxu0 %v4143
      %v5696 = vpop.f32.mrf.mxu0
      %v5697 = vadd.f32 %v5568, %v5696
      %v5698 = vpop.f32.mrf.mxu0
      %v5699 = vadd.f32 %v5570, %v5698
      %5700 = vmatmul.bf16.gmra.mxu0 %v4152
      %v5701 = vpop.f32.mrf.mxu0
      %v5702 = vadd.f32 %v5573, %v5701
      %v5703 = vpop.f32.mrf.mxu0
      %v5704 = vadd.f32 %v5575, %v5703
      %5705 = vdwg.mxu0
      %5706 = vmatpush.bf16.msra.mxu0 %v4722
      %5707 = vmatpush.bf16.msra.mxu0 %v4721
      %5708 = vmatpush.bf16.msra.mxu0 %v4720
      %5709 = vmatpush.bf16.msra.mxu0 %v4719
      %5710 = vmatpush.bf16.msra.mxu0 %v4718
      %5711 = vmatpush.bf16.msra.mxu0 %v4717
      %5712 = vmatpush.bf16.msra.mxu0 %v4716
      %5713 = vmatpush.bf16.msra.mxu0 %v4715
      %5714 = vmatmul.bf16.gmra.mxu0 %v3946
      %v5715 = vpop.f32.mrf.mxu0
      %v5716 = vadd.f32 %v5587, %v5715
      %v5717 = vpop.f32.mrf.mxu0
      %v5718 = vadd.f32 %v5589, %v5717
      %5719 = vmatmul.bf16.gmra.mxu0 %v3955
      %v5720 = vpop.f32.mrf.mxu0
      %v5721 = vadd.f32 %v5592, %v5720
      %v5722 = vpop.f32.mrf.mxu0
      %v5723 = vadd.f32 %v5594, %v5722
      %5724 = vmatmul.bf16.gmra.mxu0 %v3964
      %v5725 = vpop.f32.mrf.mxu0
      %v5726 = vadd.f32 %v5597, %v5725
      %v5727 = vpop.f32.mrf.mxu0
      %v5728 = vadd.f32 %v5599, %v5727
      %5729 = vmatmul.bf16.gmra.mxu0 %v3973
      %v5730 = vpop.f32.mrf.mxu0
      %v5731 = vadd.f32 %v5602, %v5730
      %v5732 = vpop.f32.mrf.mxu0
      %v5733 = vadd.f32 %v5604, %v5732
      %5734 = vmatmul.bf16.gmra.mxu0 %v3982
      %v5735 = vpop.f32.mrf.mxu0
      %v5736 = vadd.f32 %v5607, %v5735
      %v5737 = vpop.f32.mrf.mxu0
      %v5738 = vadd.f32 %v5609, %v5737
      %5739 = vmatmul.bf16.gmra.mxu0 %v3991
      %v5740 = vpop.f32.mrf.mxu0
      %v5741 = vadd.f32 %v5612, %v5740
      %v5742 = vpop.f32.mrf.mxu0
      %v5743 = vadd.f32 %v5614, %v5742
      %5744 = vmatmul.bf16.gmra.mxu0 %v4000
      %v5745 = vpop.f32.mrf.mxu0
      %v5746 = vadd.f32 %v5617, %v5745
      %v5747 = vpop.f32.mrf.mxu0
      %v5748 = vadd.f32 %v5619, %v5747
      %5749 = vmatmul.bf16.gmra.mxu0 %v4009
      %v5750 = vpop.f32.mrf.mxu0
      %v5751 = vadd.f32 %v5622, %v5750
      %v5752 = vpop.f32.mrf.mxu0
      %v5753 = vadd.f32 %v5624, %v5752
      %5754 = vmatmul.bf16.gmra.mxu0 %v4018
      %v5755 = vpop.f32.mrf.mxu0
      %v5756 = vadd.f32 %v5627, %v5755
      %v5757 = vpop.f32.mrf.mxu0
      %v5758 = vadd.f32 %v5629, %v5757
      %5759 = vmatmul.bf16.gmra.mxu0 %v4027
      %v5760 = vpop.f32.mrf.mxu0
      %v5761 = vadd.f32 %v5632, %v5760
      %v5762 = vpop.f32.mrf.mxu0
      %v5763 = vadd.f32 %v5634, %v5762
      %5764 = vmatmul.bf16.gmra.mxu0 %v4036
      %v5765 = vpop.f32.mrf.mxu0
      %v5766 = vadd.f32 %v5637, %v5765
      %v5767 = vpop.f32.mrf.mxu0
      %v5768 = vadd.f32 %v5639, %v5767
      %5769 = vmatmul.bf16.gmra.mxu0 %v4045
      %v5770 = vpop.f32.mrf.mxu0
      %v5771 = vadd.f32 %v5642, %v5770
      %v5772 = vpop.f32.mrf.mxu0
      %v5773 = vadd.f32 %v5644, %v5772
      %5774 = vmatmul.bf16.gmra.mxu0 %v4054
      %v5775 = vpop.f32.mrf.mxu0
      %v5776 = vadd.f32 %v5647, %v5775
      %v5777 = vpop.f32.mrf.mxu0
      %v5778 = vadd.f32 %v5649, %v5777
      %5779 = vmatmul.bf16.gmra.mxu0 %v4063
      %v5780 = vpop.f32.mrf.mxu0
      %v5781 = vadd.f32 %v5652, %v5780
      %v5782 = vpop.f32.mrf.mxu0
      %v5783 = vadd.f32 %v5654, %v5782
      %5784 = vmatmul.bf16.gmra.mxu0 %v4072
      %v5785 = vpop.f32.mrf.mxu0
      %v5786 = vadd.f32 %v5657, %v5785
      %v5787 = vpop.f32.mrf.mxu0
      %v5788 = vadd.f32 %v5659, %v5787
      %5789 = vmatmul.bf16.gmra.mxu0 %v4081
      %v5790 = vpop.f32.mrf.mxu0
      %v5791 = vadd.f32 %v5662, %v5790
      %v5792 = vpop.f32.mrf.mxu0
      %v5793 = vadd.f32 %v5664, %v5792
      %5794 = vmatmul.bf16.gmra.mxu0 %v4090
      %v5795 = vpop.f32.mrf.mxu0
      %v5796 = vadd.f32 %v5667, %v5795
      %v5797 = vpop.f32.mrf.mxu0
      %v5798 = vadd.f32 %v5669, %v5797
      %5799 = vmatmul.bf16.gmra.mxu0 %v4099
      %v5800 = vpop.f32.mrf.mxu0
      %v5801 = vadd.f32 %v5672, %v5800
      %v5802 = vpop.f32.mrf.mxu0
      %v5803 = vadd.f32 %v5674, %v5802
      %5804 = vmatmul.bf16.gmra.mxu0 %v4108
      %v5805 = vpop.f32.mrf.mxu0
      %v5806 = vadd.f32 %v5677, %v5805
      %v5807 = vpop.f32.mrf.mxu0
      %v5808 = vadd.f32 %v5679, %v5807
      %5809 = vmatmul.bf16.gmra.mxu0 %v4117
      %v5810 = vpop.f32.mrf.mxu0
      %v5811 = vadd.f32 %v5682, %v5810
      %v5812 = vpop.f32.mrf.mxu0
      %v5813 = vadd.f32 %v5684, %v5812
      %5814 = vmatmul.bf16.gmra.mxu0 %v4126
      %v5815 = vpop.f32.mrf.mxu0
      %v5816 = vadd.f32 %v5687, %v5815
      %v5817 = vpop.f32.mrf.mxu0
      %v5818 = vadd.f32 %v5689, %v5817
      %5819 = vmatmul.bf16.gmra.mxu0 %v4135
      %v5820 = vpop.f32.mrf.mxu0
      %v5821 = vadd.f32 %v5692, %v5820
      %v5822 = vpop.f32.mrf.mxu0
      %v5823 = vadd.f32 %v5694, %v5822
      %5824 = vmatmul.bf16.gmra.mxu0 %v4144
      %v5825 = vpop.f32.mrf.mxu0
      %v5826 = vadd.f32 %v5697, %v5825
      %v5827 = vpop.f32.mrf.mxu0
      %v5828 = vadd.f32 %v5699, %v5827
      %5829 = vmatmul.bf16.gmra.mxu0 %v4153
      %v5830 = vpop.f32.mrf.mxu0
      %v5831 = vadd.f32 %v5702, %v5830
      %v5832 = vpop.f32.mrf.mxu0
      %v5833 = vadd.f32 %v5704, %v5832
      %5834 = vdwg.mxu0
      %5835 = vmatpush.bf16.msra.mxu0 %v4730
      %5836 = vmatpush.bf16.msra.mxu0 %v4729
      %5837 = vmatpush.bf16.msra.mxu0 %v4728
      %5838 = vmatpush.bf16.msra.mxu0 %v4727
      %5839 = vmatpush.bf16.msra.mxu0 %v4726
      %5840 = vmatpush.bf16.msra.mxu0 %v4725
      %5841 = vmatpush.bf16.msra.mxu0 %v4724
      %5842 = vmatpush.bf16.msra.mxu0 %v4723
      %5843 = vmatmul.bf16.gmra.mxu0 %v3947
      %v5844 = vpop.f32.mrf.mxu0
      %v5845 = vadd.f32 %v5716, %v5844
      %v5846 = vpop.f32.mrf.mxu0
      %v5847 = vadd.f32 %v5718, %v5846
      %5848 = vmatmul.bf16.gmra.mxu0 %v3956
      %v5849 = vpop.f32.mrf.mxu0
      %v5850 = vadd.f32 %v5721, %v5849
      %v5851 = vpop.f32.mrf.mxu0
      %v5852 = vadd.f32 %v5723, %v5851
      %5853 = vmatmul.bf16.gmra.mxu0 %v3965
      %v5854 = vpop.f32.mrf.mxu0
      %v5855 = vadd.f32 %v5726, %v5854
      %v5856 = vpop.f32.mrf.mxu0
      %v5857 = vadd.f32 %v5728, %v5856
      %5858 = vmatmul.bf16.gmra.mxu0 %v3974
      %v5859 = vpop.f32.mrf.mxu0
      %v5860 = vadd.f32 %v5731, %v5859
      %v5861 = vpop.f32.mrf.mxu0
      %v5862 = vadd.f32 %v5733, %v5861
      %5863 = vmatmul.bf16.gmra.mxu0 %v3983
      %v5864 = vpop.f32.mrf.mxu0
      %v5865 = vadd.f32 %v5736, %v5864
      %v5866 = vpop.f32.mrf.mxu0
      %v5867 = vadd.f32 %v5738, %v5866
      %5868 = vmatmul.bf16.gmra.mxu0 %v3992
      %v5869 = vpop.f32.mrf.mxu0
      %v5870 = vadd.f32 %v5741, %v5869
      %v5871 = vpop.f32.mrf.mxu0
      %v5872 = vadd.f32 %v5743, %v5871
      %5873 = vmatmul.bf16.gmra.mxu0 %v4001
      %v5874 = vpop.f32.mrf.mxu0
      %v5875 = vadd.f32 %v5746, %v5874
      %v5876 = vpop.f32.mrf.mxu0
      %v5877 = vadd.f32 %v5748, %v5876
      %5878 = vmatmul.bf16.gmra.mxu0 %v4010
      %v5879 = vpop.f32.mrf.mxu0
      %v5880 = vadd.f32 %v5751, %v5879
      %v5881 = vpop.f32.mrf.mxu0
      %v5882 = vadd.f32 %v5753, %v5881
      %5883 = vmatmul.bf16.gmra.mxu0 %v4019
      %v5884 = vpop.f32.mrf.mxu0
      %v5885 = vadd.f32 %v5756, %v5884
      %v5886 = vpop.f32.mrf.mxu0
      %v5887 = vadd.f32 %v5758, %v5886
      %5888 = vmatmul.bf16.gmra.mxu0 %v4028
      %v5889 = vpop.f32.mrf.mxu0
      %v5890 = vadd.f32 %v5761, %v5889
      %v5891 = vpop.f32.mrf.mxu0
      %v5892 = vadd.f32 %v5763, %v5891
      %5893 = vmatmul.bf16.gmra.mxu0 %v4037
      %v5894 = vpop.f32.mrf.mxu0
      %v5895 = vadd.f32 %v5766, %v5894
      %v5896 = vpop.f32.mrf.mxu0
      %v5897 = vadd.f32 %v5768, %v5896
      %5898 = vmatmul.bf16.gmra.mxu0 %v4046
      %v5899 = vpop.f32.mrf.mxu0
      %v5900 = vadd.f32 %v5771, %v5899
      %v5901 = vpop.f32.mrf.mxu0
      %v5902 = vadd.f32 %v5773, %v5901
      %5903 = vmatmul.bf16.gmra.mxu0 %v4055
      %v5904 = vpop.f32.mrf.mxu0
      %v5905 = vadd.f32 %v5776, %v5904
      %v5906 = vpop.f32.mrf.mxu0
      %v5907 = vadd.f32 %v5778, %v5906
      %5908 = vmatmul.bf16.gmra.mxu0 %v4064
      %v5909 = vpop.f32.mrf.mxu0
      %v5910 = vadd.f32 %v5781, %v5909
      %v5911 = vpop.f32.mrf.mxu0
      %v5912 = vadd.f32 %v5783, %v5911
      %5913 = vmatmul.bf16.gmra.mxu0 %v4073
      %v5914 = vpop.f32.mrf.mxu0
      %v5915 = vadd.f32 %v5786, %v5914
      %v5916 = vpop.f32.mrf.mxu0
      %v5917 = vadd.f32 %v5788, %v5916
      %5918 = vmatmul.bf16.gmra.mxu0 %v4082
      %v5919 = vpop.f32.mrf.mxu0
      %v5920 = vadd.f32 %v5791, %v5919
      %v5921 = vpop.f32.mrf.mxu0
      %v5922 = vadd.f32 %v5793, %v5921
      %5923 = vmatmul.bf16.gmra.mxu0 %v4091
      %v5924 = vpop.f32.mrf.mxu0
      %v5925 = vadd.f32 %v5796, %v5924
      %v5926 = vpop.f32.mrf.mxu0
      %v5927 = vadd.f32 %v5798, %v5926
      %5928 = vmatmul.bf16.gmra.mxu0 %v4100
      %v5929 = vpop.f32.mrf.mxu0
      %v5930 = vadd.f32 %v5801, %v5929
      %v5931 = vpop.f32.mrf.mxu0
      %v5932 = vadd.f32 %v5803, %v5931
      %5933 = vmatmul.bf16.gmra.mxu0 %v4109
      %v5934 = vpop.f32.mrf.mxu0
      %v5935 = vadd.f32 %v5806, %v5934
      %v5936 = vpop.f32.mrf.mxu0
      %v5937 = vadd.f32 %v5808, %v5936
      %5938 = vmatmul.bf16.gmra.mxu0 %v4118
      %v5939 = vpop.f32.mrf.mxu0
      %v5940 = vadd.f32 %v5811, %v5939
      %v5941 = vpop.f32.mrf.mxu0
      %v5942 = vadd.f32 %v5813, %v5941
      %5943 = vmatmul.bf16.gmra.mxu0 %v4127
      %v5944 = vpop.f32.mrf.mxu0
      %v5945 = vadd.f32 %v5816, %v5944
      %v5946 = vpop.f32.mrf.mxu0
      %v5947 = vadd.f32 %v5818, %v5946
      %5948 = vmatmul.bf16.gmra.mxu0 %v4136
      %v5949 = vpop.f32.mrf.mxu0
      %v5950 = vadd.f32 %v5821, %v5949
      %v5951 = vpop.f32.mrf.mxu0
      %v5952 = vadd.f32 %v5823, %v5951
      %5953 = vmatmul.bf16.gmra.mxu0 %v4145
      %v5954 = vpop.f32.mrf.mxu0
      %v5955 = vadd.f32 %v5826, %v5954
      %v5956 = vpop.f32.mrf.mxu0
      %v5957 = vadd.f32 %v5828, %v5956
      %5958 = vmatmul.bf16.gmra.mxu0 %v4154
      %v5959 = vpop.f32.mrf.mxu0
      %v5960 = vadd.f32 %v5831, %v5959
      %v5961 = vpop.f32.mrf.mxu0
      %v5962 = vadd.f32 %v5833, %v5961
      %5963 = vdwg.mxu0
      %v5964 = vld [vmem:[%s6] sm:$0x1]
      %v5966 = vperm.slane %v5964, 0
      %v5968 = vmul.f32 %v5845, %v5966
      %v5969 = vmul.f32 %v5847, %v5966
      %v5970 = vmul.f32 %v5850, %v5966
      %v5971 = vmul.f32 %v5852, %v5966
      %v5972 = vmul.f32 %v5855, %v5966
      %v5973 = vmul.f32 %v5857, %v5966
      %v5974 = vmul.f32 %v5860, %v5966
      %v5975 = vmul.f32 %v5862, %v5966
      %v5976 = vmul.f32 %v5865, %v5966
      %v5977 = vmul.f32 %v5867, %v5966
      %v5978 = vmul.f32 %v5870, %v5966
      %v5979 = vmul.f32 %v5872, %v5966
      %v5980 = vmul.f32 %v5875, %v5966
      %v5981 = vmul.f32 %v5877, %v5966
      %v5982 = vmul.f32 %v5880, %v5966
      %v5983 = vmul.f32 %v5882, %v5966
      %v5984 = vmul.f32 %v5885, %v5966
      %v5985 = vmul.f32 %v5887, %v5966
      %v5986 = vmul.f32 %v5890, %v5966
      %v5987 = vmul.f32 %v5892, %v5966
      %v5988 = vmul.f32 %v5895, %v5966
      %v5989 = vmul.f32 %v5897, %v5966
      %v5990 = vmul.f32 %v5900, %v5966
      %v5991 = vmul.f32 %v5902, %v5966
      %v5992 = vmul.f32 %v5905, %v5966
      %v5993 = vmul.f32 %v5907, %v5966
      %v5994 = vmul.f32 %v5910, %v5966
      %v5995 = vmul.f32 %v5912, %v5966
      %v5996 = vmul.f32 %v5915, %v5966
      %v5997 = vmul.f32 %v5917, %v5966
      %v5998 = vmul.f32 %v5920, %v5966
      %v5999 = vmul.f32 %v5922, %v5966
      %v6000 = vmul.f32 %v5925, %v5966
      %v6001 = vmul.f32 %v5927, %v5966
      %v6002 = vmul.f32 %v5930, %v5966
      %v6003 = vmul.f32 %v5932, %v5966
      %v6004 = vmul.f32 %v5935, %v5966
      %v6005 = vmul.f32 %v5937, %v5966
      %v6006 = vmul.f32 %v5940, %v5966
      %v6007 = vmul.f32 %v5942, %v5966
      %v6008 = vmul.f32 %v5945, %v5966
      %v6009 = vmul.f32 %v5947, %v5966
      %v6010 = vmul.f32 %v5950, %v5966
      %v6011 = vmul.f32 %v5952, %v5966
      %v6012 = vmul.f32 %v5955, %v5966
      %v6013 = vmul.f32 %v5957, %v5966
      %v6014 = vmul.f32 %v5960, %v5966
      %v6015 = vmul.f32 %v5962, %v5966
      %v6016 = vld [vmem:[%s7] sm:$0x1]
      %v6018 = vperm.slane %v6016, 0
      %v6020 = vadd.f32 %v5968, %v6018
      %v6021 = vadd.f32 %v5969, %v6018
      %v6022 = vadd.f32 %v5970, %v6018
      %v6023 = vadd.f32 %v5971, %v6018
      %v6024 = vadd.f32 %v5972, %v6018
      %v6025 = vadd.f32 %v5973, %v6018
      %v6026 = vadd.f32 %v5974, %v6018
      %v6027 = vadd.f32 %v5975, %v6018
      %v6028 = vadd.f32 %v5976, %v6018
      %v6029 = vadd.f32 %v5977, %v6018
      %v6030 = vadd.f32 %v5978, %v6018
      %v6031 = vadd.f32 %v5979, %v6018
      %v6032 = vadd.f32 %v5980, %v6018
      %v6033 = vadd.f32 %v5981, %v6018
      %v6034 = vadd.f32 %v5982, %v6018
      %v6035 = vadd.f32 %v5983, %v6018
      %v6036 = vadd.f32 %v5984, %v6018
      %v6037 = vadd.f32 %v5985, %v6018
      %v6038 = vadd.f32 %v5986, %v6018
      %v6039 = vadd.f32 %v5987, %v6018
      %v6040 = vadd.f32 %v5988, %v6018
      %v6041 = vadd.f32 %v5989, %v6018
      %v6042 = vadd.f32 %v5990, %v6018
      %v6043 = vadd.f32 %v5991, %v6018
      %v6044 = vadd.f32 %v5992, %v6018
      %v6045 = vadd.f32 %v5993, %v6018
      %v6046 = vadd.f32 %v5994, %v6018
      %v6047 = vadd.f32 %v5995, %v6018
      %v6048 = vadd.f32 %v5996, %v6018
      %v6049 = vadd.f32 %v5997, %v6018
      %v6050 = vadd.f32 %v5998, %v6018
      %v6051 = vadd.f32 %v5999, %v6018
      %v6052 = vadd.f32 %v6000, %v6018
      %v6053 = vadd.f32 %v6001, %v6018
      %v6054 = vadd.f32 %v6002, %v6018
      %v6055 = vadd.f32 %v6003, %v6018
      %v6056 = vadd.f32 %v6004, %v6018
      %v6057 = vadd.f32 %v6005, %v6018
      %v6058 = vadd.f32 %v6006, %v6018
      %v6059 = vadd.f32 %v6007, %v6018
      %v6060 = vadd.f32 %v6008, %v6018
      %v6061 = vadd.f32 %v6009, %v6018
      %v6062 = vadd.f32 %v6010, %v6018
      %v6063 = vadd.f32 %v6011, %v6018
      %v6064 = vadd.f32 %v6012, %v6018
      %v6065 = vadd.f32 %v6013, %v6018
      %v6066 = vadd.f32 %v6014, %v6018
      %v6067 = vadd.f32 %v6015, %v6018
      %vm6068 = vcmp.gt.f32.partialorder %v6020, 0.0
      %vm6069 = vcmp.gt.f32.partialorder %v6021, 0.0
      %vm6070 = vcmp.gt.f32.partialorder %v6022, 0.0
      %vm6071 = vcmp.gt.f32.partialorder %v6023, 0.0
      %vm6072 = vcmp.gt.f32.partialorder %v6024, 0.0
      %vm6073 = vcmp.gt.f32.partialorder %v6025, 0.0
      %vm6074 = vcmp.gt.f32.partialorder %v6026, 0.0
      %vm6075 = vcmp.gt.f32.partialorder %v6027, 0.0
      %vm6076 = vcmp.gt.f32.partialorder %v6028, 0.0
      %vm6077 = vcmp.gt.f32.partialorder %v6029, 0.0
      %vm6078 = vcmp.gt.f32.partialorder %v6030, 0.0
      %vm6079 = vcmp.gt.f32.partialorder %v6031, 0.0
      %vm6080 = vcmp.gt.f32.partialorder %v6032, 0.0
      %vm6081 = vcmp.gt.f32.partialorder %v6033, 0.0
      %vm6082 = vcmp.gt.f32.partialorder %v6034, 0.0
      %vm6083 = vcmp.gt.f32.partialorder %v6035, 0.0
      %vm6084 = vcmp.gt.f32.partialorder %v6036, 0.0
      %vm6085 = vcmp.gt.f32.partialorder %v6037, 0.0
      %vm6086 = vcmp.gt.f32.partialorder %v6038, 0.0
      %vm6087 = vcmp.gt.f32.partialorder %v6039, 0.0
      %vm6088 = vcmp.gt.f32.partialorder %v6040, 0.0
      %vm6089 = vcmp.gt.f32.partialorder %v6041, 0.0
      %vm6090 = vcmp.gt.f32.partialorder %v6042, 0.0
      %vm6091 = vcmp.gt.f32.partialorder %v6043, 0.0
      %vm6092 = vcmp.gt.f32.partialorder %v6044, 0.0
      %vm6093 = vcmp.gt.f32.partialorder %v6045, 0.0
      %vm6094 = vcmp.gt.f32.partialorder %v6046, 0.0
      %vm6095 = vcmp.gt.f32.partialorder %v6047, 0.0
      %vm6096 = vcmp.gt.f32.partialorder %v6048, 0.0
      %vm6097 = vcmp.gt.f32.partialorder %v6049, 0.0
      %vm6098 = vcmp.gt.f32.partialorder %v6050, 0.0
      %vm6099 = vcmp.gt.f32.partialorder %v6051, 0.0
      %vm6100 = vcmp.gt.f32.partialorder %v6052, 0.0
      %vm6101 = vcmp.gt.f32.partialorder %v6053, 0.0
      %vm6102 = vcmp.gt.f32.partialorder %v6054, 0.0
      %vm6103 = vcmp.gt.f32.partialorder %v6055, 0.0
      %vm6104 = vcmp.gt.f32.partialorder %v6056, 0.0
      %vm6105 = vcmp.gt.f32.partialorder %v6057, 0.0
      %vm6106 = vcmp.gt.f32.partialorder %v6058, 0.0
      %vm6107 = vcmp.gt.f32.partialorder %v6059, 0.0
      %vm6108 = vcmp.gt.f32.partialorder %v6060, 0.0
      %vm6109 = vcmp.gt.f32.partialorder %v6061, 0.0
      %vm6110 = vcmp.gt.f32.partialorder %v6062, 0.0
      %vm6111 = vcmp.gt.f32.partialorder %v6063, 0.0
      %vm6112 = vcmp.gt.f32.partialorder %v6064, 0.0
      %vm6113 = vcmp.gt.f32.partialorder %v6065, 0.0
      %vm6114 = vcmp.gt.f32.partialorder %v6066, 0.0
      %vm6115 = vcmp.gt.f32.partialorder %v6067, 0.0
      %v6116 = vmul.f32 %v6020, 1.442695
      %v6117 = vpow.pop %v6116
      %v6118 = vmul.f32 %v6021, 1.442695
      %v6119 = vpow.pop %v6118
      %v6120 = vmul.f32 %v6022, 1.442695
      %v6121 = vpow.pop %v6120
      %v6122 = vmul.f32 %v6023, 1.442695
      %v6123 = vpow.pop %v6122
      %v6124 = vmul.f32 %v6024, 1.442695
      %v6125 = vpow.pop %v6124
      %v6126 = vmul.f32 %v6025, 1.442695
      %v6127 = vpow.pop %v6126
      %v6128 = vmul.f32 %v6026, 1.442695
      %v6129 = vpow.pop %v6128
      %v6130 = vmul.f32 %v6027, 1.442695
      %v6131 = vpow.pop %v6130
      %v6132 = vmul.f32 %v6028, 1.442695
      %v6133 = vpow.pop %v6132
      %v6134 = vmul.f32 %v6029, 1.442695
      %v6135 = vpow.pop %v6134
      %v6136 = vmul.f32 %v6030, 1.442695
      %v6137 = vpow.pop %v6136
      %v6138 = vmul.f32 %v6031, 1.442695
      %v6139 = vpow.pop %v6138
      %v6140 = vmul.f32 %v6032, 1.442695
      %v6141 = vpow.pop %v6140
      %v6142 = vmul.f32 %v6033, 1.442695
      %v6143 = vpow.pop %v6142
      %v6144 = vmul.f32 %v6034, 1.442695
      %v6145 = vpow.pop %v6144
      %v6146 = vmul.f32 %v6035, 1.442695
      %v6147 = vpow.pop %v6146
      %v6148 = vmul.f32 %v6036, 1.442695
      %v6149 = vpow.pop %v6148
      %v6150 = vmul.f32 %v6037, 1.442695
      %v6151 = vpow.pop %v6150
      %v6152 = vmul.f32 %v6038, 1.442695
      %v6153 = vpow.pop %v6152
      %v6154 = vmul.f32 %v6039, 1.442695
      %v6155 = vpow.pop %v6154
      %v6156 = vmul.f32 %v6040, 1.442695
      %v6157 = vpow.pop %v6156
      %v6158 = vmul.f32 %v6041, 1.442695
      %v6159 = vpow.pop %v6158
      %v6160 = vmul.f32 %v6042, 1.442695
      %v6161 = vpow.pop %v6160
      %v6162 = vmul.f32 %v6043, 1.442695
      %v6163 = vpow.pop %v6162
      %v6164 = vmul.f32 %v6044, 1.442695
      %v6165 = vpow.pop %v6164
      %v6166 = vmul.f32 %v6045, 1.442695
      %v6167 = vpow.pop %v6166
      %v6168 = vmul.f32 %v6046, 1.442695
      %v6169 = vpow.pop %v6168
      %v6170 = vmul.f32 %v6047, 1.442695
      %v6171 = vpow.pop %v6170
      %v6172 = vmul.f32 %v6048, 1.442695
      %v6173 = vpow.pop %v6172
      %v6174 = vmul.f32 %v6049, 1.442695
      %v6175 = vpow.pop %v6174
      %v6176 = vmul.f32 %v6050, 1.442695
      %v6177 = vpow.pop %v6176
      %v6178 = vmul.f32 %v6051, 1.442695
      %v6179 = vpow.pop %v6178
      %v6180 = vmul.f32 %v6052, 1.442695
      %v6181 = vpow.pop %v6180
      %v6182 = vmul.f32 %v6053, 1.442695
      %v6183 = vpow.pop %v6182
      %v6184 = vmul.f32 %v6054, 1.442695
      %v6185 = vpow.pop %v6184
      %v6186 = vmul.f32 %v6055, 1.442695
      %v6187 = vpow.pop %v6186
      %v6188 = vmul.f32 %v6056, 1.442695
      %v6189 = vpow.pop %v6188
      %v6190 = vmul.f32 %v6057, 1.442695
      %v6191 = vpow.pop %v6190
      %v6192 = vmul.f32 %v6058, 1.442695
      %v6193 = vpow.pop %v6192
      %v6194 = vmul.f32 %v6059, 1.442695
      %v6195 = vpow.pop %v6194
      %v6196 = vmul.f32 %v6060, 1.442695
      %v6197 = vpow.pop %v6196
      %v6198 = vmul.f32 %v6061, 1.442695
      %v6199 = vpow.pop %v6198
      %v6200 = vmul.f32 %v6062, 1.442695
      %v6201 = vpow.pop %v6200
      %v6202 = vmul.f32 %v6063, 1.442695
      %v6203 = vpow.pop %v6202
      %v6204 = vmul.f32 %v6064, 1.442695
      %v6205 = vpow.pop %v6204
      %v6206 = vmul.f32 %v6065, 1.442695
      %v6207 = vpow.pop %v6206
      %v6208 = vmul.f32 %v6066, 1.442695
      %v6209 = vpow.pop %v6208
      %v6210 = vmul.f32 %v6067, 1.442695
      %v6211 = vpow.pop %v6210
      %v6212 = vsub.f32 %v6117, 1.0
      %v6213 = vsub.f32 %v6119, 1.0
      %v6214 = vsub.f32 %v6121, 1.0
      %v6215 = vsub.f32 %v6123, 1.0
      %v6216 = vsub.f32 %v6125, 1.0
      %v6217 = vsub.f32 %v6127, 1.0
      %v6218 = vsub.f32 %v6129, 1.0
      %v6219 = vsub.f32 %v6131, 1.0
      %v6220 = vsub.f32 %v6133, 1.0
      %v6221 = vsub.f32 %v6135, 1.0
      %v6222 = vsub.f32 %v6137, 1.0
      %v6223 = vsub.f32 %v6139, 1.0
      %v6224 = vsub.f32 %v6141, 1.0
      %v6225 = vsub.f32 %v6143, 1.0
      %v6226 = vsub.f32 %v6145, 1.0
      %v6227 = vsub.f32 %v6147, 1.0
      %v6228 = vsub.f32 %v6149, 1.0
      %v6229 = vsub.f32 %v6151, 1.0
      %v6230 = vsub.f32 %v6153, 1.0
      %v6231 = vsub.f32 %v6155, 1.0
      %v6232 = vsub.f32 %v6157, 1.0
      %v6233 = vsub.f32 %v6159, 1.0
      %v6234 = vsub.f32 %v6161, 1.0
      %v6235 = vsub.f32 %v6163, 1.0
      %v6236 = vsub.f32 %v6165, 1.0
      %v6237 = vsub.f32 %v6167, 1.0
      %v6238 = vsub.f32 %v6169, 1.0
      %v6239 = vsub.f32 %v6171, 1.0
      %v6240 = vsub.f32 %v6173, 1.0
      %v6241 = vsub.f32 %v6175, 1.0
      %v6242 = vsub.f32 %v6177, 1.0
      %v6243 = vsub.f32 %v6179, 1.0
      %v6244 = vsub.f32 %v6181, 1.0
      %v6245 = vsub.f32 %v6183, 1.0
      %v6246 = vsub.f32 %v6185, 1.0
      %v6247 = vsub.f32 %v6187, 1.0
      %v6248 = vsub.f32 %v6189, 1.0
      %v6249 = vsub.f32 %v6191, 1.0
      %v6250 = vsub.f32 %v6193, 1.0
      %v6251 = vsub.f32 %v6195, 1.0
      %v6252 = vsub.f32 %v6197, 1.0
      %v6253 = vsub.f32 %v6199, 1.0
      %v6254 = vsub.f32 %v6201, 1.0
      %v6255 = vsub.f32 %v6203, 1.0
      %v6256 = vsub.f32 %v6205, 1.0
      %v6257 = vsub.f32 %v6207, 1.0
      %v6258 = vsub.f32 %v6209, 1.0
      %v6259 = vsub.f32 %v6211, 1.0
      %v6260 = vsel %vm6068, %v6020, %v6212
      %v6261 = vsel %vm6069, %v6021, %v6213
      %v6262 = vsel %vm6070, %v6022, %v6214
      %v6263 = vsel %vm6071, %v6023, %v6215
      %v6264 = vsel %vm6072, %v6024, %v6216
      %v6265 = vsel %vm6073, %v6025, %v6217
      %v6266 = vsel %vm6074, %v6026, %v6218
      %v6267 = vsel %vm6075, %v6027, %v6219
      %v6268 = vsel %vm6076, %v6028, %v6220
      %v6269 = vsel %vm6077, %v6029, %v6221
      %v6270 = vsel %vm6078, %v6030, %v6222
      %v6271 = vsel %vm6079, %v6031, %v6223
      %v6272 = vsel %vm6080, %v6032, %v6224
      %v6273 = vsel %vm6081, %v6033, %v6225
      %v6274 = vsel %vm6082, %v6034, %v6226
      %v6275 = vsel %vm6083, %v6035, %v6227
      %v6276 = vsel %vm6084, %v6036, %v6228
      %v6277 = vsel %vm6085, %v6037, %v6229
      %v6278 = vsel %vm6086, %v6038, %v6230
      %v6279 = vsel %vm6087, %v6039, %v6231
      %v6280 = vsel %vm6088, %v6040, %v6232
      %v6281 = vsel %vm6089, %v6041, %v6233
      %v6282 = vsel %vm6090, %v6042, %v6234
      %v6283 = vsel %vm6091, %v6043, %v6235
      %v6284 = vsel %vm6092, %v6044, %v6236
      %v6285 = vsel %vm6093, %v6045, %v6237
      %v6286 = vsel %vm6094, %v6046, %v6238
      %v6287 = vsel %vm6095, %v6047, %v6239
      %v6288 = vsel %vm6096, %v6048, %v6240
      %v6289 = vsel %vm6097, %v6049, %v6241
      %v6290 = vsel %vm6098, %v6050, %v6242
      %v6291 = vsel %vm6099, %v6051, %v6243
      %v6292 = vsel %vm6100, %v6052, %v6244
      %v6293 = vsel %vm6101, %v6053, %v6245
      %v6294 = vsel %vm6102, %v6054, %v6246
      %v6295 = vsel %vm6103, %v6055, %v6247
      %v6296 = vsel %vm6104, %v6056, %v6248
      %v6297 = vsel %vm6105, %v6057, %v6249
      %v6298 = vsel %vm6106, %v6058, %v6250
      %v6299 = vsel %vm6107, %v6059, %v6251
      %v6300 = vsel %vm6108, %v6060, %v6252
      %v6301 = vsel %vm6109, %v6061, %v6253
      %v6302 = vsel %vm6110, %v6062, %v6254
      %v6303 = vsel %vm6111, %v6063, %v6255
      %v6304 = vsel %vm6112, %v6064, %v6256
      %v6305 = vsel %vm6113, %v6065, %v6257
      %v6306 = vsel %vm6114, %v6066, %v6258
      %v6307 = vsel %vm6115, %v6067, %v6259
      %6308 = vst [vmem:[%s305] sm:$0xff] %v6260
      %6309 = vst [vmem:[%s305 + $0x8] sm:$0xff] %v6261
      %6310 = vst [vmem:[%s305 + $0x10] sm:$0xff] %v6262
      %6311 = vst [vmem:[%s305 + $0x18] sm:$0xff] %v6263
      %6312 = vst [vmem:[%s305 + $0x20] sm:$0xff] %v6264
      %6313 = vst [vmem:[%s305 + $0x28] sm:$0xff] %v6265
      %6314 = vst [vmem:[%s305 + $0x30] sm:$0xff] %v6266
      %6315 = vst [vmem:[%s305 + $0x38] sm:$0xff] %v6267
      %6316 = vst [vmem:[%s305 + $0x40] sm:$0xff] %v6268
      %6317 = vst [vmem:[%s305 + $0x48] sm:$0xff] %v6269
      %6318 = vst [vmem:[%s305 + $0x50] sm:$0xff] %v6270
      %6319 = vst [vmem:[%s305 + $0x58] sm:$0xff] %v6271
      %6320 = vst [vmem:[%s305 + $0x60] sm:$0xff] %v6272
      %6321 = vst [vmem:[%s305 + $0x68] sm:$0xff] %v6273
      %6322 = vst [vmem:[%s305 + $0x70] sm:$0xff] %v6274
      %6323 = vst [vmem:[%s305 + $0x78] sm:$0xff] %v6275
      %6324 = vst [vmem:[%s305 + $0x80] sm:$0xff] %v6276
      %6325 = vst [vmem:[%s305 + $0x88] sm:$0xff] %v6277
      %6326 = vst [vmem:[%s305 + $0x90] sm:$0xff] %v6278
      %6327 = vst [vmem:[%s305 + $0x98] sm:$0xff] %v6279
      %6328 = vst [vmem:[%s305 + $0xa0] sm:$0xff] %v6280
      %6329 = vst [vmem:[%s305 + $0xa8] sm:$0xff] %v6281
      %6330 = vst [vmem:[%s305 + $0xb0] sm:$0xff] %v6282
      %6331 = vst [vmem:[%s305 + $0xb8] sm:$0xff] %v6283
      %6332 = vst [vmem:[%s305 + $0xc0] sm:$0xff] %v6284
      %6333 = vst [vmem:[%s305 + $0xc8] sm:$0xff] %v6285
      %6334 = vst [vmem:[%s305 + $0xd0] sm:$0xff] %v6286
      %6335 = vst [vmem:[%s305 + $0xd8] sm:$0xff] %v6287
      %6336 = vst [vmem:[%s305 + $0xe0] sm:$0xff] %v6288
      %6337 = vst [vmem:[%s305 + $0xe8] sm:$0xff] %v6289
      %6338 = vst [vmem:[%s305 + $0xf0] sm:$0xff] %v6290
      %6339 = vst [vmem:[%s305 + $0xf8] sm:$0xff] %v6291
      %6340 = vst [vmem:[%s305 + $0x100] sm:$0xff] %v6292
      %6341 = vst [vmem:[%s305 + $0x108] sm:$0xff] %v6293
      %6342 = vst [vmem:[%s305 + $0x110] sm:$0xff] %v6294
      %6343 = vst [vmem:[%s305 + $0x118] sm:$0xff] %v6295
      %6344 = vst [vmem:[%s305 + $0x120] sm:$0xff] %v6296
      %6345 = vst [vmem:[%s305 + $0x128] sm:$0xff] %v6297
      %6346 = vst [vmem:[%s305 + $0x130] sm:$0xff] %v6298
      %6347 = vst [vmem:[%s305 + $0x138] sm:$0xff] %v6299
      %6348 = vst [vmem:[%s305 + $0x140] sm:$0xff] %v6300
      %6349 = vst [vmem:[%s305 + $0x148] sm:$0xff] %v6301
      %6350 = vst [vmem:[%s305 + $0x150] sm:$0xff] %v6302
      %6351 = vst [vmem:[%s305 + $0x158] sm:$0xff] %v6303
      %6352 = vst [vmem:[%s305 + $0x160] sm:$0xff] %v6304
      %6353 = vst [vmem:[%s305 + $0x168] sm:$0xff] %v6305
      %6354 = vst [vmem:[%s305 + $0x170] sm:$0xff] %v6306
      %6355 = vst [vmem:[%s305 + $0x178] sm:$0xff] %v6307
      %p6356 = scmp.lt.s32.totalorder %s19, 1
      %s6357 = scalar_select %p6356, %s19, 1
      %s6358 = smul.addr %s6357, 48
      %s6359 = smul.addr %s6358, 8
      %s6360 = scalar_lea.vmem %s8, %s6359
      // Predicated region
      $region53: #{double_conv_pallas.1} parent=51 // pred_check
        %p6361 = pneg %p210
      $region54: #{double_conv_pallas.1} parent=51 // pred_check_branch
        %6363 = sbr.rel (%p6361) target = $region56
      $region55: #{double_conv_pallas.1} parent=51 // pred_region
        _
      $region56: #{double_conv_pallas.1} parent=51 // pred_fallthru
        _
    $region52: #{double_conv_pallas.1} parent=5 // pred_fallthru
      _
    %p6364 = scmp.le.s32.totalorder 2, %s14
    // Predicated region
    $region57: #{double_conv_pallas.1} parent=5 // pred_check
      %p6365 = pneg %p6364
    $region58: #{double_conv_pallas.1} parent=5 // pred_check_branch
      %6367 = sbr.rel (%p6365) target = $region60
    $region59: #{double_conv_pallas.1} parent=5 // pred_region
      %s6368 = ssub.s32 %s14, 2
      // Predicated region
      $region61: #{double_conv_pallas.1} parent=59 // pred_check
        %p6369 = pneg %p216
      $region62: #{double_conv_pallas.1} parent=59 // pred_check_branch
        %6371 = sbr.rel (%p6369) target = $region64
      $region63: #{double_conv_pallas.1} parent=59 // pred_region
        %p6372 = scmp.lt.s32.totalorder %s20, 1
        %s6373 = scalar_select %p6372, %s20, 1
        %s6374 = smul.addr %s6373, 48
        %s6375 = smul.addr %s6374, 8
        %s6376 = scalar_lea.vmem %s8, %s6375
      $region64: #{double_conv_pallas.1} parent=59 // pred_fallthru
        _
    $region60: #{double_conv_pallas.1} parent=5 // pred_fallthru
      _
  $region6: #{double_conv_pallas.1} parent=0 // loop_footer
    %s18 = sadd.s32 1, %s14
  $region7: #{double_conv_pallas.1} parent=0 // loop_footer_branch
    %13 = sbr.rel target = $region3
  $region8: #{double_conv_pallas.1} parent=0 // loop_exit
    _

</llo_original>
